<compile_context>
chip_gen: v7x
topology: tpu7x:2x2x1
jax: 0.10.0
libtpu: 0.0.40
codegen_flags: <defaults>
</compile_context>

<pallas_src>
import functools

import jax
import jax.numpy as jnp
from jax.experimental import pallas as pl
from jax.experimental.pallas import tpu as pltpu


def _layer_norm(x, gamma, beta, eps=1e-5):
    mean = jnp.mean(x, axis=-1, keepdims=True)
    var = jnp.mean(jnp.square(x - mean), axis=-1, keepdims=True)
    return (x - mean) * jax.lax.rsqrt(var + eps) * gamma + beta


def _encoder_kernel(x_ref, pad_ref,
                    w_proj_ref, b_proj_ref,
                    w_qkv_h_ref, b_qkv_h_ref,
                    w_o_ref, b_o_ref,
                    ln1_g_ref, ln1_b_ref,
                    w_ff1_ref, b_ff1_ref,
                    w_ff2_ref, b_ff2_ref,
                    ln2_g_ref, ln2_b_ref,
                    out_ref, *, nhead, d_model, tb, seq_len):
    """One grid step == TB batch rows, full sequence.

    x_ref       : (TB, L, Din)  input block
    pad_ref     : (TB, 1, L)    additive key-padding bias (0 allowed / -1e9 padded)
    w_*_ref     : weights pre-transposed to (in, out) and pre-cast to bf16;
                  w_qkv_h_ref is (3, H, Dm, hd) per-head (scale folded into Q),
                  b_qkv_h_ref is (3, H, 1, hd) f32. Biases / LN params stay f32.
    out_ref     : (TB, L, Dm)
    """
    hd = d_model // nhead
    cdt = jnp.bfloat16
    rows = tb * seq_len

    x = x_ref[...].reshape(rows, -1)                                   # (TB*L, Din)

    # ---- Input projector: nn.Linear(input_dim, d_model) ----
    h = (jnp.dot(x.astype(cdt), w_proj_ref[...],
                 preferred_element_type=jnp.float32) + b_proj_ref[...])  # (TB*L, Dm) f32
    h_c = h.astype(cdt)

    # ---- Attention bias built in-kernel: causal (is_causal=True) + key padding ----
    r_ids = jax.lax.broadcasted_iota(jnp.int32, (seq_len, seq_len), 0)
    c_ids = jax.lax.broadcasted_iota(jnp.int32, (seq_len, seq_len), 1)
    causal_bias = jnp.where(c_ids > r_ids, jnp.float32(-1e9), jnp.float32(0.0))
    bias = causal_bias[None, :, :] + pad_ref[...]                      # (TB, L, L)

    # ---- Multi-head self-attention (per-head weights, batched over TB rows) ----
    head_outs = []
    for hh in range(nhead):
        qh = (jnp.dot(h_c, w_qkv_h_ref[0, hh],
                      preferred_element_type=jnp.float32) + b_qkv_h_ref[0, hh])
        kh = (jnp.dot(h_c, w_qkv_h_ref[1, hh],
                      preferred_element_type=jnp.float32) + b_qkv_h_ref[1, hh])
        vh = (jnp.dot(h_c, w_qkv_h_ref[2, hh],
                      preferred_element_type=jnp.float32) + b_qkv_h_ref[2, hh])
        qh = qh.reshape(tb, seq_len, hd)
        kh = kh.reshape(tb, seq_len, hd)
        vh = vh.reshape(tb, seq_len, hd)

        s = jax.lax.dot_general(qh.astype(cdt), kh.astype(cdt),
                                (((2,), (2,)), ((0,), (0,))),
                                preferred_element_type=jnp.float32)    # (TB, L, L)
        s = s + bias
        s = s - jnp.max(s, axis=-1, keepdims=True)
        p = jnp.exp(s)
        p = p * pl.reciprocal(jnp.sum(p, axis=-1, keepdims=True), approx=True)
        oh = jax.lax.dot_general(p.astype(cdt), vh.astype(cdt),
                                 (((2,), (1,)), ((0,), (0,))),
                                 preferred_element_type=jnp.float32)   # (TB, L, hd)
        head_outs.append(oh)

    o = jnp.concatenate(head_outs, axis=-1).reshape(rows, d_model)     # (TB*L, Dm)
    attn = (jnp.dot(o.astype(cdt), w_o_ref[...],
                    preferred_element_type=jnp.float32) + b_o_ref[...])

    # ---- Residual + LayerNorm 1 (post-norm; dropout = identity in eval) ----
    h1 = _layer_norm(h + attn, ln1_g_ref[...], ln1_b_ref[...])

    # ---- Feed-forward: Linear -> ReLU -> Linear ----
    ff = (jnp.dot(h1.astype(cdt), w_ff1_ref[...],
                  preferred_element_type=jnp.float32) + b_ff1_ref[...])
    ff = jnp.maximum(ff, 0.0)
    ff = (jnp.dot(ff.astype(cdt), w_ff2_ref[...],
                  preferred_element_type=jnp.float32) + b_ff2_ref[...])

    # ---- Residual + LayerNorm 2 ----
    h2 = _layer_norm(h1 + ff, ln2_g_ref[...], ln2_b_ref[...])
    out_ref[...] = h2.reshape(tb, seq_len, d_model).astype(out_ref.dtype)


def transformer_encoder_forward(x, causal_mask, padding_mask, params, *,
                                nhead, block_batch=None):
    """x: (N, L, input_dim) f32.  causal_mask: (L, L) bool (True = disallowed;
    must be the standard causal mask — the module calls MHA with is_causal=True,
    so the kernel regenerates it internally).  padding_mask: (N, L) bool
    (True = padded key).  Returns (N, L, d_model) f32."""
    del causal_mask  # regenerated in-kernel (is_causal=True contract)
    N, L, Din = x.shape
    Dm = params["w_proj"].shape[0]
    Dff = params["w_ff1"].shape[0]
    hd = Dm // nhead
    scale = 1.0 / (hd ** 0.5)

    # Batch rows per grid step: fatten the MXU M dim but keep grid extent >= 2
    # so v7x's two TensorCores both get work.
    if block_batch is None:
        cands = [d for d in range(1, N + 1)
                 if N % d == 0 and d * L <= 256 and (N // d >= 2 or d == 1)]
        block_batch = max(cands) if cands else 1
    TB = block_batch
    assert N % TB == 0, "block_batch must divide the batch size"

    # Tiny (N, 1, L) additive key-padding bias; causal part is built in-kernel.
    pad_bias = jnp.where(padding_mask, jnp.float32(-1e9),
                         jnp.float32(0.0)).reshape(N, 1, L)

    bf = jnp.bfloat16
    row = lambda v: v.reshape(1, -1).astype(jnp.float32)

    # Pre-transposed (in, out) bf16 weights.
    w_proj_c = params["w_proj"].T.astype(bf)        # (Din, Dm)
    w_o_c = params["w_o"].T.astype(bf)              # (Dm, Dm)
    w_ff1_c = params["w_ff1"].T.astype(bf)          # (Dm, Dff)
    w_ff2_c = params["w_ff2"].T.astype(bf)          # (Dff, Dm)

    # Per-head Q/K/V weights (in, hd), 1/sqrt(hd) folded into Q weight + bias.
    wq, wk, wv = (params["w_qkv"][0:Dm], params["w_qkv"][Dm:2 * Dm],
                  params["w_qkv"][2 * Dm:3 * Dm])
    bq, bk, bv = (params["b_qkv"][0:Dm], params["b_qkv"][Dm:2 * Dm],
                  params["b_qkv"][2 * Dm:3 * Dm])
    split_w = lambda w: w.reshape(nhead, hd, Dm).transpose(0, 2, 1)   # (H, Dm, hd)
    split_b = lambda b: b.reshape(nhead, 1, hd)                        # (H, 1, hd)
    w_qkv_h = jnp.stack([split_w(wq) * scale, split_w(wk), split_w(wv)]).astype(bf)
    b_qkv_h = jnp.stack([split_b(bq * scale), split_b(bk),
                         split_b(bv)]).astype(jnp.float32)

    const_args = (w_proj_c, row(params["b_proj"]),
                  w_qkv_h, b_qkv_h,
                  w_o_c, row(params["b_o"]),
                  row(params["ln1_g"]), row(params["ln1_b"]),
                  w_ff1_c, row(params["b_ff1"]),
                  w_ff2_c, row(params["b_ff2"]),
                  row(params["ln2_g"]), row(params["ln2_b"]))

    # Explicit VMEM budget from the actual footprint (weights + double-buffered tiles
    # + in-kernel intermediates), clamped to the physical ceiling.
    nbytes = lambda a: int(a.size) * a.dtype.itemsize
    weight_bytes = sum(nbytes(a) for a in const_args)
    tile_bytes = 2 * 4 * TB * L * (Din + Dm + 1)            # x + out + pad, double-buffered
    interm_bytes = 4 * TB * L * (4 * Dm + 3 * L + Dff)      # h, qkv, scores, ffn act
    vmem_limit = int(min(128 << 20,
                         max(32 << 20,
                             2 * weight_bytes + 2 * tile_bytes + 2 * interm_bytes)))

    const2 = lambda b: (0, 0)
    const4 = lambda b: (0, 0, 0, 0)

    kernel = functools.partial(_encoder_kernel, nhead=nhead, d_model=Dm,
                               tb=TB, seq_len=L)

    out = pl.pallas_call(
        kernel,
        out_shape=jax.ShapeDtypeStruct((N, L, Dm), jnp.float32),
        grid=(N // TB,),
        in_specs=[
            pl.BlockSpec((TB, L, Din), lambda b: (b, 0, 0)),      # x
            pl.BlockSpec((TB, 1, L), lambda b: (b, 0, 0)),        # key-padding bias
            pl.BlockSpec((Din, Dm), const2),                      # W_proj^T (bf16)
            pl.BlockSpec((1, Dm), const2),                        # b_proj
            pl.BlockSpec((3, nhead, Dm, hd), const4),             # per-head QKV weights
            pl.BlockSpec((3, nhead, 1, hd), const4),              # per-head QKV biases
            pl.BlockSpec((Dm, Dm), const2),                       # W_o^T (bf16)
            pl.BlockSpec((1, Dm), const2),                        # b_o
            pl.BlockSpec((1, Dm), const2),                        # ln1 gamma
            pl.BlockSpec((1, Dm), const2),                        # ln1 beta
            pl.BlockSpec((Dm, Dff), const2),                      # W_ff1^T (bf16)
            pl.BlockSpec((1, Dff), const2),                       # b_ff1
            pl.BlockSpec((Dff, Dm), const2),                      # W_ff2^T (bf16)
            pl.BlockSpec((1, Dm), const2),                        # b_ff2
            pl.BlockSpec((1, Dm), const2),                        # ln2 gamma
            pl.BlockSpec((1, Dm), const2),                        # ln2 beta
        ],
        out_specs=pl.BlockSpec((TB, L, Dm), lambda b: (b, 0, 0)),
        compiler_params=pltpu.CompilerParams(
            dimension_semantics=("parallel",),    # batch blocks independent (v7x megacore)
            vmem_limit_bytes=vmem_limit,
        ),
    )(x, pad_bias, *const_args)
    return out


def transformer_encoder_reference(x, causal_mask, padding_mask, params, *, nhead):
    """Pure-JAX reference of the same forward (PyTorch conventions, eval-mode dropout)."""
    hp = jax.lax.Precision.HIGHEST
    N, L, _ = x.shape
    Dm = params["w_proj"].shape[0]
    hd = Dm // nhead
    scale = 1.0 / (hd ** 0.5)

    h = jnp.einsum("nld,md->nlm", x, params["w_proj"], precision=hp) + params["b_proj"]
    qkv = jnp.einsum("nlm,km->nlk", h, params["w_qkv"], precision=hp) + params["b_qkv"]
    q, k, v = jnp.split(qkv, 3, axis=-1)

    def heads(t):
        return t.reshape(N, L, nhead, hd).transpose(0, 2, 1, 3)     # (N, H, L, hd)

    qh, kh, vh = heads(q), heads(k), heads(v)
    masked = causal_mask[None, None, :, :] | padding_mask[:, None, None, :]
    bias = jnp.where(masked, jnp.float32(-1e9), jnp.float32(0.0))
    s = jnp.einsum("nhqd,nhkd->nhqk", qh, kh, precision=hp) * scale + bias
    p = jax.nn.softmax(s, axis=-1)
    o = jnp.einsum("nhqk,nhkd->nhqd", p, vh, precision=hp)
    o = o.transpose(0, 2, 1, 3).reshape(N, L, Dm)
    attn = jnp.einsum("nlm,km->nlk", o, params["w_o"], precision=hp) + params["b_o"]

    h = _layer_norm(h + attn, params["ln1_g"], params["ln1_b"])
    ff = jnp.einsum("nlm,fm->nlf", h, params["w_ff1"], precision=hp) + params["b_ff1"]
    ff = jnp.maximum(ff, 0.0)
    ff = jnp.einsum("nlf,mf->nlm", ff, params["w_ff2"], precision=hp) + params["b_ff2"]
    return _layer_norm(h + ff, params["ln2_g"], params["ln2_b"])


def init_params(key, input_dim, d_model, dim_feedforward):
    """Deterministic synthetic parameters matching the PyTorch module's shapes."""
    ks = jax.random.split(key, 12)

    def u(k, shape, fan_in):
        s = 1.0 / (fan_in ** 0.5)
        return jax.random.uniform(k, shape, jnp.float32, -s, s)

    return {
        "w_proj": u(ks[0], (d_model, input_dim), input_dim),
        "b_proj": u(ks[1], (d_model,), input_dim),
        "w_qkv":  u(ks[2], (3 * d_model, d_model), d_model),    # in_proj_weight [Wq;Wk;Wv]
        "b_qkv":  u(ks[3], (3 * d_model,), d_model),
        "w_o":    u(ks[4], (d_model, d_model), d_model),        # out_proj
        "b_o":    u(ks[5], (d_model,), d_model),
        "ln1_g":  1.0 + 0.1 * jax.random.normal(ks[6], (d_model,), jnp.float32),
        "ln1_b":  0.1 * jax.random.normal(ks[7], (d_model,), jnp.float32),
        "w_ff1":  u(ks[8], (dim_feedforward, d_model), d_model),
        "b_ff1":  u(ks[9], (dim_feedforward,), d_model),
        "w_ff2":  u(ks[10], (d_model, dim_feedforward), dim_feedforward),
        "b_ff2":  u(ks[11], (d_model,), dim_feedforward),
        "ln2_g":  jnp.ones((d_model,), jnp.float32),
        "ln2_b":  jnp.zeros((d_model,), jnp.float32),
    }


if __name__ == "__main__":
    N, L = 4, 8                        # batch, sequence length (small demo shapes)
    input_dim, d_model, nhead, dim_ff = 16, 32, 4, 64
    TB = 2                              # batch rows per grid step -> grid extent 2

    key = jax.random.PRNGKey(0)
    kx, kp = jax.random.split(key)
    x = jax.random.normal(kx, (N, L, input_dim), jnp.float32)
    params = init_params(kp, input_dim, d_model, dim_ff)

    # Causal mask (True = not allowed) and key-padding mask (True = padded).
    causal_mask = jnp.triu(jnp.ones((L, L), jnp.bool_), k=1)
    padding_mask = (jnp.zeros((N, L), jnp.bool_)
                    .at[1, -2:].set(True)
                    .at[3, -3:].set(True))

    out = transformer_encoder_forward(x, causal_mask, padding_mask, params,
                                      nhead=nhead, block_batch=TB)
    out = jax.block_until_ready(out)

    ref = transformer_encoder_reference(x, causal_mask, padding_mask, params, nhead=nhead)
    assert out.shape == (N, L, d_model)
    err = float(jnp.max(jnp.abs(out - ref)))
    # Kernel uses bf16 matmul operands (f32 accumulation) vs f32-HIGHEST reference,
    # so tolerance is loosened deliberately.
    assert jnp.allclose(out, ref, atol=5e-2, rtol=5e-2), f"mismatch vs reference: {err}"

    print("KERNEL_OK")
</pallas_src>

<mosaic_0001>
module attributes {stable_mosaic.version = 11 : i64} {
  func.func @_encoder_kernel(%arg0: i32, %arg1: memref<2x8x16xf32, #tpu.memory_space<vmem>>, %arg2: memref<2x1x8xf32, #tpu.memory_space<vmem>>, %arg3: memref<16x32xbf16, #tpu.memory_space<vmem>>, %arg4: memref<1x32xf32, #tpu.memory_space<vmem>>, %arg5: memref<3x4x32x8xbf16, #tpu.memory_space<vmem>>, %arg6: memref<3x4x1x8xf32, #tpu.memory_space<vmem>>, %arg7: memref<32x32xbf16, #tpu.memory_space<vmem>>, %arg8: memref<1x32xf32, #tpu.memory_space<vmem>>, %arg9: memref<1x32xf32, #tpu.memory_space<vmem>>, %arg10: memref<1x32xf32, #tpu.memory_space<vmem>>, %arg11: memref<32x64xbf16, #tpu.memory_space<vmem>>, %arg12: memref<1x64xf32, #tpu.memory_space<vmem>>, %arg13: memref<64x32xbf16, #tpu.memory_space<vmem>>, %arg14: memref<1x32xf32, #tpu.memory_space<vmem>>, %arg15: memref<1x32xf32, #tpu.memory_space<vmem>>, %arg16: memref<1x32xf32, #tpu.memory_space<vmem>>, %arg17: memref<2x8x32xf32, #tpu.memory_space<vmem>>) attributes {dimension_semantics = [#tpu.dimension_semantics<parallel>], iteration_bounds = array<i64: 2>, scalar_prefetch = 0 : i64, scratch_operands = 0 : i64, tpu.core_type = #tpu.core_type<tc>, window_params = [{transform_indices = @transform_0, window_bounds = array<i64: 2, 8, 16>}, {transform_indices = @transform_1, window_bounds = array<i64: 2, 1, 8>}, {pipeline_mode = #tpu.pipeline_mode<synchronous>, transform_indices = @transform_2, window_bounds = array<i64: 16, 32>}, {pipeline_mode = #tpu.pipeline_mode<synchronous>, transform_indices = @transform_3, window_bounds = array<i64: 1, 32>}, {pipeline_mode = #tpu.pipeline_mode<synchronous>, transform_indices = @transform_4, window_bounds = array<i64: 3, 4, 32, 8>}, {pipeline_mode = #tpu.pipeline_mode<synchronous>, transform_indices = @transform_5, window_bounds = array<i64: 3, 4, 1, 8>}, {pipeline_mode = #tpu.pipeline_mode<synchronous>, transform_indices = @transform_6, window_bounds = array<i64: 32, 32>}, {pipeline_mode = #tpu.pipeline_mode<synchronous>, transform_indices = @transform_7, window_bounds = array<i64: 1, 32>}, {pipeline_mode = #tpu.pipeline_mode<synchronous>, transform_indices = @transform_8, window_bounds = array<i64: 1, 32>}, {pipeline_mode = #tpu.pipeline_mode<synchronous>, transform_indices = @transform_9, window_bounds = array<i64: 1, 32>}, {pipeline_mode = #tpu.pipeline_mode<synchronous>, transform_indices = @transform_10, window_bounds = array<i64: 32, 64>}, {pipeline_mode = #tpu.pipeline_mode<synchronous>, transform_indices = @transform_11, window_bounds = array<i64: 1, 64>}, {pipeline_mode = #tpu.pipeline_mode<synchronous>, transform_indices = @transform_12, window_bounds = array<i64: 64, 32>}, {pipeline_mode = #tpu.pipeline_mode<synchronous>, transform_indices = @transform_13, window_bounds = array<i64: 1, 32>}, {pipeline_mode = #tpu.pipeline_mode<synchronous>, transform_indices = @transform_14, window_bounds = array<i64: 1, 32>}, {pipeline_mode = #tpu.pipeline_mode<synchronous>, transform_indices = @transform_15, window_bounds = array<i64: 1, 32>}, {transform_indices = @transform_16, window_bounds = array<i64: 2, 8, 32>}]} {
    %c0 = arith.constant 0 : index
    %c0_0 = arith.constant 0 : index
    %c0_1 = arith.constant 0 : index
    %0 = vector.load %arg1[%c0, %c0_0, %c0_1] : memref<2x8x16xf32, #tpu.memory_space<vmem>>, vector<2x8x16xf32>
    %1 = vector.shape_cast %0 : vector<2x8x16xf32> to vector<16x16xf32>
    %2 = arith.truncf %1 : vector<16x16xf32> to vector<16x16xbf16>
    %c0_2 = arith.constant 0 : index
    %c0_3 = arith.constant 0 : index
    %3 = vector.load %arg3[%c0_2, %c0_3] : memref<16x32xbf16, #tpu.memory_space<vmem>>, vector<16x32xbf16>
    %cst = arith.constant dense<0.000000e+00> : vector<16x32xf32>
    %4 = tpu.matmul %2, %3, %cst {dimension_numbers = #tpu.dot_dimension_numbers<[1], [0], [0], [1], [0, 0, 1, 1], [], []>} : vector<16x16xbf16>, vector<16x32xbf16>, vector<16x32xf32> -> vector<16x32xf32>
    %c0_4 = arith.constant 0 : index
    %c0_5 = arith.constant 0 : index
    %5 = vector.load %arg4[%c0_4, %c0_5] : memref<1x32xf32, #tpu.memory_space<vmem>>, vector<1x32xf32>
    %6 = vector.broadcast %5 : vector<1x32xf32> to vector<16x32xf32>
    %7 = arith.addf %4, %6 : vector<16x32xf32>
    %8 = arith.truncf %7 : vector<16x32xf32> to vector<16x32xbf16>
    %9 = tpu.iota {dimensions = array<i32: 0>} : vector<8x8xi32>
    %10 = tpu.iota {dimensions = array<i32: 1>} : vector<8x8xi32>
    %11 = arith.cmpi sgt, %10, %9 : vector<8x8xi32>
    %cst_6 = arith.constant -1.000000e+09 : f32
    %cst_7 = arith.constant 0.000000e+00 : f32
    %12 = vector.broadcast %cst_6 : f32 to vector<8x8xf32>
    %13 = vector.broadcast %cst_7 : f32 to vector<8x8xf32>
    %14 = arith.select %11, %12, %13 : vector<8x8xi1>, vector<8x8xf32>
    %15 = vector.shape_cast %14 : vector<8x8xf32> to vector<1x8x8xf32>
    %c0_8 = arith.constant 0 : index
    %c0_9 = arith.constant 0 : index
    %c0_10 = arith.constant 0 : index
    %16 = vector.load %arg2[%c0_8, %c0_9, %c0_10] : memref<2x1x8xf32, #tpu.memory_space<vmem>>, vector<2x1x8xf32>
    %17 = vector.broadcast %15 : vector<1x8x8xf32> to vector<2x8x8xf32>
    %18 = vector.broadcast %16 : vector<2x1x8xf32> to vector<2x8x8xf32>
    %19 = arith.addf %17, %18 : vector<2x8x8xf32>
    %c0_11 = arith.constant 0 : index
    %c0_12 = arith.constant 0 : index
    %c0_13 = arith.constant 0 : index
    %c0_14 = arith.constant 0 : index
    %20 = vector.load %arg5[%c0_11, %c0_12, %c0_13, %c0_14] : memref<3x4x32x8xbf16, #tpu.memory_space<vmem>>, vector<1x1x32x8xbf16>
    %21 = vector.shape_cast %20 : vector<1x1x32x8xbf16> to vector<32x8xbf16>
    %cst_15 = arith.constant dense<0.000000e+00> : vector<16x8xf32>
    %22 = tpu.matmul %8, %21, %cst_15 {dimension_numbers = #tpu.dot_dimension_numbers<[1], [0], [0], [1], [0, 0, 1, 1], [], []>} : vector<16x32xbf16>, vector<32x8xbf16>, vector<16x8xf32> -> vector<16x8xf32>
    %c0_16 = arith.constant 0 : index
    %c0_17 = arith.constant 0 : index
    %c0_18 = arith.constant 0 : index
    %c0_19 = arith.constant 0 : index
    %23 = vector.load %arg6[%c0_16, %c0_17, %c0_18, %c0_19] : memref<3x4x1x8xf32, #tpu.memory_space<vmem>>, vector<1x1x1x8xf32>
    %24 = vector.shape_cast %23 : vector<1x1x1x8xf32> to vector<1x8xf32>
    %25 = vector.broadcast %24 : vector<1x8xf32> to vector<16x8xf32>
    %26 = arith.addf %22, %25 : vector<16x8xf32>
    %c1 = arith.constant 1 : index
    %c0_20 = arith.constant 0 : index
    %c0_21 = arith.constant 0 : index
    %c0_22 = arith.constant 0 : index
    %27 = vector.load %arg5[%c1, %c0_20, %c0_21, %c0_22] : memref<3x4x32x8xbf16, #tpu.memory_space<vmem>>, vector<1x1x32x8xbf16>
    %28 = vector.shape_cast %27 : vector<1x1x32x8xbf16> to vector<32x8xbf16>
    %cst_23 = arith.constant dense<0.000000e+00> : vector<16x8xf32>
    %29 = tpu.matmul %8, %28, %cst_23 {dimension_numbers = #tpu.dot_dimension_numbers<[1], [0], [0], [1], [0, 0, 1, 1], [], []>} : vector<16x32xbf16>, vector<32x8xbf16>, vector<16x8xf32> -> vector<16x8xf32>
    %c1_24 = arith.constant 1 : index
    %c0_25 = arith.constant 0 : index
    %c0_26 = arith.constant 0 : index
    %c0_27 = arith.constant 0 : index
    %30 = vector.load %arg6[%c1_24, %c0_25, %c0_26, %c0_27] : memref<3x4x1x8xf32, #tpu.memory_space<vmem>>, vector<1x1x1x8xf32>
    %31 = vector.shape_cast %30 : vector<1x1x1x8xf32> to vector<1x8xf32>
    %32 = vector.broadcast %31 : vector<1x8xf32> to vector<16x8xf32>
    %33 = arith.addf %29, %32 : vector<16x8xf32>
    %c2 = arith.constant 2 : index
    %c0_28 = arith.constant 0 : index
    %c0_29 = arith.constant 0 : index
    %c0_30 = arith.constant 0 : index
    %34 = vector.load %arg5[%c2, %c0_28, %c0_29, %c0_30] : memref<3x4x32x8xbf16, #tpu.memory_space<vmem>>, vector<1x1x32x8xbf16>
    %35 = vector.shape_cast %34 : vector<1x1x32x8xbf16> to vector<32x8xbf16>
    %cst_31 = arith.constant dense<0.000000e+00> : vector<16x8xf32>
    %36 = tpu.matmul %8, %35, %cst_31 {dimension_numbers = #tpu.dot_dimension_numbers<[1], [0], [0], [1], [0, 0, 1, 1], [], []>} : vector<16x32xbf16>, vector<32x8xbf16>, vector<16x8xf32> -> vector<16x8xf32>
    %c2_32 = arith.constant 2 : index
    %c0_33 = arith.constant 0 : index
    %c0_34 = arith.constant 0 : index
    %c0_35 = arith.constant 0 : index
    %37 = vector.load %arg6[%c2_32, %c0_33, %c0_34, %c0_35] : memref<3x4x1x8xf32, #tpu.memory_space<vmem>>, vector<1x1x1x8xf32>
    %38 = vector.shape_cast %37 : vector<1x1x1x8xf32> to vector<1x8xf32>
    %39 = vector.broadcast %38 : vector<1x8xf32> to vector<16x8xf32>
    %40 = arith.addf %36, %39 : vector<16x8xf32>
    %41 = vector.shape_cast %26 : vector<16x8xf32> to vector<2x8x8xf32>
    %42 = vector.shape_cast %33 : vector<16x8xf32> to vector<2x8x8xf32>
    %43 = vector.shape_cast %40 : vector<16x8xf32> to vector<2x8x8xf32>
    %44 = arith.truncf %41 : vector<2x8x8xf32> to vector<2x8x8xbf16>
    %45 = arith.truncf %42 : vector<2x8x8xf32> to vector<2x8x8xbf16>
    %cst_36 = arith.constant dense<0.000000e+00> : vector<2x8x8xf32>
    %46 = tpu.matmul %44, %45, %cst_36 {dimension_numbers = #tpu.dot_dimension_numbers<[2], [2], [1], [1], [0, 0, 0, 1, 1, 1], [0], [0]>} : vector<2x8x8xbf16>, vector<2x8x8xbf16>, vector<2x8x8xf32> -> vector<2x8x8xf32>
    %47 = arith.addf %46, %19 : vector<2x8x8xf32>
    %cst_37 = arith.constant dense<0xFF800000> : vector<2x8xf32>
    %48 = vector.multi_reduction <maximumf>, %47, %cst_37 [2] : vector<2x8x8xf32> to vector<2x8xf32>
    %49 = vector.shape_cast %48 : vector<2x8xf32> to vector<2x8x1xf32>
    %50 = vector.broadcast %49 : vector<2x8x1xf32> to vector<2x8x8xf32>
    %51 = arith.subf %47, %50 : vector<2x8x8xf32>
    %52 = math.exp %51 : vector<2x8x8xf32>
    %cst_38 = arith.constant dense<0.000000e+00> : vector<2x8xf32>
    %53 = vector.multi_reduction <add>, %52, %cst_38 [2] : vector<2x8x8xf32> to vector<2x8xf32>
    %54 = vector.shape_cast %53 : vector<2x8xf32> to vector<2x8x1xf32>
    %55 = tpu.reciprocal %54 {approx = true} : vector<2x8x1xf32> -> vector<2x8x1xf32>
    %56 = vector.broadcast %55 : vector<2x8x1xf32> to vector<2x8x8xf32>
    %57 = arith.mulf %52, %56 : vector<2x8x8xf32>
    %58 = arith.truncf %57 : vector<2x8x8xf32> to vector<2x8x8xbf16>
    %59 = arith.truncf %43 : vector<2x8x8xf32> to vector<2x8x8xbf16>
    %cst_39 = arith.constant dense<0.000000e+00> : vector<2x8x8xf32>
    %60 = tpu.matmul %58, %59, %cst_39 {dimension_numbers = #tpu.dot_dimension_numbers<[2], [1], [1], [2], [0, 0, 0, 1, 1, 2], [0], [0]>} : vector<2x8x8xbf16>, vector<2x8x8xbf16>, vector<2x8x8xf32> -> vector<2x8x8xf32>
    %c0_40 = arith.constant 0 : index
    %c1_41 = arith.constant 1 : index
    %c0_42 = arith.constant 0 : index
    %c0_43 = arith.constant 0 : index
    %61 = vector.load %arg5[%c0_40, %c1_41, %c0_42, %c0_43] : memref<3x4x32x8xbf16, #tpu.memory_space<vmem>>, vector<1x1x32x8xbf16>
    %62 = vector.shape_cast %61 : vector<1x1x32x8xbf16> to vector<32x8xbf16>
    %cst_44 = arith.constant dense<0.000000e+00> : vector<16x8xf32>
    %63 = tpu.matmul %8, %62, %cst_44 {dimension_numbers = #tpu.dot_dimension_numbers<[1], [0], [0], [1], [0, 0, 1, 1], [], []>} : vector<16x32xbf16>, vector<32x8xbf16>, vector<16x8xf32> -> vector<16x8xf32>
    %c0_45 = arith.constant 0 : index
    %c1_46 = arith.constant 1 : index
    %c0_47 = arith.constant 0 : index
    %c0_48 = arith.constant 0 : index
    %64 = vector.load %arg6[%c0_45, %c1_46, %c0_47, %c0_48] : memref<3x4x1x8xf32, #tpu.memory_space<vmem>>, vector<1x1x1x8xf32>
    %65 = vector.shape_cast %64 : vector<1x1x1x8xf32> to vector<1x8xf32>
    %66 = vector.broadcast %65 : vector<1x8xf32> to vector<16x8xf32>
    %67 = arith.addf %63, %66 : vector<16x8xf32>
    %c1_49 = arith.constant 1 : index
    %c1_50 = arith.constant 1 : index
    %c0_51 = arith.constant 0 : index
    %c0_52 = arith.constant 0 : index
    %68 = vector.load %arg5[%c1_49, %c1_50, %c0_51, %c0_52] : memref<3x4x32x8xbf16, #tpu.memory_space<vmem>>, vector<1x1x32x8xbf16>
    %69 = vector.shape_cast %68 : vector<1x1x32x8xbf16> to vector<32x8xbf16>
    %cst_53 = arith.constant dense<0.000000e+00> : vector<16x8xf32>
    %70 = tpu.matmul %8, %69, %cst_53 {dimension_numbers = #tpu.dot_dimension_numbers<[1], [0], [0], [1], [0, 0, 1, 1], [], []>} : vector<16x32xbf16>, vector<32x8xbf16>, vector<16x8xf32> -> vector<16x8xf32>
    %c1_54 = arith.constant 1 : index
    %c1_55 = arith.constant 1 : index
    %c0_56 = arith.constant 0 : index
    %c0_57 = arith.constant 0 : index
    %71 = vector.load %arg6[%c1_54, %c1_55, %c0_56, %c0_57] : memref<3x4x1x8xf32, #tpu.memory_space<vmem>>, vector<1x1x1x8xf32>
    %72 = vector.shape_cast %71 : vector<1x1x1x8xf32> to vector<1x8xf32>
    %73 = vector.broadcast %72 : vector<1x8xf32> to vector<16x8xf32>
    %74 = arith.addf %70, %73 : vector<16x8xf32>
    %c2_58 = arith.constant 2 : index
    %c1_59 = arith.constant 1 : index
    %c0_60 = arith.constant 0 : index
    %c0_61 = arith.constant 0 : index
    %75 = vector.load %arg5[%c2_58, %c1_59, %c0_60, %c0_61] : memref<3x4x32x8xbf16, #tpu.memory_space<vmem>>, vector<1x1x32x8xbf16>
    %76 = vector.shape_cast %75 : vector<1x1x32x8xbf16> to vector<32x8xbf16>
    %cst_62 = arith.constant dense<0.000000e+00> : vector<16x8xf32>
    %77 = tpu.matmul %8, %76, %cst_62 {dimension_numbers = #tpu.dot_dimension_numbers<[1], [0], [0], [1], [0, 0, 1, 1], [], []>} : vector<16x32xbf16>, vector<32x8xbf16>, vector<16x8xf32> -> vector<16x8xf32>
    %c2_63 = arith.constant 2 : index
    %c1_64 = arith.constant 1 : index
    %c0_65 = arith.constant 0 : index
    %c0_66 = arith.constant 0 : index
    %78 = vector.load %arg6[%c2_63, %c1_64, %c0_65, %c0_66] : memref<3x4x1x8xf32, #tpu.memory_space<vmem>>, vector<1x1x1x8xf32>
    %79 = vector.shape_cast %78 : vector<1x1x1x8xf32> to vector<1x8xf32>
    %80 = vector.broadcast %79 : vector<1x8xf32> to vector<16x8xf32>
    %81 = arith.addf %77, %80 : vector<16x8xf32>
    %82 = vector.shape_cast %67 : vector<16x8xf32> to vector<2x8x8xf32>
    %83 = vector.shape_cast %74 : vector<16x8xf32> to vector<2x8x8xf32>
    %84 = vector.shape_cast %81 : vector<16x8xf32> to vector<2x8x8xf32>
    %85 = arith.truncf %82 : vector<2x8x8xf32> to vector<2x8x8xbf16>
    %86 = arith.truncf %83 : vector<2x8x8xf32> to vector<2x8x8xbf16>
    %cst_67 = arith.constant dense<0.000000e+00> : vector<2x8x8xf32>
    %87 = tpu.matmul %85, %86, %cst_67 {dimension_numbers = #tpu.dot_dimension_numbers<[2], [2], [1], [1], [0, 0, 0, 1, 1, 1], [0], [0]>} : vector<2x8x8xbf16>, vector<2x8x8xbf16>, vector<2x8x8xf32> -> vector<2x8x8xf32>
    %88 = arith.addf %87, %19 : vector<2x8x8xf32>
    %cst_68 = arith.constant dense<0xFF800000> : vector<2x8xf32>
    %89 = vector.multi_reduction <maximumf>, %88, %cst_68 [2] : vector<2x8x8xf32> to vector<2x8xf32>
    %90 = vector.shape_cast %89 : vector<2x8xf32> to vector<2x8x1xf32>
    %91 = vector.broadcast %90 : vector<2x8x1xf32> to vector<2x8x8xf32>
    %92 = arith.subf %88, %91 : vector<2x8x8xf32>
    %93 = math.exp %92 : vector<2x8x8xf32>
    %cst_69 = arith.constant dense<0.000000e+00> : vector<2x8xf32>
    %94 = vector.multi_reduction <add>, %93, %cst_69 [2] : vector<2x8x8xf32> to vector<2x8xf32>
    %95 = vector.shape_cast %94 : vector<2x8xf32> to vector<2x8x1xf32>
    %96 = tpu.reciprocal %95 {approx = true} : vector<2x8x1xf32> -> vector<2x8x1xf32>
    %97 = vector.broadcast %96 : vector<2x8x1xf32> to vector<2x8x8xf32>
    %98 = arith.mulf %93, %97 : vector<2x8x8xf32>
    %99 = arith.truncf %98 : vector<2x8x8xf32> to vector<2x8x8xbf16>
    %100 = arith.truncf %84 : vector<2x8x8xf32> to vector<2x8x8xbf16>
    %cst_70 = arith.constant dense<0.000000e+00> : vector<2x8x8xf32>
    %101 = tpu.matmul %99, %100, %cst_70 {dimension_numbers = #tpu.dot_dimension_numbers<[2], [1], [1], [2], [0, 0, 0, 1, 1, 2], [0], [0]>} : vector<2x8x8xbf16>, vector<2x8x8xbf16>, vector<2x8x8xf32> -> vector<2x8x8xf32>
    %c0_71 = arith.constant 0 : index
    %c2_72 = arith.constant 2 : index
    %c0_73 = arith.constant 0 : index
    %c0_74 = arith.constant 0 : index
    %102 = vector.load %arg5[%c0_71, %c2_72, %c0_73, %c0_74] : memref<3x4x32x8xbf16, #tpu.memory_space<vmem>>, vector<1x1x32x8xbf16>
    %103 = vector.shape_cast %102 : vector<1x1x32x8xbf16> to vector<32x8xbf16>
    %cst_75 = arith.constant dense<0.000000e+00> : vector<16x8xf32>
    %104 = tpu.matmul %8, %103, %cst_75 {dimension_numbers = #tpu.dot_dimension_numbers<[1], [0], [0], [1], [0, 0, 1, 1], [], []>} : vector<16x32xbf16>, vector<32x8xbf16>, vector<16x8xf32> -> vector<16x8xf32>
    %c0_76 = arith.constant 0 : index
    %c2_77 = arith.constant 2 : index
    %c0_78 = arith.constant 0 : index
    %c0_79 = arith.constant 0 : index
    %105 = vector.load %arg6[%c0_76, %c2_77, %c0_78, %c0_79] : memref<3x4x1x8xf32, #tpu.memory_space<vmem>>, vector<1x1x1x8xf32>
    %106 = vector.shape_cast %105 : vector<1x1x1x8xf32> to vector<1x8xf32>
    %107 = vector.broadcast %106 : vector<1x8xf32> to vector<16x8xf32>
    %108 = arith.addf %104, %107 : vector<16x8xf32>
    %c1_80 = arith.constant 1 : index
    %c2_81 = arith.constant 2 : index
    %c0_82 = arith.constant 0 : index
    %c0_83 = arith.constant 0 : index
    %109 = vector.load %arg5[%c1_80, %c2_81, %c0_82, %c0_83] : memref<3x4x32x8xbf16, #tpu.memory_space<vmem>>, vector<1x1x32x8xbf16>
    %110 = vector.shape_cast %109 : vector<1x1x32x8xbf16> to vector<32x8xbf16>
    %cst_84 = arith.constant dense<0.000000e+00> : vector<16x8xf32>
    %111 = tpu.matmul %8, %110, %cst_84 {dimension_numbers = #tpu.dot_dimension_numbers<[1], [0], [0], [1], [0, 0, 1, 1], [], []>} : vector<16x32xbf16>, vector<32x8xbf16>, vector<16x8xf32> -> vector<16x8xf32>
    %c1_85 = arith.constant 1 : index
    %c2_86 = arith.constant 2 : index
    %c0_87 = arith.constant 0 : index
    %c0_88 = arith.constant 0 : index
    %112 = vector.load %arg6[%c1_85, %c2_86, %c0_87, %c0_88] : memref<3x4x1x8xf32, #tpu.memory_space<vmem>>, vector<1x1x1x8xf32>
    %113 = vector.shape_cast %112 : vector<1x1x1x8xf32> to vector<1x8xf32>
    %114 = vector.broadcast %113 : vector<1x8xf32> to vector<16x8xf32>
    %115 = arith.addf %111, %114 : vector<16x8xf32>
    %c2_89 = arith.constant 2 : index
    %c2_90 = arith.constant 2 : index
    %c0_91 = arith.constant 0 : index
    %c0_92 = arith.constant 0 : index
    %116 = vector.load %arg5[%c2_89, %c2_90, %c0_91, %c0_92] : memref<3x4x32x8xbf16, #tpu.memory_space<vmem>>, vector<1x1x32x8xbf16>
    %117 = vector.shape_cast %116 : vector<1x1x32x8xbf16> to vector<32x8xbf16>
    %cst_93 = arith.constant dense<0.000000e+00> : vector<16x8xf32>
    %118 = tpu.matmul %8, %117, %cst_93 {dimension_numbers = #tpu.dot_dimension_numbers<[1], [0], [0], [1], [0, 0, 1, 1], [], []>} : vector<16x32xbf16>, vector<32x8xbf16>, vector<16x8xf32> -> vector<16x8xf32>
    %c2_94 = arith.constant 2 : index
    %c2_95 = arith.constant 2 : index
    %c0_96 = arith.constant 0 : index
    %c0_97 = arith.constant 0 : index
    %119 = vector.load %arg6[%c2_94, %c2_95, %c0_96, %c0_97] : memref<3x4x1x8xf32, #tpu.memory_space<vmem>>, vector<1x1x1x8xf32>
    %120 = vector.shape_cast %119 : vector<1x1x1x8xf32> to vector<1x8xf32>
    %121 = vector.broadcast %120 : vector<1x8xf32> to vector<16x8xf32>
    %122 = arith.addf %118, %121 : vector<16x8xf32>
    %123 = vector.shape_cast %108 : vector<16x8xf32> to vector<2x8x8xf32>
    %124 = vector.shape_cast %115 : vector<16x8xf32> to vector<2x8x8xf32>
    %125 = vector.shape_cast %122 : vector<16x8xf32> to vector<2x8x8xf32>
    %126 = arith.truncf %123 : vector<2x8x8xf32> to vector<2x8x8xbf16>
    %127 = arith.truncf %124 : vector<2x8x8xf32> to vector<2x8x8xbf16>
    %cst_98 = arith.constant dense<0.000000e+00> : vector<2x8x8xf32>
    %128 = tpu.matmul %126, %127, %cst_98 {dimension_numbers = #tpu.dot_dimension_numbers<[2], [2], [1], [1], [0, 0, 0, 1, 1, 1], [0], [0]>} : vector<2x8x8xbf16>, vector<2x8x8xbf16>, vector<2x8x8xf32> -> vector<2x8x8xf32>
    %129 = arith.addf %128, %19 : vector<2x8x8xf32>
    %cst_99 = arith.constant dense<0xFF800000> : vector<2x8xf32>
    %130 = vector.multi_reduction <maximumf>, %129, %cst_99 [2] : vector<2x8x8xf32> to vector<2x8xf32>
    %131 = vector.shape_cast %130 : vector<2x8xf32> to vector<2x8x1xf32>
    %132 = vector.broadcast %131 : vector<2x8x1xf32> to vector<2x8x8xf32>
    %133 = arith.subf %129, %132 : vector<2x8x8xf32>
    %134 = math.exp %133 : vector<2x8x8xf32>
    %cst_100 = arith.constant dense<0.000000e+00> : vector<2x8xf32>
    %135 = vector.multi_reduction <add>, %134, %cst_100 [2] : vector<2x8x8xf32> to vector<2x8xf32>
    %136 = vector.shape_cast %135 : vector<2x8xf32> to vector<2x8x1xf32>
    %137 = tpu.reciprocal %136 {approx = true} : vector<2x8x1xf32> -> vector<2x8x1xf32>
    %138 = vector.broadcast %137 : vector<2x8x1xf32> to vector<2x8x8xf32>
    %139 = arith.mulf %134, %138 : vector<2x8x8xf32>
    %140 = arith.truncf %139 : vector<2x8x8xf32> to vector<2x8x8xbf16>
    %141 = arith.truncf %125 : vector<2x8x8xf32> to vector<2x8x8xbf16>
    %cst_101 = arith.constant dense<0.000000e+00> : vector<2x8x8xf32>
    %142 = tpu.matmul %140, %141, %cst_101 {dimension_numbers = #tpu.dot_dimension_numbers<[2], [1], [1], [2], [0, 0, 0, 1, 1, 2], [0], [0]>} : vector<2x8x8xbf16>, vector<2x8x8xbf16>, vector<2x8x8xf32> -> vector<2x8x8xf32>
    %c0_102 = arith.constant 0 : index
    %c3 = arith.constant 3 : index
    %c0_103 = arith.constant 0 : index
    %c0_104 = arith.constant 0 : index
    %143 = vector.load %arg5[%c0_102, %c3, %c0_103, %c0_104] : memref<3x4x32x8xbf16, #tpu.memory_space<vmem>>, vector<1x1x32x8xbf16>
    %144 = vector.shape_cast %143 : vector<1x1x32x8xbf16> to vector<32x8xbf16>
    %cst_105 = arith.constant dense<0.000000e+00> : vector<16x8xf32>
    %145 = tpu.matmul %8, %144, %cst_105 {dimension_numbers = #tpu.dot_dimension_numbers<[1], [0], [0], [1], [0, 0, 1, 1], [], []>} : vector<16x32xbf16>, vector<32x8xbf16>, vector<16x8xf32> -> vector<16x8xf32>
    %c0_106 = arith.constant 0 : index
    %c3_107 = arith.constant 3 : index
    %c0_108 = arith.constant 0 : index
    %c0_109 = arith.constant 0 : index
    %146 = vector.load %arg6[%c0_106, %c3_107, %c0_108, %c0_109] : memref<3x4x1x8xf32, #tpu.memory_space<vmem>>, vector<1x1x1x8xf32>
    %147 = vector.shape_cast %146 : vector<1x1x1x8xf32> to vector<1x8xf32>
    %148 = vector.broadcast %147 : vector<1x8xf32> to vector<16x8xf32>
    %149 = arith.addf %145, %148 : vector<16x8xf32>
    %c1_110 = arith.constant 1 : index
    %c3_111 = arith.constant 3 : index
    %c0_112 = arith.constant 0 : index
    %c0_113 = arith.constant 0 : index
    %150 = vector.load %arg5[%c1_110, %c3_111, %c0_112, %c0_113] : memref<3x4x32x8xbf16, #tpu.memory_space<vmem>>, vector<1x1x32x8xbf16>
    %151 = vector.shape_cast %150 : vector<1x1x32x8xbf16> to vector<32x8xbf16>
    %cst_114 = arith.constant dense<0.000000e+00> : vector<16x8xf32>
    %152 = tpu.matmul %8, %151, %cst_114 {dimension_numbers = #tpu.dot_dimension_numbers<[1], [0], [0], [1], [0, 0, 1, 1], [], []>} : vector<16x32xbf16>, vector<32x8xbf16>, vector<16x8xf32> -> vector<16x8xf32>
    %c1_115 = arith.constant 1 : index
    %c3_116 = arith.constant 3 : index
    %c0_117 = arith.constant 0 : index
    %c0_118 = arith.constant 0 : index
    %153 = vector.load %arg6[%c1_115, %c3_116, %c0_117, %c0_118] : memref<3x4x1x8xf32, #tpu.memory_space<vmem>>, vector<1x1x1x8xf32>
    %154 = vector.shape_cast %153 : vector<1x1x1x8xf32> to vector<1x8xf32>
    %155 = vector.broadcast %154 : vector<1x8xf32> to vector<16x8xf32>
    %156 = arith.addf %152, %155 : vector<16x8xf32>
    %c2_119 = arith.constant 2 : index
    %c3_120 = arith.constant 3 : index
    %c0_121 = arith.constant 0 : index
    %c0_122 = arith.constant 0 : index
    %157 = vector.load %arg5[%c2_119, %c3_120, %c0_121, %c0_122] : memref<3x4x32x8xbf16, #tpu.memory_space<vmem>>, vector<1x1x32x8xbf16>
    %158 = vector.shape_cast %157 : vector<1x1x32x8xbf16> to vector<32x8xbf16>
    %cst_123 = arith.constant dense<0.000000e+00> : vector<16x8xf32>
    %159 = tpu.matmul %8, %158, %cst_123 {dimension_numbers = #tpu.dot_dimension_numbers<[1], [0], [0], [1], [0, 0, 1, 1], [], []>} : vector<16x32xbf16>, vector<32x8xbf16>, vector<16x8xf32> -> vector<16x8xf32>
    %c2_124 = arith.constant 2 : index
    %c3_125 = arith.constant 3 : index
    %c0_126 = arith.constant 0 : index
    %c0_127 = arith.constant 0 : index
    %160 = vector.load %arg6[%c2_124, %c3_125, %c0_126, %c0_127] : memref<3x4x1x8xf32, #tpu.memory_space<vmem>>, vector<1x1x1x8xf32>
    %161 = vector.shape_cast %160 : vector<1x1x1x8xf32> to vector<1x8xf32>
    %162 = vector.broadcast %161 : vector<1x8xf32> to vector<16x8xf32>
    %163 = arith.addf %159, %162 : vector<16x8xf32>
    %164 = vector.shape_cast %149 : vector<16x8xf32> to vector<2x8x8xf32>
    %165 = vector.shape_cast %156 : vector<16x8xf32> to vector<2x8x8xf32>
    %166 = vector.shape_cast %163 : vector<16x8xf32> to vector<2x8x8xf32>
    %167 = arith.truncf %164 : vector<2x8x8xf32> to vector<2x8x8xbf16>
    %168 = arith.truncf %165 : vector<2x8x8xf32> to vector<2x8x8xbf16>
    %cst_128 = arith.constant dense<0.000000e+00> : vector<2x8x8xf32>
    %169 = tpu.matmul %167, %168, %cst_128 {dimension_numbers = #tpu.dot_dimension_numbers<[2], [2], [1], [1], [0, 0, 0, 1, 1, 1], [0], [0]>} : vector<2x8x8xbf16>, vector<2x8x8xbf16>, vector<2x8x8xf32> -> vector<2x8x8xf32>
    %170 = arith.addf %169, %19 : vector<2x8x8xf32>
    %cst_129 = arith.constant dense<0xFF800000> : vector<2x8xf32>
    %171 = vector.multi_reduction <maximumf>, %170, %cst_129 [2] : vector<2x8x8xf32> to vector<2x8xf32>
    %172 = vector.shape_cast %171 : vector<2x8xf32> to vector<2x8x1xf32>
    %173 = vector.broadcast %172 : vector<2x8x1xf32> to vector<2x8x8xf32>
    %174 = arith.subf %170, %173 : vector<2x8x8xf32>
    %175 = math.exp %174 : vector<2x8x8xf32>
    %cst_130 = arith.constant dense<0.000000e+00> : vector<2x8xf32>
    %176 = vector.multi_reduction <add>, %175, %cst_130 [2] : vector<2x8x8xf32> to vector<2x8xf32>
    %177 = vector.shape_cast %176 : vector<2x8xf32> to vector<2x8x1xf32>
    %178 = tpu.reciprocal %177 {approx = true} : vector<2x8x1xf32> -> vector<2x8x1xf32>
    %179 = vector.broadcast %178 : vector<2x8x1xf32> to vector<2x8x8xf32>
    %180 = arith.mulf %175, %179 : vector<2x8x8xf32>
    %181 = arith.truncf %180 : vector<2x8x8xf32> to vector<2x8x8xbf16>
    %182 = arith.truncf %166 : vector<2x8x8xf32> to vector<2x8x8xbf16>
    %cst_131 = arith.constant dense<0.000000e+00> : vector<2x8x8xf32>
    %183 = tpu.matmul %181, %182, %cst_131 {dimension_numbers = #tpu.dot_dimension_numbers<[2], [1], [1], [2], [0, 0, 0, 1, 1, 2], [0], [0]>} : vector<2x8x8xbf16>, vector<2x8x8xbf16>, vector<2x8x8xf32> -> vector<2x8x8xf32>
    %184 = tpu.concatenate %60, %101, %142, %183 in 2 : vector<2x8x8xf32>, vector<2x8x8xf32>, vector<2x8x8xf32>, vector<2x8x8xf32> -> vector<2x8x32xf32>
    %185 = vector.shape_cast %184 : vector<2x8x32xf32> to vector<16x32xf32>
    %186 = arith.truncf %185 : vector<16x32xf32> to vector<16x32xbf16>
    %c0_132 = arith.constant 0 : index
    %c0_133 = arith.constant 0 : index
    %187 = vector.load %arg7[%c0_132, %c0_133] : memref<32x32xbf16, #tpu.memory_space<vmem>>, vector<32x32xbf16>
    %cst_134 = arith.constant dense<0.000000e+00> : vector<16x32xf32>
    %188 = tpu.matmul %186, %187, %cst_134 {dimension_numbers = #tpu.dot_dimension_numbers<[1], [0], [0], [1], [0, 0, 1, 1], [], []>} : vector<16x32xbf16>, vector<32x32xbf16>, vector<16x32xf32> -> vector<16x32xf32>
    %c0_135 = arith.constant 0 : index
    %c0_136 = arith.constant 0 : index
    %189 = vector.load %arg8[%c0_135, %c0_136] : memref<1x32xf32, #tpu.memory_space<vmem>>, vector<1x32xf32>
    %190 = vector.broadcast %189 : vector<1x32xf32> to vector<16x32xf32>
    %191 = arith.addf %188, %190 : vector<16x32xf32>
    %192 = arith.addf %7, %191 : vector<16x32xf32>
    %c0_137 = arith.constant 0 : index
    %c0_138 = arith.constant 0 : index
    %193 = vector.load %arg9[%c0_137, %c0_138] : memref<1x32xf32, #tpu.memory_space<vmem>>, vector<1x32xf32>
    %c0_139 = arith.constant 0 : index
    %c0_140 = arith.constant 0 : index
    %194 = vector.load %arg10[%c0_139, %c0_140] : memref<1x32xf32, #tpu.memory_space<vmem>>, vector<1x32xf32>
    %cst_141 = arith.constant dense<0.000000e+00> : vector<16xf32>
    %195 = vector.multi_reduction <add>, %192, %cst_141 [1] : vector<16x32xf32> to vector<16xf32>
    %196 = vector.shape_cast %195 : vector<16xf32> to vector<16x1xf32>
    %cst_142 = arith.constant 3.200000e+01 : f32
    %197 = vector.broadcast %cst_142 : f32 to vector<16x1xf32>
    %198 = arith.divf %196, %197 : vector<16x1xf32>
    %199 = vector.broadcast %198 : vector<16x1xf32> to vector<16x32xf32>
    %200 = arith.subf %192, %199 : vector<16x32xf32>
    %201 = arith.mulf %200, %200 : vector<16x32xf32>
    %cst_143 = arith.constant dense<0.000000e+00> : vector<16xf32>
    %202 = vector.multi_reduction <add>, %201, %cst_143 [1] : vector<16x32xf32> to vector<16xf32>
    %203 = vector.shape_cast %202 : vector<16xf32> to vector<16x1xf32>
    %cst_144 = arith.constant 3.200000e+01 : f32
    %204 = vector.broadcast %cst_144 : f32 to vector<16x1xf32>
    %205 = arith.divf %203, %204 : vector<16x1xf32>
    %206 = vector.broadcast %198 : vector<16x1xf32> to vector<16x32xf32>
    %207 = arith.subf %192, %206 : vector<16x32xf32>
    %cst_145 = arith.constant 9.99999974E-6 : f32
    %208 = vector.broadcast %cst_145 : f32 to vector<16x1xf32>
    %209 = arith.addf %205, %208 : vector<16x1xf32>
    %210 = math.rsqrt %209 : vector<16x1xf32>
    %211 = vector.broadcast %210 : vector<16x1xf32> to vector<16x32xf32>
    %212 = arith.mulf %207, %211 : vector<16x32xf32>
    %213 = vector.broadcast %193 : vector<1x32xf32> to vector<16x32xf32>
    %214 = arith.mulf %212, %213 : vector<16x32xf32>
    %215 = vector.broadcast %194 : vector<1x32xf32> to vector<16x32xf32>
    %216 = arith.addf %214, %215 : vector<16x32xf32>
    %217 = arith.truncf %216 : vector<16x32xf32> to vector<16x32xbf16>
    %c0_146 = arith.constant 0 : index
    %c0_147 = arith.constant 0 : index
    %218 = vector.load %arg11[%c0_146, %c0_147] : memref<32x64xbf16, #tpu.memory_space<vmem>>, vector<32x64xbf16>
    %cst_148 = arith.constant dense<0.000000e+00> : vector<16x64xf32>
    %219 = tpu.matmul %217, %218, %cst_148 {dimension_numbers = #tpu.dot_dimension_numbers<[1], [0], [0], [1], [0, 0, 1, 1], [], []>} : vector<16x32xbf16>, vector<32x64xbf16>, vector<16x64xf32> -> vector<16x64xf32>
    %c0_149 = arith.constant 0 : index
    %c0_150 = arith.constant 0 : index
    %220 = vector.load %arg12[%c0_149, %c0_150] : memref<1x64xf32, #tpu.memory_space<vmem>>, vector<1x64xf32>
    %221 = vector.broadcast %220 : vector<1x64xf32> to vector<16x64xf32>
    %222 = arith.addf %219, %221 : vector<16x64xf32>
    %cst_151 = arith.constant 0.000000e+00 : f32
    %223 = vector.broadcast %cst_151 : f32 to vector<16x64xf32>
    %224 = arith.maximumf %222, %223 : vector<16x64xf32>
    %225 = arith.truncf %224 : vector<16x64xf32> to vector<16x64xbf16>
    %c0_152 = arith.constant 0 : index
    %c0_153 = arith.constant 0 : index
    %226 = vector.load %arg13[%c0_152, %c0_153] : memref<64x32xbf16, #tpu.memory_space<vmem>>, vector<64x32xbf16>
    %cst_154 = arith.constant dense<0.000000e+00> : vector<16x32xf32>
    %227 = tpu.matmul %225, %226, %cst_154 {dimension_numbers = #tpu.dot_dimension_numbers<[1], [0], [0], [1], [0, 0, 1, 1], [], []>} : vector<16x64xbf16>, vector<64x32xbf16>, vector<16x32xf32> -> vector<16x32xf32>
    %c0_155 = arith.constant 0 : index
    %c0_156 = arith.constant 0 : index
    %228 = vector.load %arg14[%c0_155, %c0_156] : memref<1x32xf32, #tpu.memory_space<vmem>>, vector<1x32xf32>
    %229 = vector.broadcast %228 : vector<1x32xf32> to vector<16x32xf32>
    %230 = arith.addf %227, %229 : vector<16x32xf32>
    %231 = arith.addf %216, %230 : vector<16x32xf32>
    %c0_157 = arith.constant 0 : index
    %c0_158 = arith.constant 0 : index
    %232 = vector.load %arg15[%c0_157, %c0_158] : memref<1x32xf32, #tpu.memory_space<vmem>>, vector<1x32xf32>
    %c0_159 = arith.constant 0 : index
    %c0_160 = arith.constant 0 : index
    %233 = vector.load %arg16[%c0_159, %c0_160] : memref<1x32xf32, #tpu.memory_space<vmem>>, vector<1x32xf32>
    %cst_161 = arith.constant dense<0.000000e+00> : vector<16xf32>
    %234 = vector.multi_reduction <add>, %231, %cst_161 [1] : vector<16x32xf32> to vector<16xf32>
    %235 = vector.shape_cast %234 : vector<16xf32> to vector<16x1xf32>
    %cst_162 = arith.constant 3.200000e+01 : f32
    %236 = vector.broadcast %cst_162 : f32 to vector<16x1xf32>
    %237 = arith.divf %235, %236 : vector<16x1xf32>
    %238 = vector.broadcast %237 : vector<16x1xf32> to vector<16x32xf32>
    %239 = arith.subf %231, %238 : vector<16x32xf32>
    %240 = arith.mulf %239, %239 : vector<16x32xf32>
    %cst_163 = arith.constant dense<0.000000e+00> : vector<16xf32>
    %241 = vector.multi_reduction <add>, %240, %cst_163 [1] : vector<16x32xf32> to vector<16xf32>
    %242 = vector.shape_cast %241 : vector<16xf32> to vector<16x1xf32>
    %cst_164 = arith.constant 3.200000e+01 : f32
    %243 = vector.broadcast %cst_164 : f32 to vector<16x1xf32>
    %244 = arith.divf %242, %243 : vector<16x1xf32>
    %245 = vector.broadcast %237 : vector<16x1xf32> to vector<16x32xf32>
    %246 = arith.subf %231, %245 : vector<16x32xf32>
    %cst_165 = arith.constant 9.99999974E-6 : f32
    %247 = vector.broadcast %cst_165 : f32 to vector<16x1xf32>
    %248 = arith.addf %244, %247 : vector<16x1xf32>
    %249 = math.rsqrt %248 : vector<16x1xf32>
    %250 = vector.broadcast %249 : vector<16x1xf32> to vector<16x32xf32>
    %251 = arith.mulf %246, %250 : vector<16x32xf32>
    %252 = vector.broadcast %232 : vector<1x32xf32> to vector<16x32xf32>
    %253 = arith.mulf %251, %252 : vector<16x32xf32>
    %254 = vector.broadcast %233 : vector<1x32xf32> to vector<16x32xf32>
    %255 = arith.addf %253, %254 : vector<16x32xf32>
    %256 = vector.shape_cast %255 : vector<16x32xf32> to vector<2x8x32xf32>
    %c0_166 = arith.constant 0 : index
    %c0_167 = arith.constant 0 : index
    %c0_168 = arith.constant 0 : index
    %257 = vector.load %arg17[%c0_166, %c0_167, %c0_168] : memref<2x8x32xf32, #tpu.memory_space<vmem>>, vector<2x8x32xf32>
    tpu.vector_store %arg17[%c0_166, %c0_167, %c0_168], %256 {strides = array<i32>} : memref<2x8x32xf32, #tpu.memory_space<vmem>>, vector<2x8x32xf32>,
    return
  }
  func.func @transform_0(%arg0: i32) -> (i32, i32, i32) {
    %c0_i32 = arith.constant 0 : i32
    %c0_i32_0 = arith.constant 0 : i32
    %c0_i32_1 = arith.constant 0 : i32
    return %arg0, %c0_i32, %c0_i32_0 : i32, i32, i32
  }
  func.func @transform_1(%arg0: i32) -> (i32, i32, i32) {
    %c0_i32 = arith.constant 0 : i32
    %c0_i32_0 = arith.constant 0 : i32
    %c0_i32_1 = arith.constant 0 : i32
    return %arg0, %c0_i32, %c0_i32_0 : i32, i32, i32
  }
  func.func @transform_2(%arg0: i32) -> (i32, i32) {
    %c0_i32 = arith.constant 0 : i32
    %c0_i32_0 = arith.constant 0 : i32
    %c0_i32_1 = arith.constant 0 : i32
    return %c0_i32, %c0_i32_0 : i32, i32
  }
  func.func @transform_3(%arg0: i32) -> (i32, i32) {
    %c0_i32 = arith.constant 0 : i32
    %c0_i32_0 = arith.constant 0 : i32
    %c0_i32_1 = arith.constant 0 : i32
    return %c0_i32, %c0_i32_0 : i32, i32
  }
  func.func @transform_4(%arg0: i32) -> (i32, i32, i32, i32) {
    %c0_i32 = arith.constant 0 : i32
    %c0_i32_0 = arith.constant 0 : i32
    %c0_i32_1 = arith.constant 0 : i32
    %c0_i32_2 = arith.constant 0 : i32
    %c0_i32_3 = arith.constant 0 : i32
    return %c0_i32, %c0_i32_0, %c0_i32_1, %c0_i32_2 : i32, i32, i32, i32
  }
  func.func @transform_5(%arg0: i32) -> (i32, i32, i32, i32) {
    %c0_i32 = arith.constant 0 : i32
    %c0_i32_0 = arith.constant 0 : i32
    %c0_i32_1 = arith.constant 0 : i32
    %c0_i32_2 = arith.constant 0 : i32
    %c0_i32_3 = arith.constant 0 : i32
    return %c0_i32, %c0_i32_0, %c0_i32_1, %c0_i32_2 : i32, i32, i32, i32
  }
  func.func @transform_6(%arg0: i32) -> (i32, i32) {
    %c0_i32 = arith.constant 0 : i32
    %c0_i32_0 = arith.constant 0 : i32
    %c0_i32_1 = arith.constant 0 : i32
    return %c0_i32, %c0_i32_0 : i32, i32
  }
  func.func @transform_7(%arg0: i32) -> (i32, i32) {
    %c0_i32 = arith.constant 0 : i32
    %c0_i32_0 = arith.constant 0 : i32
    %c0_i32_1 = arith.constant 0 : i32
    return %c0_i32, %c0_i32_0 : i32, i32
  }
  func.func @transform_8(%arg0: i32) -> (i32, i32) {
    %c0_i32 = arith.constant 0 : i32
    %c0_i32_0 = arith.constant 0 : i32
    %c0_i32_1 = arith.constant 0 : i32
    return %c0_i32, %c0_i32_0 : i32, i32
  }
  func.func @transform_9(%arg0: i32) -> (i32, i32) {
    %c0_i32 = arith.constant 0 : i32
    %c0_i32_0 = arith.constant 0 : i32
    %c0_i32_1 = arith.constant 0 : i32
    return %c0_i32, %c0_i32_0 : i32, i32
  }
  func.func @transform_10(%arg0: i32) -> (i32, i32) {
    %c0_i32 = arith.constant 0 : i32
    %c0_i32_0 = arith.constant 0 : i32
    %c0_i32_1 = arith.constant 0 : i32
    return %c0_i32, %c0_i32_0 : i32, i32
  }
  func.func @transform_11(%arg0: i32) -> (i32, i32) {
    %c0_i32 = arith.constant 0 : i32
    %c0_i32_0 = arith.constant 0 : i32
    %c0_i32_1 = arith.constant 0 : i32
    return %c0_i32, %c0_i32_0 : i32, i32
  }
  func.func @transform_12(%arg0: i32) -> (i32, i32) {
    %c0_i32 = arith.constant 0 : i32
    %c0_i32_0 = arith.constant 0 : i32
    %c0_i32_1 = arith.constant 0 : i32
    return %c0_i32, %c0_i32_0 : i32, i32
  }
  func.func @transform_13(%arg0: i32) -> (i32, i32) {
    %c0_i32 = arith.constant 0 : i32
    %c0_i32_0 = arith.constant 0 : i32
    %c0_i32_1 = arith.constant 0 : i32
    return %c0_i32, %c0_i32_0 : i32, i32
  }
  func.func @transform_14(%arg0: i32) -> (i32, i32) {
    %c0_i32 = arith.constant 0 : i32
    %c0_i32_0 = arith.constant 0 : i32
    %c0_i32_1 = arith.constant 0 : i32
    return %c0_i32, %c0_i32_0 : i32, i32
  }
  func.func @transform_15(%arg0: i32) -> (i32, i32) {
    %c0_i32 = arith.constant 0 : i32
    %c0_i32_0 = arith.constant 0 : i32
    %c0_i32_1 = arith.constant 0 : i32
    return %c0_i32, %c0_i32_0 : i32, i32
  }
  func.func @transform_16(%arg0: i32) -> (i32, i32, i32) {
    %c0_i32 = arith.constant 0 : i32
    %c0_i32_0 = arith.constant 0 : i32
    %c0_i32_1 = arith.constant 0 : i32
    return %arg0, %c0_i32, %c0_i32_0 : i32, i32, i32
  }
}

</mosaic_0001>

<llo_original>
// kernel: tpu_custom_call.1
$region0: #{tpu_custom_call.1}
  #allocation0 [shape = 'u32[]', space=smem, size = 0x4, offset = 0x4, fixed_abs, tag = 'smem constant byte address 0x4 - core index']
  #allocation1 [shape = 'u32[144,128]{1,0:T(1,128)}', space=vmem, size = 0x12000, scoped, tag = 'internal scratch']
  %s0 = inlined_call_operand.vmem [shape: f32[4,8,16], index: 0, kind: input, shape index: {}]
  %s1 = inlined_call_operand.vmem [shape: f32[4,1,8], index: 1, kind: input, shape index: {}]
  %s2 = inlined_call_operand.vmem [shape: bf16[16,32], index: 2, kind: input, shape index: {}]
  %s3 = inlined_call_operand.vmem [shape: f32[1,32], index: 3, kind: input, shape index: {}]
  %s4 = inlined_call_operand.vmem [shape: bf16[3,4,32,8], index: 4, kind: input, shape index: {}]
  %s5 = inlined_call_operand.vmem [shape: f32[3,4,1,8], index: 5, kind: input, shape index: {}]
  %s6 = inlined_call_operand.vmem [shape: bf16[32,32], index: 6, kind: input, shape index: {}]
  %s7 = inlined_call_operand.vmem [shape: f32[1,32], index: 7, kind: input, shape index: {}]
  %s8 = inlined_call_operand.vmem [shape: f32[1,32], index: 8, kind: input, shape index: {}]
  %s9 = inlined_call_operand.vmem [shape: f32[1,32], index: 9, kind: input, shape index: {}]
  %s10 = inlined_call_operand.vmem [shape: bf16[32,64], index: 10, kind: input, shape index: {}]
  %s11 = inlined_call_operand.vmem [shape: f32[1,64], index: 11, kind: input, shape index: {}]
  %s12 = inlined_call_operand.vmem [shape: bf16[64,32], index: 12, kind: input, shape index: {}]
  %s13 = inlined_call_operand.vmem [shape: f32[1,32], index: 13, kind: input, shape index: {}]
  %s14 = inlined_call_operand.vmem [shape: f32[1,32], index: 14, kind: input, shape index: {}]
  %s15 = inlined_call_operand.vmem [shape: f32[1,32], index: 15, kind: input, shape index: {}]
  %s16 = inlined_call_operand.hbm [shape: f32[4,8,32], index: 16, kind: output, shape index: {}]
  %s17 = sld [smem:[#allocation0]]
  $region97: #{tpu_custom_call.1} parent=0
    _
  %s19 = ssub.s32 1, %s17
  %s20 = scalar_select 0, %s19, %s17
  $region1: #{tpu_custom_call.1} parent=0
    #allocation2 [shape = 'u8[16384]{0}', space=vmem, size = 0x4000, scoped, tag = 'output window, operand 0']
    #allocation3 [shape = 's32[2]{0}', space=sflag, size = 0x8, scoped, tag = 'scoped memory for tpu_custom_call.1']
    %21 = vsyncpa [#allocation3], 0
    %s22 = scalar_lea.sflag [#allocation3], 1
    %23 = vsyncpa %s22, 0
    loop: start=0, step=1, limit=4
    $region2: #{tpu_custom_call.1} parent=1 // loop_pre_header
      _
    $region3: #{tpu_custom_call.1} parent=1 // loop_header
      %s25 = sphi 0, %s29
      %p26 = scmp.ge.s32.totalorder %s25, 4
      %s35 = sphi 0, %s37
      %s38 = sphi 0, %s35
      %s39 = sphi 0, %s38
      %s55 = sphi 0, %s39
      %s61 = sphi 0, %s63
      %s64 = sphi 0, %s61
      %s65 = sphi 0, %s64
      %s81 = sphi 0, %s65
      %s85 = sphi 0, %s85
      %s87 = sphi 0, %s85
      %s88 = sphi 0, %s87
      %s102 = sphi 0, %s88
      %s106 = sphi 0, %s106
      %s108 = sphi 0, %s106
      %s109 = sphi 0, %s108
      %s123 = sphi 0, %s109
      %s127 = sphi 0, %s127
      %s129 = sphi 0, %s127
      %s130 = sphi 0, %s129
      %s144 = sphi 0, %s130
      %s148 = sphi 0, %s148
      %s150 = sphi 0, %s148
      %s151 = sphi 0, %s150
      %s165 = sphi 0, %s151
      %s169 = sphi 0, %s169
      %s171 = sphi 0, %s169
      %s172 = sphi 0, %s171
      %s186 = sphi 0, %s172
      %s190 = sphi 0, %s190
      %s192 = sphi 0, %s190
      %s193 = sphi 0, %s192
      %s207 = sphi 0, %s193
      %s211 = sphi 0, %s211
      %s213 = sphi 0, %s211
      %s214 = sphi 0, %s213
      %s228 = sphi 0, %s214
      %s232 = sphi 0, %s232
      %s234 = sphi 0, %s232
      %s235 = sphi 0, %s234
      %s249 = sphi 0, %s235
      %s253 = sphi 0, %s253
      %s255 = sphi 0, %s253
      %s256 = sphi 0, %s255
      %s270 = sphi 0, %s256
      %s274 = sphi 0, %s274
      %s276 = sphi 0, %s274
      %s277 = sphi 0, %s276
      %s291 = sphi 0, %s277
      %s295 = sphi 0, %s295
      %s297 = sphi 0, %s295
      %s298 = sphi 0, %s297
      %s312 = sphi 0, %s298
      %s316 = sphi 0, %s316
      %s318 = sphi 0, %s316
      %s319 = sphi 0, %s318
      %s333 = sphi 0, %s319
      %s337 = sphi 0, %s337
      %s339 = sphi 0, %s337
      %s340 = sphi 0, %s339
      %s354 = sphi 0, %s340
      %s358 = sphi 0, %s358
      %s360 = sphi 0, %s358
      %s361 = sphi 0, %s360
      %s375 = sphi 0, %s361
      %s381 = sphi 0, %s383
      %s384 = sphi 0, %s381
      %s385 = sphi 0, %s384
      %s401 = sphi 0, %s385
    $region4: #{tpu_custom_call.1} parent=1 // loop_header_branch
      %28 = sbr.rel (%p26) target = $region8
    $region5: #{tpu_custom_call.1} parent=1 // loop_body
      %s30 = ssub.s32 %s25, 1
      %s31 = ssub.s32 %s25, 2
      %s32 = sadd.s32 %s25, 1
      %s33 = ssub.s32 %s25, %s32
      %p34 = scmp.eq.s32.totalorder %s33, 0
      %s36 = sadd.s32 %s35, 1
      %s37 = scalar_select %p34, %s35, %s36
      %p40 = pneg %p34
      %p41 = scmp.eq.s32.totalorder %s25, 1
      %p42 = por %p40, %p41
      %p43 = scmp.ne.s32.totalorder %s35, %s38
      %p44 = scmp.eq.s32.totalorder %s25, 0
      %p45 = por %p43, %p44
      %p46 = scmp.ne.s32.totalorder %s35, %s38
      %p47 = scmp.eq.s32.totalorder %s30, 1
      %p48 = por %p46, %p47
      %p49 = scmp.ne.s32.totalorder %s38, %s39
      %p50 = scmp.eq.s32.totalorder %s30, 0
      %p51 = por %p49, %p50
      %p52 = scmp.ne.s32.totalorder %s38, %s39
      %p53 = scmp.eq.s32.totalorder %s31, 1
      %p54 = por %p52, %p53
      %p56 = scmp.ne.s32.totalorder %s39, %s55
      %p57 = scmp.eq.s32.totalorder %s31, 0
      %p58 = por %p56, %p57
      %s59 = ssub.s32 %s25, %s32
      %p60 = scmp.eq.s32.totalorder %s59, 0
      %s62 = sadd.s32 %s61, 1
      %s63 = scalar_select %p60, %s61, %s62
      %p66 = pneg %p60
      %p67 = scmp.eq.s32.totalorder %s25, 1
      %p68 = por %p66, %p67
      %p69 = scmp.ne.s32.totalorder %s61, %s64
      %p70 = scmp.eq.s32.totalorder %s25, 0
      %p71 = por %p69, %p70
      %p72 = scmp.ne.s32.totalorder %s61, %s64
      %p73 = scmp.eq.s32.totalorder %s30, 1
      %p74 = por %p72, %p73
      %p75 = scmp.ne.s32.totalorder %s64, %s65
      %p76 = scmp.eq.s32.totalorder %s30, 0
      %p77 = por %p75, %p76
      %p78 = scmp.ne.s32.totalorder %s64, %s65
      %p79 = scmp.eq.s32.totalorder %s31, 1
      %p80 = por %p78, %p79
      %p82 = scmp.ne.s32.totalorder %s65, %s81
      %p83 = scmp.eq.s32.totalorder %s31, 0
      %p84 = por %p82, %p83
      %s86 = sadd.s32 %s85, 1
      %p89 = scmp.eq.s32.totalorder %s25, 1
      %p90 = scmp.ne.s32.totalorder %s85, %s87
      %p91 = scmp.eq.s32.totalorder %s25, 0
      %p92 = por %p90, %p91
      %p93 = scmp.ne.s32.totalorder %s85, %s87
      %p94 = scmp.eq.s32.totalorder %s30, 1
      %p95 = por %p93, %p94
      %p96 = scmp.ne.s32.totalorder %s87, %s88
      %p97 = scmp.eq.s32.totalorder %s30, 0
      %p98 = por %p96, %p97
      %p99 = scmp.ne.s32.totalorder %s87, %s88
      %p100 = scmp.eq.s32.totalorder %s31, 1
      %p101 = por %p99, %p100
      %p103 = scmp.ne.s32.totalorder %s88, %s102
      %p104 = scmp.eq.s32.totalorder %s31, 0
      %p105 = por %p103, %p104
      %s107 = sadd.s32 %s106, 1
      %p110 = scmp.eq.s32.totalorder %s25, 1
      %p111 = scmp.ne.s32.totalorder %s106, %s108
      %p112 = scmp.eq.s32.totalorder %s25, 0
      %p113 = por %p111, %p112
      %p114 = scmp.ne.s32.totalorder %s106, %s108
      %p115 = scmp.eq.s32.totalorder %s30, 1
      %p116 = por %p114, %p115
      %p117 = scmp.ne.s32.totalorder %s108, %s109
      %p118 = scmp.eq.s32.totalorder %s30, 0
      %p119 = por %p117, %p118
      %p120 = scmp.ne.s32.totalorder %s108, %s109
      %p121 = scmp.eq.s32.totalorder %s31, 1
      %p122 = por %p120, %p121
      %p124 = scmp.ne.s32.totalorder %s109, %s123
      %p125 = scmp.eq.s32.totalorder %s31, 0
      %p126 = por %p124, %p125
      %s128 = sadd.s32 %s127, 1
      %p131 = scmp.eq.s32.totalorder %s25, 1
      %p132 = scmp.ne.s32.totalorder %s127, %s129
      %p133 = scmp.eq.s32.totalorder %s25, 0
      %p134 = por %p132, %p133
      %p135 = scmp.ne.s32.totalorder %s127, %s129
      %p136 = scmp.eq.s32.totalorder %s30, 1
      %p137 = por %p135, %p136
      %p138 = scmp.ne.s32.totalorder %s129, %s130
      %p139 = scmp.eq.s32.totalorder %s30, 0
      %p140 = por %p138, %p139
      %p141 = scmp.ne.s32.totalorder %s129, %s130
      %p142 = scmp.eq.s32.totalorder %s31, 1
      %p143 = por %p141, %p142
      %p145 = scmp.ne.s32.totalorder %s130, %s144
      %p146 = scmp.eq.s32.totalorder %s31, 0
      %p147 = por %p145, %p146
      %s149 = sadd.s32 %s148, 1
      %p152 = scmp.eq.s32.totalorder %s25, 1
      %p153 = scmp.ne.s32.totalorder %s148, %s150
      %p154 = scmp.eq.s32.totalorder %s25, 0
      %p155 = por %p153, %p154
      %p156 = scmp.ne.s32.totalorder %s148, %s150
      %p157 = scmp.eq.s32.totalorder %s30, 1
      %p158 = por %p156, %p157
      %p159 = scmp.ne.s32.totalorder %s150, %s151
      %p160 = scmp.eq.s32.totalorder %s30, 0
      %p161 = por %p159, %p160
      %p162 = scmp.ne.s32.totalorder %s150, %s151
      %p163 = scmp.eq.s32.totalorder %s31, 1
      %p164 = por %p162, %p163
      %p166 = scmp.ne.s32.totalorder %s151, %s165
      %p167 = scmp.eq.s32.totalorder %s31, 0
      %p168 = por %p166, %p167
      %s170 = sadd.s32 %s169, 1
      %p173 = scmp.eq.s32.totalorder %s25, 1
      %p174 = scmp.ne.s32.totalorder %s169, %s171
      %p175 = scmp.eq.s32.totalorder %s25, 0
      %p176 = por %p174, %p175
      %p177 = scmp.ne.s32.totalorder %s169, %s171
      %p178 = scmp.eq.s32.totalorder %s30, 1
      %p179 = por %p177, %p178
      %p180 = scmp.ne.s32.totalorder %s171, %s172
      %p181 = scmp.eq.s32.totalorder %s30, 0
      %p182 = por %p180, %p181
      %p183 = scmp.ne.s32.totalorder %s171, %s172
      %p184 = scmp.eq.s32.totalorder %s31, 1
      %p185 = por %p183, %p184
      %p187 = scmp.ne.s32.totalorder %s172, %s186
      %p188 = scmp.eq.s32.totalorder %s31, 0
      %p189 = por %p187, %p188
      %s191 = sadd.s32 %s190, 1
      %p194 = scmp.eq.s32.totalorder %s25, 1
      %p195 = scmp.ne.s32.totalorder %s190, %s192
      %p196 = scmp.eq.s32.totalorder %s25, 0
      %p197 = por %p195, %p196
      %p198 = scmp.ne.s32.totalorder %s190, %s192
      %p199 = scmp.eq.s32.totalorder %s30, 1
      %p200 = por %p198, %p199
      %p201 = scmp.ne.s32.totalorder %s192, %s193
      %p202 = scmp.eq.s32.totalorder %s30, 0
      %p203 = por %p201, %p202
      %p204 = scmp.ne.s32.totalorder %s192, %s193
      %p205 = scmp.eq.s32.totalorder %s31, 1
      %p206 = por %p204, %p205
      %p208 = scmp.ne.s32.totalorder %s193, %s207
      %p209 = scmp.eq.s32.totalorder %s31, 0
      %p210 = por %p208, %p209
      %s212 = sadd.s32 %s211, 1
      %p215 = scmp.eq.s32.totalorder %s25, 1
      %p216 = scmp.ne.s32.totalorder %s211, %s213
      %p217 = scmp.eq.s32.totalorder %s25, 0
      %p218 = por %p216, %p217
      %p219 = scmp.ne.s32.totalorder %s211, %s213
      %p220 = scmp.eq.s32.totalorder %s30, 1
      %p221 = por %p219, %p220
      %p222 = scmp.ne.s32.totalorder %s213, %s214
      %p223 = scmp.eq.s32.totalorder %s30, 0
      %p224 = por %p222, %p223
      %p225 = scmp.ne.s32.totalorder %s213, %s214
      %p226 = scmp.eq.s32.totalorder %s31, 1
      %p227 = por %p225, %p226
      %p229 = scmp.ne.s32.totalorder %s214, %s228
      %p230 = scmp.eq.s32.totalorder %s31, 0
      %p231 = por %p229, %p230
      %s233 = sadd.s32 %s232, 1
      %p236 = scmp.eq.s32.totalorder %s25, 1
      %p237 = scmp.ne.s32.totalorder %s232, %s234
      %p238 = scmp.eq.s32.totalorder %s25, 0
      %p239 = por %p237, %p238
      %p240 = scmp.ne.s32.totalorder %s232, %s234
      %p241 = scmp.eq.s32.totalorder %s30, 1
      %p242 = por %p240, %p241
      %p243 = scmp.ne.s32.totalorder %s234, %s235
      %p244 = scmp.eq.s32.totalorder %s30, 0
      %p245 = por %p243, %p244
      %p246 = scmp.ne.s32.totalorder %s234, %s235
      %p247 = scmp.eq.s32.totalorder %s31, 1
      %p248 = por %p246, %p247
      %p250 = scmp.ne.s32.totalorder %s235, %s249
      %p251 = scmp.eq.s32.totalorder %s31, 0
      %p252 = por %p250, %p251
      %s254 = sadd.s32 %s253, 1
      %p257 = scmp.eq.s32.totalorder %s25, 1
      %p258 = scmp.ne.s32.totalorder %s253, %s255
      %p259 = scmp.eq.s32.totalorder %s25, 0
      %p260 = por %p258, %p259
      %p261 = scmp.ne.s32.totalorder %s253, %s255
      %p262 = scmp.eq.s32.totalorder %s30, 1
      %p263 = por %p261, %p262
      %p264 = scmp.ne.s32.totalorder %s255, %s256
      %p265 = scmp.eq.s32.totalorder %s30, 0
      %p266 = por %p264, %p265
      %p267 = scmp.ne.s32.totalorder %s255, %s256
      %p268 = scmp.eq.s32.totalorder %s31, 1
      %p269 = por %p267, %p268
      %p271 = scmp.ne.s32.totalorder %s256, %s270
      %p272 = scmp.eq.s32.totalorder %s31, 0
      %p273 = por %p271, %p272
      %s275 = sadd.s32 %s274, 1
      %p278 = scmp.eq.s32.totalorder %s25, 1
      %p279 = scmp.ne.s32.totalorder %s274, %s276
      %p280 = scmp.eq.s32.totalorder %s25, 0
      %p281 = por %p279, %p280
      %p282 = scmp.ne.s32.totalorder %s274, %s276
      %p283 = scmp.eq.s32.totalorder %s30, 1
      %p284 = por %p282, %p283
      %p285 = scmp.ne.s32.totalorder %s276, %s277
      %p286 = scmp.eq.s32.totalorder %s30, 0
      %p287 = por %p285, %p286
      %p288 = scmp.ne.s32.totalorder %s276, %s277
      %p289 = scmp.eq.s32.totalorder %s31, 1
      %p290 = por %p288, %p289
      %p292 = scmp.ne.s32.totalorder %s277, %s291
      %p293 = scmp.eq.s32.totalorder %s31, 0
      %p294 = por %p292, %p293
      %s296 = sadd.s32 %s295, 1
      %p299 = scmp.eq.s32.totalorder %s25, 1
      %p300 = scmp.ne.s32.totalorder %s295, %s297
      %p301 = scmp.eq.s32.totalorder %s25, 0
      %p302 = por %p300, %p301
      %p303 = scmp.ne.s32.totalorder %s295, %s297
      %p304 = scmp.eq.s32.totalorder %s30, 1
      %p305 = por %p303, %p304
      %p306 = scmp.ne.s32.totalorder %s297, %s298
      %p307 = scmp.eq.s32.totalorder %s30, 0
      %p308 = por %p306, %p307
      %p309 = scmp.ne.s32.totalorder %s297, %s298
      %p310 = scmp.eq.s32.totalorder %s31, 1
      %p311 = por %p309, %p310
      %p313 = scmp.ne.s32.totalorder %s298, %s312
      %p314 = scmp.eq.s32.totalorder %s31, 0
      %p315 = por %p313, %p314
      %s317 = sadd.s32 %s316, 1
      %p320 = scmp.eq.s32.totalorder %s25, 1
      %p321 = scmp.ne.s32.totalorder %s316, %s318
      %p322 = scmp.eq.s32.totalorder %s25, 0
      %p323 = por %p321, %p322
      %p324 = scmp.ne.s32.totalorder %s316, %s318
      %p325 = scmp.eq.s32.totalorder %s30, 1
      %p326 = por %p324, %p325
      %p327 = scmp.ne.s32.totalorder %s318, %s319
      %p328 = scmp.eq.s32.totalorder %s30, 0
      %p329 = por %p327, %p328
      %p330 = scmp.ne.s32.totalorder %s318, %s319
      %p331 = scmp.eq.s32.totalorder %s31, 1
      %p332 = por %p330, %p331
      %p334 = scmp.ne.s32.totalorder %s319, %s333
      %p335 = scmp.eq.s32.totalorder %s31, 0
      %p336 = por %p334, %p335
      %s338 = sadd.s32 %s337, 1
      %p341 = scmp.eq.s32.totalorder %s25, 1
      %p342 = scmp.ne.s32.totalorder %s337, %s339
      %p343 = scmp.eq.s32.totalorder %s25, 0
      %p344 = por %p342, %p343
      %p345 = scmp.ne.s32.totalorder %s337, %s339
      %p346 = scmp.eq.s32.totalorder %s30, 1
      %p347 = por %p345, %p346
      %p348 = scmp.ne.s32.totalorder %s339, %s340
      %p349 = scmp.eq.s32.totalorder %s30, 0
      %p350 = por %p348, %p349
      %p351 = scmp.ne.s32.totalorder %s339, %s340
      %p352 = scmp.eq.s32.totalorder %s31, 1
      %p353 = por %p351, %p352
      %p355 = scmp.ne.s32.totalorder %s340, %s354
      %p356 = scmp.eq.s32.totalorder %s31, 0
      %p357 = por %p355, %p356
      %s359 = sadd.s32 %s358, 1
      %p362 = scmp.eq.s32.totalorder %s25, 1
      %p363 = scmp.ne.s32.totalorder %s358, %s360
      %p364 = scmp.eq.s32.totalorder %s25, 0
      %p365 = por %p363, %p364
      %p366 = scmp.ne.s32.totalorder %s358, %s360
      %p367 = scmp.eq.s32.totalorder %s30, 1
      %p368 = por %p366, %p367
      %p369 = scmp.ne.s32.totalorder %s360, %s361
      %p370 = scmp.eq.s32.totalorder %s30, 0
      %p371 = por %p369, %p370
      %p372 = scmp.ne.s32.totalorder %s360, %s361
      %p373 = scmp.eq.s32.totalorder %s31, 1
      %p374 = por %p372, %p373
      %p376 = scmp.ne.s32.totalorder %s361, %s375
      %p377 = scmp.eq.s32.totalorder %s31, 0
      %p378 = por %p376, %p377
      %s379 = ssub.s32 %s25, %s32
      %p380 = scmp.eq.s32.totalorder %s379, 0
      %s382 = sadd.s32 %s381, 1
      %s383 = scalar_select %p380, %s381, %s382
      %p386 = pneg %p380
      %p387 = scmp.eq.s32.totalorder %s25, 1
      %p388 = por %p386, %p387
      %p389 = scmp.ne.s32.totalorder %s381, %s384
      %p390 = scmp.eq.s32.totalorder %s25, 0
      %p391 = por %p389, %p390
      %p392 = scmp.ne.s32.totalorder %s381, %s384
      %p393 = scmp.eq.s32.totalorder %s30, 1
      %p394 = por %p392, %p393
      %p395 = scmp.ne.s32.totalorder %s384, %s385
      %p396 = scmp.eq.s32.totalorder %s30, 0
      %p397 = por %p395, %p396
      %p398 = scmp.ne.s32.totalorder %s384, %s385
      %p399 = scmp.eq.s32.totalorder %s31, 1
      %p400 = por %p398, %p399
      %p402 = scmp.ne.s32.totalorder %s385, %s401
      %p403 = scmp.eq.s32.totalorder %s31, 0
      %p404 = por %p402, %p403
      %p405 = scmp.le.s32.totalorder 1, %s25
      %p406 = scmp.lt.s32.totalorder %s25, 3
      %p407 = pnand %p405, %p406
      %p408 = pneg %p407
      // Predicated region
      $region9: #{tpu_custom_call.1} parent=5 // pred_check
        _
      $region10: #{tpu_custom_call.1} parent=5 // pred_check_branch
        %410 = sbr.rel (%p407) target = $region12
      $region11: #{tpu_custom_call.1} parent=5 // pred_region
        %s411 = ssub.s32 %s25, 1
        // Predicated region
        $region13: #{tpu_custom_call.1} parent=11 // pred_check
          %p412 = pneg %p98
        $region14: #{tpu_custom_call.1} parent=11 // pred_check_branch
          %414 = sbr.rel (%p412) target = $region16
        $region15: #{tpu_custom_call.1} parent=11 // pred_region
          _
        $region16: #{tpu_custom_call.1} parent=11 // pred_fallthru
          _
        // Predicated region
        $region17: #{tpu_custom_call.1} parent=11 // pred_check
          %p415 = pneg %p119
        $region18: #{tpu_custom_call.1} parent=11 // pred_check_branch
          %417 = sbr.rel (%p415) target = $region20
        $region19: #{tpu_custom_call.1} parent=11 // pred_region
          _
        $region20: #{tpu_custom_call.1} parent=11 // pred_fallthru
          _
        // Predicated region
        $region21: #{tpu_custom_call.1} parent=11 // pred_check
          %p418 = pneg %p140
        $region22: #{tpu_custom_call.1} parent=11 // pred_check_branch
          %420 = sbr.rel (%p418) target = $region24
        $region23: #{tpu_custom_call.1} parent=11 // pred_region
          _
        $region24: #{tpu_custom_call.1} parent=11 // pred_fallthru
          _
        // Predicated region
        $region25: #{tpu_custom_call.1} parent=11 // pred_check
          %p421 = pneg %p161
        $region26: #{tpu_custom_call.1} parent=11 // pred_check_branch
          %423 = sbr.rel (%p421) target = $region28
        $region27: #{tpu_custom_call.1} parent=11 // pred_region
          _
        $region28: #{tpu_custom_call.1} parent=11 // pred_fallthru
          _
        // Predicated region
        $region29: #{tpu_custom_call.1} parent=11 // pred_check
          %p424 = pneg %p182
        $region30: #{tpu_custom_call.1} parent=11 // pred_check_branch
          %426 = sbr.rel (%p424) target = $region32
        $region31: #{tpu_custom_call.1} parent=11 // pred_region
          _
        $region32: #{tpu_custom_call.1} parent=11 // pred_fallthru
          _
        // Predicated region
        $region33: #{tpu_custom_call.1} parent=11 // pred_check
          %p427 = pneg %p203
        $region34: #{tpu_custom_call.1} parent=11 // pred_check_branch
          %429 = sbr.rel (%p427) target = $region36
        $region35: #{tpu_custom_call.1} parent=11 // pred_region
          _
        $region36: #{tpu_custom_call.1} parent=11 // pred_fallthru
          _
        // Predicated region
        $region37: #{tpu_custom_call.1} parent=11 // pred_check
          %p430 = pneg %p224
        $region38: #{tpu_custom_call.1} parent=11 // pred_check_branch
          %432 = sbr.rel (%p430) target = $region40
        $region39: #{tpu_custom_call.1} parent=11 // pred_region
          _
        $region40: #{tpu_custom_call.1} parent=11 // pred_fallthru
          _
        // Predicated region
        $region41: #{tpu_custom_call.1} parent=11 // pred_check
          %p433 = pneg %p245
        $region42: #{tpu_custom_call.1} parent=11 // pred_check_branch
          %435 = sbr.rel (%p433) target = $region44
        $region43: #{tpu_custom_call.1} parent=11 // pred_region
          _
        $region44: #{tpu_custom_call.1} parent=11 // pred_fallthru
          _
        // Predicated region
        $region45: #{tpu_custom_call.1} parent=11 // pred_check
          %p436 = pneg %p266
        $region46: #{tpu_custom_call.1} parent=11 // pred_check_branch
          %438 = sbr.rel (%p436) target = $region48
        $region47: #{tpu_custom_call.1} parent=11 // pred_region
          _
        $region48: #{tpu_custom_call.1} parent=11 // pred_fallthru
          _
        // Predicated region
        $region49: #{tpu_custom_call.1} parent=11 // pred_check
          %p439 = pneg %p287
        $region50: #{tpu_custom_call.1} parent=11 // pred_check_branch
          %441 = sbr.rel (%p439) target = $region52
        $region51: #{tpu_custom_call.1} parent=11 // pred_region
          _
        $region52: #{tpu_custom_call.1} parent=11 // pred_fallthru
          _
        // Predicated region
        $region53: #{tpu_custom_call.1} parent=11 // pred_check
          %p442 = pneg %p308
        $region54: #{tpu_custom_call.1} parent=11 // pred_check_branch
          %444 = sbr.rel (%p442) target = $region56
        $region55: #{tpu_custom_call.1} parent=11 // pred_region
          _
        $region56: #{tpu_custom_call.1} parent=11 // pred_fallthru
          _
        // Predicated region
        $region57: #{tpu_custom_call.1} parent=11 // pred_check
          %p445 = pneg %p329
        $region58: #{tpu_custom_call.1} parent=11 // pred_check_branch
          %447 = sbr.rel (%p445) target = $region60
        $region59: #{tpu_custom_call.1} parent=11 // pred_region
          _
        $region60: #{tpu_custom_call.1} parent=11 // pred_fallthru
          _
        // Predicated region
        $region61: #{tpu_custom_call.1} parent=11 // pred_check
          %p448 = pneg %p350
        $region62: #{tpu_custom_call.1} parent=11 // pred_check_branch
          %450 = sbr.rel (%p448) target = $region64
        $region63: #{tpu_custom_call.1} parent=11 // pred_region
          _
        $region64: #{tpu_custom_call.1} parent=11 // pred_fallthru
          _
        // Predicated region
        $region65: #{tpu_custom_call.1} parent=11 // pred_check
          %p451 = pneg %p371
        $region66: #{tpu_custom_call.1} parent=11 // pred_check_branch
          %453 = sbr.rel (%p451) target = $region68
        $region67: #{tpu_custom_call.1} parent=11 // pred_region
          _
        $region68: #{tpu_custom_call.1} parent=11 // pred_fallthru
          _
      $region12: #{tpu_custom_call.1} parent=5 // pred_fallthru
        _
      %p454 = scmp.lt.s32.totalorder %s25, 2
      // Predicated region
      $region69: #{tpu_custom_call.1} parent=5 // pred_check
        %p455 = pneg %p454
      $region70: #{tpu_custom_call.1} parent=5 // pred_check_branch
        %457 = sbr.rel (%p455) target = $region72
      $region71: #{tpu_custom_call.1} parent=5 // pred_region
        // Predicated region
        $region73: #{tpu_custom_call.1} parent=71 // pred_check
          %p458 = pneg %p45
        $region74: #{tpu_custom_call.1} parent=71 // pred_check_branch
          %460 = sbr.rel (%p458) target = $region76
        $region75: #{tpu_custom_call.1} parent=71 // pred_region
          %s461 = smul.u32 2, %s25
          %p462 = scmp.lt.s32.totalorder %s461, 3
          %s463 = scalar_select %p462, %s461, 3
          %s464 = smul.addr %s463, 8
          %s465 = scalar_lea.vmem %s0, %s464
          %s466 = smul.u32 2, %s25
        $region76: #{tpu_custom_call.1} parent=71 // pred_fallthru
          _
        // Predicated region
        $region77: #{tpu_custom_call.1} parent=71 // pred_check
          %p467 = pneg %p71
        $region78: #{tpu_custom_call.1} parent=71 // pred_check_branch
          %469 = sbr.rel (%p467) target = $region80
        $region79: #{tpu_custom_call.1} parent=71 // pred_region
          %s470 = smul.u32 2, %s25
          %p471 = scmp.lt.s32.totalorder %s470, 3
          %s472 = scalar_select %p471, %s470, 3
          %s473 = scalar_lea.vmem %s1, %s472
          %s474 = smul.u32 2, %s25
        $region80: #{tpu_custom_call.1} parent=71 // pred_fallthru
          _
      $region72: #{tpu_custom_call.1} parent=5 // pred_fallthru
        _
      %p475 = scmp.le.s32.totalorder 1, %s25
      %p476 = scmp.lt.s32.totalorder %s25, 3
      %p477 = pnand %p475, %p476
      %p478 = pneg %p477
      // Predicated region
      $region81: #{tpu_custom_call.1} parent=5 // pred_check
        _
      $region82: #{tpu_custom_call.1} parent=5 // pred_check_branch
        %480 = sbr.rel (%p477) target = $region84
      $region83: #{tpu_custom_call.1} parent=5 // pred_region
        %s481 = ssub.s32 %s25, 1
        %s482 = smul.u32 2, %s30
        %p483 = scmp.lt.s32.totalorder %s482, 3
        %s484 = scalar_select %p483, %s482, 3
        %s485 = smul.addr %s484, 8
        %s486 = scalar_lea.vmem %s0, %s485
        %p487 = pneg %p51
        %p488 = pneg %p48
        %s489 = smul.u32 2, %s30
        %p490 = scmp.lt.s32.totalorder %s489, 3
        %s491 = scalar_select %p490, %s489, 3
        %s492 = scalar_lea.vmem %s1, %s491
        %p493 = pneg %p77
        %p494 = pneg %p74
        %p495 = pneg %p98
        %p496 = pneg %p95
        %p497 = pneg %p119
        %p498 = pneg %p116
        %p499 = pneg %p140
        %p500 = pneg %p137
        %p501 = pneg %p161
        %p502 = pneg %p158
        %p503 = pneg %p182
        %p504 = pneg %p179
        %p505 = pneg %p203
        %p506 = pneg %p200
        %p507 = pneg %p224
        %p508 = pneg %p221
        %p509 = pneg %p245
        %p510 = pneg %p242
        %p511 = pneg %p266
        %p512 = pneg %p263
        %p513 = pneg %p287
        %p514 = pneg %p284
        %p515 = pneg %p308
        %p516 = pneg %p305
        %p517 = pneg %p329
        %p518 = pneg %p326
        %p519 = pneg %p350
        %p520 = pneg %p347
        %p521 = pneg %p371
        %p522 = pneg %p368
        %p523 = pneg %p397
        %p524 = pneg %p394
        %s525 = sand.u32 %s384, 1
        %s526 = scalar_lea.sflag [#allocation3], %s525
        %s527 = sand.u32 %s384, 1
        %s528 = smul.addr %s527, 16
        %s529 = scalar_lea.vmem [#allocation2], %s528
        %s530 = smul.u32 2, %s30
        %p531 = scmp.lt.s32.totalorder %s530, 3
        %s532 = scalar_select %p531, %s530, 3
        %s533 = smul.addr %s532, 8
        %s534 = scalar_lea.vmem %s0, %s533
        %s535 = smul.u32 2, %s30
        %s536 = smul.u32 2, %s30
        %p537 = scmp.lt.s32.totalorder %s536, 3
        %s538 = scalar_select %p537, %s536, 3
        %s539 = scalar_lea.vmem %s1, %s538
        %s540 = smul.u32 2, %s30
        %s541 = smul.u32 2, %s30
        %v543 = vld [vmem:[%s534] sm:$0xff]
        %v544 = vld [vmem:[%s534 + $0x8] sm:$0xff]
        %v545 = vpack.c.bf16 %v544, %v543
        %v546 = vld [vmem:[%s2] sm:$0xf]
        %v547 = vld [vmem:[%s2 + $0x4] sm:$0xf]
        %v548 = vld [vmem:[%s3] sm:$0x1]
        %v550 = vlaneseq
        %v551 = vshrl.u32 %v550, 7
        %v552 = vsub.s32 0, %v551
        %v553 = vrot.slane %v548, %v552
        %v557 = vunpack.c.l.b16 %v546
        %v558 = vunpack.c.l.b16 %v547
        %v559 = vpack.c.b16 %v558, %v557
        %vm561 = vcmask 130048
        %v563 = vsel %vm561, %v545, 0
        %565 = vmatprep.subr.bf16.mxu0 0
        %566 = vmatpush1.bf16.msra.mxu0 %v559
        %567 = vmatprep.subr.bf16.mxu0 0
        %568 = vmatpush1.bf16.msra.mxu0 0
        %569 = vmatprep.subr.bf16.mxu0 0
        %570 = vmatpush1.bf16.msra.mxu0 0
        %571 = vmatprep.subr.bf16.mxu0 0
        %572 = vmatpush1.bf16.msra.mxu0 0
        %573 = vmatprep.subr.bf16.mxu0 0
        %574 = vmatpush1.bf16.msra.mxu0 0
        %575 = vmatprep.subr.bf16.mxu0 0
        %576 = vmatpush1.bf16.msra.mxu0 0
        %577 = vmatprep.subr.bf16.mxu0 0
        %578 = vmatpush1.bf16.msra.mxu0 0
        %579 = vmatprep.subr.bf16.mxu0 0
        %580 = vmatpush1.bf16.msra.mxu0 0
        %581 = vmatprep.subr.bf16.mxu0 0
        %582 = vmatpush1.bf16.msra.mxu0 0
        %583 = vmatprep.subr.bf16.mxu0 0
        %584 = vmatpush1.bf16.msra.mxu0 0
        %585 = vmatprep.subr.bf16.mxu0 0
        %586 = vmatpush1.bf16.msra.mxu0 0
        %587 = vmatprep.subr.bf16.mxu0 0
        %588 = vmatpush1.bf16.msra.mxu0 0
        %589 = vmatprep.subr.bf16.mxu0 0
        %590 = vmatpush1.bf16.msra.mxu0 0
        %591 = vmatprep.subr.bf16.mxu0 0
        %592 = vmatpush1.bf16.msra.mxu0 0
        %593 = vmatprep.subr.bf16.mxu0 0
        %594 = vmatpush1.bf16.msra.mxu0 0
        %595 = vmatprep.subr.bf16.mxu0 0
        %596 = vmatpush1.bf16.msra.mxu0 0
        %597 = vmatprep.mubr.bf16.mxu0 0
        %598 = vmatmul.mubr.bf16.gmra.mrb[0].mxu0 %v563
        %v599 = vpop.f32.mrb[0].mxu0
        %v600 = vadd.f32 %v553, %v599
        %v601 = vpop.f32.mrb[0].mxu0
        %v602 = vpop.f32.mrb[0].mxu0
        %v603 = vadd.f32 %v553, %v602
        %v604 = vpop.f32.mrb[0].mxu0
        %605 = vdwg.mxu0
        %v606 = vpack.c.bf16 %v603, %v600
        %v607 = vlaneseq
        %v608 = vshrl.u32 %v607, 7
        %v609 = vlaneseq
        %v610 = vand.u32 %v609, 127
        %vm611 = vcmp.gt.s32.totalorder %v610, %v608
        %v612 = vsel %vm611, -1e+09, 0.0
        %v613 = vld [vmem:[%s539] sm:$0x1]
        %v614 = vld [vmem:[%s539 + $0x1] sm:$0x1]
        %v617 = vlaneseq
        %v618 = vshrl.u32 %v617, 7
        %v619 = vsub.s32 0, %v618
        %v620 = vrot.slane %v613, %v619
        %v621 = vlaneseq
        %v622 = vshrl.u32 %v621, 7
        %v623 = vsub.s32 0, %v622
        %v624 = vrot.slane %v614, %v623
        %v627 = vadd.f32 %v612, %v620
        %v628 = vadd.f32 %v612, %v624
        %v629 = vld [vmem:[%s4] sm:$0xf]
        %v630 = vld [vmem:[%s4 + $0x4] sm:$0xf]
        %v631 = vld [vmem:[%s4 + $0x8] sm:$0xf]
        %v632 = vld [vmem:[%s4 + $0xc] sm:$0xf]
        %v633 = vld [vmem:[%s5] sm:$0x1]
        %v635 = vlaneseq
        %v636 = vshrl.u32 %v635, 7
        %v637 = vsub.s32 0, %v636
        %v638 = vrot.slane %v633, %v637
        %v644 = vunpack.c.l.b16 %v629
        %v645 = vunpack.c.l.b16 %v630
        %v646 = vunpack.c.l.b16 %v631
        %v647 = vunpack.c.l.b16 %v632
        %v648 = vpack.c.b16 %v645, %v644
        %v649 = vpack.c.b16 %v647, %v646
        %vm652 = vcmask 261120
        %v654 = vsel %vm652, %v606, 0
        %656 = vmatprep.subr.bf16.mxu0 0
        %657 = vmatpush1.bf16.msra.mxu0 %v648
        %658 = vmatprep.subr.bf16.mxu0 0
        %659 = vmatpush1.bf16.msra.mxu0 %v649
        %660 = vmatprep.subr.bf16.mxu0 0
        %661 = vmatpush1.bf16.msra.mxu0 0
        %662 = vmatprep.subr.bf16.mxu0 0
        %663 = vmatpush1.bf16.msra.mxu0 0
        %664 = vmatprep.subr.bf16.mxu0 0
        %665 = vmatpush1.bf16.msra.mxu0 0
        %666 = vmatprep.subr.bf16.mxu0 0
        %667 = vmatpush1.bf16.msra.mxu0 0
        %668 = vmatprep.subr.bf16.mxu0 0
        %669 = vmatpush1.bf16.msra.mxu0 0
        %670 = vmatprep.subr.bf16.mxu0 0
        %671 = vmatpush1.bf16.msra.mxu0 0
        %672 = vmatprep.subr.bf16.mxu0 0
        %673 = vmatpush1.bf16.msra.mxu0 0
        %674 = vmatprep.subr.bf16.mxu0 0
        %675 = vmatpush1.bf16.msra.mxu0 0
        %676 = vmatprep.subr.bf16.mxu0 0
        %677 = vmatpush1.bf16.msra.mxu0 0
        %678 = vmatprep.subr.bf16.mxu0 0
        %679 = vmatpush1.bf16.msra.mxu0 0
        %680 = vmatprep.subr.bf16.mxu0 0
        %681 = vmatpush1.bf16.msra.mxu0 0
        %682 = vmatprep.subr.bf16.mxu0 0
        %683 = vmatpush1.bf16.msra.mxu0 0
        %684 = vmatprep.subr.bf16.mxu0 0
        %685 = vmatpush1.bf16.msra.mxu0 0
        %686 = vmatprep.subr.bf16.mxu0 0
        %687 = vmatpush1.bf16.msra.mxu0 0
        %688 = vmatprep.mubr.bf16.mxu0 0
        %689 = vmatmul.mubr.bf16.gmra.mrb[0].mxu0 %v654
        %v690 = vpop.f32.mrb[0].mxu0
        %v691 = vadd.f32 %v638, %v690
        %v692 = vpop.f32.mrb[0].mxu0
        %v693 = vpop.f32.mrb[0].mxu0
        %v694 = vadd.f32 %v638, %v693
        %v695 = vpop.f32.mrb[0].mxu0
        %696 = vdwg.mxu0
        %s697 = scalar_lea.vmem %s4, 64
        %v698 = vld [vmem:[%s697] sm:$0xf]
        %v699 = vld [vmem:[%s697 + $0x4] sm:$0xf]
        %v700 = vld [vmem:[%s697 + $0x8] sm:$0xf]
        %v701 = vld [vmem:[%s697 + $0xc] sm:$0xf]
        %s702 = scalar_lea.vmem %s5, 4
        %v703 = vld [vmem:[%s702] sm:$0x1]
        %v705 = vlaneseq
        %v706 = vshrl.u32 %v705, 7
        %v707 = vsub.s32 0, %v706
        %v708 = vrot.slane %v703, %v707
        %v714 = vunpack.c.l.b16 %v698
        %v715 = vunpack.c.l.b16 %v699
        %v716 = vunpack.c.l.b16 %v700
        %v717 = vunpack.c.l.b16 %v701
        %v718 = vpack.c.b16 %v715, %v714
        %v719 = vpack.c.b16 %v717, %v716
        %722 = vmatprep.subr.bf16.mxu0 0
        %723 = vmatpush1.bf16.msra.mxu0 %v718
        %724 = vmatprep.subr.bf16.mxu0 0
        %725 = vmatpush1.bf16.msra.mxu0 %v719
        %726 = vmatprep.subr.bf16.mxu0 0
        %727 = vmatpush1.bf16.msra.mxu0 0
        %728 = vmatprep.subr.bf16.mxu0 0
        %729 = vmatpush1.bf16.msra.mxu0 0
        %730 = vmatprep.subr.bf16.mxu0 0
        %731 = vmatpush1.bf16.msra.mxu0 0
        %732 = vmatprep.subr.bf16.mxu0 0
        %733 = vmatpush1.bf16.msra.mxu0 0
        %734 = vmatprep.subr.bf16.mxu0 0
        %735 = vmatpush1.bf16.msra.mxu0 0
        %736 = vmatprep.subr.bf16.mxu0 0
        %737 = vmatpush1.bf16.msra.mxu0 0
        %738 = vmatprep.subr.bf16.mxu0 0
        %739 = vmatpush1.bf16.msra.mxu0 0
        %740 = vmatprep.subr.bf16.mxu0 0
        %741 = vmatpush1.bf16.msra.mxu0 0
        %742 = vmatprep.subr.bf16.mxu0 0
        %743 = vmatpush1.bf16.msra.mxu0 0
        %744 = vmatprep.subr.bf16.mxu0 0
        %745 = vmatpush1.bf16.msra.mxu0 0
        %746 = vmatprep.subr.bf16.mxu0 0
        %747 = vmatpush1.bf16.msra.mxu0 0
        %748 = vmatprep.subr.bf16.mxu0 0
        %749 = vmatpush1.bf16.msra.mxu0 0
        %750 = vmatprep.subr.bf16.mxu0 0
        %751 = vmatpush1.bf16.msra.mxu0 0
        %752 = vmatprep.subr.bf16.mxu0 0
        %753 = vmatpush1.bf16.msra.mxu0 0
        %754 = vmatprep.mubr.bf16.mxu0 0
        %755 = vmatmul.mubr.bf16.gmra.mrb[0].mxu0 %v654
        %v756 = vpop.f32.mrb[0].mxu0
        %v757 = vadd.f32 %v708, %v756
        %v758 = vpop.f32.mrb[0].mxu0
        %v759 = vpop.f32.mrb[0].mxu0
        %v760 = vadd.f32 %v708, %v759
        %v761 = vpop.f32.mrb[0].mxu0
        %762 = vdwg.mxu0
        %s763 = scalar_lea.vmem %s4, 128
        %v764 = vld [vmem:[%s763] sm:$0xf]
        %v765 = vld [vmem:[%s763 + $0x4] sm:$0xf]
        %v766 = vld [vmem:[%s763 + $0x8] sm:$0xf]
        %v767 = vld [vmem:[%s763 + $0xc] sm:$0xf]
        %s768 = scalar_lea.vmem %s5, 8
        %v769 = vld [vmem:[%s768] sm:$0x1]
        %v771 = vlaneseq
        %v772 = vshrl.u32 %v771, 7
        %v773 = vsub.s32 0, %v772
        %v774 = vrot.slane %v769, %v773
        %v780 = vunpack.c.l.b16 %v764
        %v781 = vunpack.c.l.b16 %v765
        %v782 = vunpack.c.l.b16 %v766
        %v783 = vunpack.c.l.b16 %v767
        %v784 = vpack.c.b16 %v781, %v780
        %v785 = vpack.c.b16 %v783, %v782
        %788 = vmatprep.subr.bf16.mxu0 0
        %789 = vmatpush1.bf16.msra.mxu0 %v784
        %790 = vmatprep.subr.bf16.mxu0 0
        %791 = vmatpush1.bf16.msra.mxu0 %v785
        %792 = vmatprep.subr.bf16.mxu0 0
        %793 = vmatpush1.bf16.msra.mxu0 0
        %794 = vmatprep.subr.bf16.mxu0 0
        %795 = vmatpush1.bf16.msra.mxu0 0
        %796 = vmatprep.subr.bf16.mxu0 0
        %797 = vmatpush1.bf16.msra.mxu0 0
        %798 = vmatprep.subr.bf16.mxu0 0
        %799 = vmatpush1.bf16.msra.mxu0 0
        %800 = vmatprep.subr.bf16.mxu0 0
        %801 = vmatpush1.bf16.msra.mxu0 0
        %802 = vmatprep.subr.bf16.mxu0 0
        %803 = vmatpush1.bf16.msra.mxu0 0
        %804 = vmatprep.subr.bf16.mxu0 0
        %805 = vmatpush1.bf16.msra.mxu0 0
        %806 = vmatprep.subr.bf16.mxu0 0
        %807 = vmatpush1.bf16.msra.mxu0 0
        %808 = vmatprep.subr.bf16.mxu0 0
        %809 = vmatpush1.bf16.msra.mxu0 0
        %810 = vmatprep.subr.bf16.mxu0 0
        %811 = vmatpush1.bf16.msra.mxu0 0
        %812 = vmatprep.subr.bf16.mxu0 0
        %813 = vmatpush1.bf16.msra.mxu0 0
        %814 = vmatprep.subr.bf16.mxu0 0
        %815 = vmatpush1.bf16.msra.mxu0 0
        %816 = vmatprep.subr.bf16.mxu0 0
        %817 = vmatpush1.bf16.msra.mxu0 0
        %818 = vmatprep.subr.bf16.mxu0 0
        %819 = vmatpush1.bf16.msra.mxu0 0
        %820 = vmatprep.mubr.bf16.mxu0 0
        %821 = vmatmul.mubr.bf16.gmra.mrb[0].mxu0 %v654
        %v822 = vpop.f32.mrb[0].mxu0
        %v823 = vadd.f32 %v774, %v822
        %v824 = vpop.f32.mrb[0].mxu0
        %v825 = vpop.f32.mrb[0].mxu0
        %v826 = vadd.f32 %v774, %v825
        %v827 = vpop.f32.mrb[0].mxu0
        %828 = vdwg.mxu0
        %v829 = vpack.c.bf16 %v691, %v691
        %v830 = vpack.c.bf16 %v694, %v694
        %v831 = vpack.c.bf16 %v757, %v757
        %v832 = vpack.c.bf16 %v760, %v760
        %vm833 = vcmask 64512
        %v835 = vsel %vm833, %v829, 0
        %v838 = vsel %vm833, %v831, 0
        %840 = vmatprep.subr.bf16.mxu0 0
        %841 = vmatpush1.bf16.xpose.msra.mxu0 %v838
        %842 = vmatprep.subr.bf16.mxu0 0
        %843 = vmatpush1.bf16.xpose.msra.mxu0 0
        %844 = vmatprep.subr.bf16.mxu0 0
        %845 = vmatpush1.bf16.xpose.msra.mxu0 0
        %846 = vmatprep.subr.bf16.mxu0 0
        %847 = vmatpush1.bf16.xpose.msra.mxu0 0
        %848 = vmatprep.subr.bf16.mxu0 0
        %849 = vmatpush1.bf16.xpose.msra.mxu0 0
        %850 = vmatprep.subr.bf16.mxu0 0
        %851 = vmatpush1.bf16.xpose.msra.mxu0 0
        %852 = vmatprep.subr.bf16.mxu0 0
        %853 = vmatpush1.bf16.xpose.msra.mxu0 0
        %854 = vmatprep.subr.bf16.mxu0 0
        %855 = vmatpush1.bf16.xpose.msra.mxu0 0
        %856 = vmatprep.subr.bf16.mxu0 0
        %857 = vmatpush1.bf16.xpose.msra.mxu0 0
        %858 = vmatprep.subr.bf16.mxu0 0
        %859 = vmatpush1.bf16.xpose.msra.mxu0 0
        %860 = vmatprep.subr.bf16.mxu0 0
        %861 = vmatpush1.bf16.xpose.msra.mxu0 0
        %862 = vmatprep.subr.bf16.mxu0 0
        %863 = vmatpush1.bf16.xpose.msra.mxu0 0
        %864 = vmatprep.subr.bf16.mxu0 0
        %865 = vmatpush1.bf16.xpose.msra.mxu0 0
        %866 = vmatprep.subr.bf16.mxu0 0
        %867 = vmatpush1.bf16.xpose.msra.mxu0 0
        %868 = vmatprep.subr.bf16.mxu0 0
        %869 = vmatpush1.bf16.xpose.msra.mxu0 0
        %870 = vmatprep.subr.bf16.mxu0 0
        %871 = vmatpush1.bf16.xpose.msra.mxu0 0
        %872 = vmatprep.mubr.bf16.mxu0 0
        %873 = vmatmul.mubr.bf16.gmra.mrb[0].mxu0 %v835
        %v874 = vpop.f32.mrb[0].mxu0
        %v875 = vadd.f32 %v627, %v874
        %v876 = vpop.f32.mrb[0].mxu0
        %v877 = vpop.f32.mrb[0].mxu0
        %v878 = vpop.f32.mrb[0].mxu0
        %879 = vdwg.mxu0
        %v881 = vsel %vm833, %v830, 0
        %v884 = vsel %vm833, %v832, 0
        %886 = vmatprep.subr.bf16.mxu0 0
        %887 = vmatpush1.bf16.xpose.msra.mxu0 %v884
        %888 = vmatprep.subr.bf16.mxu0 0
        %889 = vmatpush1.bf16.xpose.msra.mxu0 0
        %890 = vmatprep.subr.bf16.mxu0 0
        %891 = vmatpush1.bf16.xpose.msra.mxu0 0
        %892 = vmatprep.subr.bf16.mxu0 0
        %893 = vmatpush1.bf16.xpose.msra.mxu0 0
        %894 = vmatprep.subr.bf16.mxu0 0
        %895 = vmatpush1.bf16.xpose.msra.mxu0 0
        %896 = vmatprep.subr.bf16.mxu0 0
        %897 = vmatpush1.bf16.xpose.msra.mxu0 0
        %898 = vmatprep.subr.bf16.mxu0 0
        %899 = vmatpush1.bf16.xpose.msra.mxu0 0
        %900 = vmatprep.subr.bf16.mxu0 0
        %901 = vmatpush1.bf16.xpose.msra.mxu0 0
        %902 = vmatprep.subr.bf16.mxu0 0
        %903 = vmatpush1.bf16.xpose.msra.mxu0 0
        %904 = vmatprep.subr.bf16.mxu0 0
        %905 = vmatpush1.bf16.xpose.msra.mxu0 0
        %906 = vmatprep.subr.bf16.mxu0 0
        %907 = vmatpush1.bf16.xpose.msra.mxu0 0
        %908 = vmatprep.subr.bf16.mxu0 0
        %909 = vmatpush1.bf16.xpose.msra.mxu0 0
        %910 = vmatprep.subr.bf16.mxu0 0
        %911 = vmatpush1.bf16.xpose.msra.mxu0 0
        %912 = vmatprep.subr.bf16.mxu0 0
        %913 = vmatpush1.bf16.xpose.msra.mxu0 0
        %914 = vmatprep.subr.bf16.mxu0 0
        %915 = vmatpush1.bf16.xpose.msra.mxu0 0
        %916 = vmatprep.subr.bf16.mxu0 0
        %917 = vmatpush1.bf16.xpose.msra.mxu0 0
        %918 = vmatprep.mubr.bf16.mxu0 0
        %919 = vmatmul.mubr.bf16.gmra.mrb[0].mxu0 %v881
        %v920 = vpop.f32.mrb[0].mxu0
        %v921 = vadd.f32 %v628, %v920
        %v922 = vpop.f32.mrb[0].mxu0
        %v923 = vpop.f32.mrb[0].mxu0
        %v924 = vpop.f32.mrb[0].mxu0
        %925 = vdwg.mxu0
        %v926 = vsel %vm833, %v875, -inf
        %927 = vmax.xlane.f32.xlu0 %v926
        %v928 = vpop.xlane.xlu0 %927
        %v929 = vsel %vm833, %v921, -inf
        %930 = vmax.xlane.f32.xlu0 %v929
        %v931 = vpop.xlane.xlu0 %930
        %v932 = vsub.f32 %v875, %v928
        %v933 = vsub.f32 %v921, %v931
        %v934 = vmul.f32 %v932, 1.442695
        %v935 = vpow.pop %v934
        %v936 = vmul.f32 %v933, 1.442695
        %v937 = vpow.pop %v936
        %v938 = vsel %vm833, %v935, 0.0
        %939 = vadd.xlane.f32.xlu0 %v938
        %v940 = vpop.xlane.xlu0 %939
        %v941 = vsel %vm833, %v937, 0.0
        %942 = vadd.xlane.f32.xlu0 %v941
        %v943 = vpop.xlane.xlu0 %942
        %v944 = vrcp.pop %v940
        %v945 = vrcp.pop %v943
        %v946 = vmul.f32 %v935, %v944
        %v947 = vmul.f32 %v937, %v945
        %v948 = vpack.c.bf16 %v946, %v946
        %v949 = vpack.c.bf16 %v947, %v947
        %v950 = vpack.c.bf16 %v823, %v823
        %v951 = vpack.c.bf16 %v826, %v826
        %v953 = vsel %vm833, %v948, 0
        %vm955 = vcmask 1043456
        %v957 = vsel %vm955, %v950, 0
        %959 = vmatprep.subr.bf16.mxu0 0
        %960 = vmatpush1.bf16.msra.mxu0 %v957
        %961 = vmatprep.subr.bf16.mxu0 0
        %962 = vmatpush1.bf16.msra.mxu0 0
        %963 = vmatprep.subr.bf16.mxu0 0
        %964 = vmatpush1.bf16.msra.mxu0 0
        %965 = vmatprep.subr.bf16.mxu0 0
        %966 = vmatpush1.bf16.msra.mxu0 0
        %967 = vmatprep.subr.bf16.mxu0 0
        %968 = vmatpush1.bf16.msra.mxu0 0
        %969 = vmatprep.subr.bf16.mxu0 0
        %970 = vmatpush1.bf16.msra.mxu0 0
        %971 = vmatprep.subr.bf16.mxu0 0
        %972 = vmatpush1.bf16.msra.mxu0 0
        %973 = vmatprep.subr.bf16.mxu0 0
        %974 = vmatpush1.bf16.msra.mxu0 0
        %975 = vmatprep.subr.bf16.mxu0 0
        %976 = vmatpush1.bf16.msra.mxu0 0
        %977 = vmatprep.subr.bf16.mxu0 0
        %978 = vmatpush1.bf16.msra.mxu0 0
        %979 = vmatprep.subr.bf16.mxu0 0
        %980 = vmatpush1.bf16.msra.mxu0 0
        %981 = vmatprep.subr.bf16.mxu0 0
        %982 = vmatpush1.bf16.msra.mxu0 0
        %983 = vmatprep.subr.bf16.mxu0 0
        %984 = vmatpush1.bf16.msra.mxu0 0
        %985 = vmatprep.subr.bf16.mxu0 0
        %986 = vmatpush1.bf16.msra.mxu0 0
        %987 = vmatprep.subr.bf16.mxu0 0
        %988 = vmatpush1.bf16.msra.mxu0 0
        %989 = vmatprep.subr.bf16.mxu0 0
        %990 = vmatpush1.bf16.msra.mxu0 0
        %991 = vmatprep.mubr.bf16.mxu0 0
        %992 = vmatmul.mubr.bf16.gmra.mrb[0].mxu0 %v953
        %v993 = vpop.f32.mrb[0].mxu0
        %v994 = vadd.f32 0.0, %v993
        %v995 = vpop.f32.mrb[0].mxu0
        %v996 = vpop.f32.mrb[0].mxu0
        %v997 = vpop.f32.mrb[0].mxu0
        %998 = vdwg.mxu0
        %v1000 = vsel %vm833, %v949, 0
        %v1003 = vsel %vm955, %v951, 0
        %1005 = vmatprep.subr.bf16.mxu0 0
        %1006 = vmatpush1.bf16.msra.mxu0 %v1003
        %1007 = vmatprep.subr.bf16.mxu0 0
        %1008 = vmatpush1.bf16.msra.mxu0 0
        %1009 = vmatprep.subr.bf16.mxu0 0
        %1010 = vmatpush1.bf16.msra.mxu0 0
        %1011 = vmatprep.subr.bf16.mxu0 0
        %1012 = vmatpush1.bf16.msra.mxu0 0
        %1013 = vmatprep.subr.bf16.mxu0 0
        %1014 = vmatpush1.bf16.msra.mxu0 0
        %1015 = vmatprep.subr.bf16.mxu0 0
        %1016 = vmatpush1.bf16.msra.mxu0 0
        %1017 = vmatprep.subr.bf16.mxu0 0
        %1018 = vmatpush1.bf16.msra.mxu0 0
        %1019 = vmatprep.subr.bf16.mxu0 0
        %1020 = vmatpush1.bf16.msra.mxu0 0
        %1021 = vmatprep.subr.bf16.mxu0 0
        %1022 = vmatpush1.bf16.msra.mxu0 0
        %1023 = vmatprep.subr.bf16.mxu0 0
        %1024 = vmatpush1.bf16.msra.mxu0 0
        %1025 = vmatprep.subr.bf16.mxu0 0
        %1026 = vmatpush1.bf16.msra.mxu0 0
        %1027 = vmatprep.subr.bf16.mxu0 0
        %1028 = vmatpush1.bf16.msra.mxu0 0
        %1029 = vmatprep.subr.bf16.mxu0 0
        %1030 = vmatpush1.bf16.msra.mxu0 0
        %1031 = vmatprep.subr.bf16.mxu0 0
        %1032 = vmatpush1.bf16.msra.mxu0 0
        %1033 = vmatprep.subr.bf16.mxu0 0
        %1034 = vmatpush1.bf16.msra.mxu0 0
        %1035 = vmatprep.subr.bf16.mxu0 0
        %1036 = vmatpush1.bf16.msra.mxu0 0
        %1037 = vmatprep.mubr.bf16.mxu0 0
        %1038 = vmatmul.mubr.bf16.gmra.mrb[0].mxu0 %v1000
        %v1039 = vpop.f32.mrb[0].mxu0
        %v1040 = vadd.f32 0.0, %v1039
        %v1041 = vpop.f32.mrb[0].mxu0
        %v1042 = vpop.f32.mrb[0].mxu0
        %v1043 = vpop.f32.mrb[0].mxu0
        %1044 = vdwg.mxu0
        %s1045 = scalar_lea.vmem %s4, 16
        %v1046 = vld [vmem:[%s1045] sm:$0xf]
        %v1047 = vld [vmem:[%s1045 + $0x4] sm:$0xf]
        %v1048 = vld [vmem:[%s1045 + $0x8] sm:$0xf]
        %v1049 = vld [vmem:[%s1045 + $0xc] sm:$0xf]
        %s1050 = scalar_lea.vmem %s5, 1
        %v1051 = vld [vmem:[%s1050] sm:$0x1]
        %v1053 = vlaneseq
        %v1054 = vshrl.u32 %v1053, 7
        %v1055 = vsub.s32 0, %v1054
        %v1056 = vrot.slane %v1051, %v1055
        %v1062 = vunpack.c.l.b16 %v1046
        %v1063 = vunpack.c.l.b16 %v1047
        %v1064 = vunpack.c.l.b16 %v1048
        %v1065 = vunpack.c.l.b16 %v1049
        %v1066 = vpack.c.b16 %v1063, %v1062
        %v1067 = vpack.c.b16 %v1065, %v1064
        %1070 = vmatprep.subr.bf16.mxu0 0
        %1071 = vmatpush1.bf16.msra.mxu0 %v1066
        %1072 = vmatprep.subr.bf16.mxu0 0
        %1073 = vmatpush1.bf16.msra.mxu0 %v1067
        %1074 = vmatprep.subr.bf16.mxu0 0
        %1075 = vmatpush1.bf16.msra.mxu0 0
        %1076 = vmatprep.subr.bf16.mxu0 0
        %1077 = vmatpush1.bf16.msra.mxu0 0
        %1078 = vmatprep.subr.bf16.mxu0 0
        %1079 = vmatpush1.bf16.msra.mxu0 0
        %1080 = vmatprep.subr.bf16.mxu0 0
        %1081 = vmatpush1.bf16.msra.mxu0 0
        %1082 = vmatprep.subr.bf16.mxu0 0
        %1083 = vmatpush1.bf16.msra.mxu0 0
        %1084 = vmatprep.subr.bf16.mxu0 0
        %1085 = vmatpush1.bf16.msra.mxu0 0
        %1086 = vmatprep.subr.bf16.mxu0 0
        %1087 = vmatpush1.bf16.msra.mxu0 0
        %1088 = vmatprep.subr.bf16.mxu0 0
        %1089 = vmatpush1.bf16.msra.mxu0 0
        %1090 = vmatprep.subr.bf16.mxu0 0
        %1091 = vmatpush1.bf16.msra.mxu0 0
        %1092 = vmatprep.subr.bf16.mxu0 0
        %1093 = vmatpush1.bf16.msra.mxu0 0
        %1094 = vmatprep.subr.bf16.mxu0 0
        %1095 = vmatpush1.bf16.msra.mxu0 0
        %1096 = vmatprep.subr.bf16.mxu0 0
        %1097 = vmatpush1.bf16.msra.mxu0 0
        %1098 = vmatprep.subr.bf16.mxu0 0
        %1099 = vmatpush1.bf16.msra.mxu0 0
        %1100 = vmatprep.subr.bf16.mxu0 0
        %1101 = vmatpush1.bf16.msra.mxu0 0
        %1102 = vmatprep.mubr.bf16.mxu0 0
        %1103 = vmatmul.mubr.bf16.gmra.mrb[0].mxu0 %v654
        %v1104 = vpop.f32.mrb[0].mxu0
        %v1105 = vadd.f32 %v1056, %v1104
        %v1106 = vpop.f32.mrb[0].mxu0
        %v1107 = vpop.f32.mrb[0].mxu0
        %v1108 = vadd.f32 %v1056, %v1107
        %v1109 = vpop.f32.mrb[0].mxu0
        %1110 = vdwg.mxu0
        %s1111 = scalar_lea.vmem %s4, 80
        %v1112 = vld [vmem:[%s1111] sm:$0xf]
        %v1113 = vld [vmem:[%s1111 + $0x4] sm:$0xf]
        %v1114 = vld [vmem:[%s1111 + $0x8] sm:$0xf]
        %v1115 = vld [vmem:[%s1111 + $0xc] sm:$0xf]
        %s1116 = scalar_lea.vmem %s5, 5
        %v1117 = vld [vmem:[%s1116] sm:$0x1]
        %v1119 = vlaneseq
        %v1120 = vshrl.u32 %v1119, 7
        %v1121 = vsub.s32 0, %v1120
        %v1122 = vrot.slane %v1117, %v1121
        %v1128 = vunpack.c.l.b16 %v1112
        %v1129 = vunpack.c.l.b16 %v1113
        %v1130 = vunpack.c.l.b16 %v1114
        %v1131 = vunpack.c.l.b16 %v1115
        %v1132 = vpack.c.b16 %v1129, %v1128
        %v1133 = vpack.c.b16 %v1131, %v1130
        %1136 = vmatprep.subr.bf16.mxu0 0
        %1137 = vmatpush1.bf16.msra.mxu0 %v1132
        %1138 = vmatprep.subr.bf16.mxu0 0
        %1139 = vmatpush1.bf16.msra.mxu0 %v1133
        %1140 = vmatprep.subr.bf16.mxu0 0
        %1141 = vmatpush1.bf16.msra.mxu0 0
        %1142 = vmatprep.subr.bf16.mxu0 0
        %1143 = vmatpush1.bf16.msra.mxu0 0
        %1144 = vmatprep.subr.bf16.mxu0 0
        %1145 = vmatpush1.bf16.msra.mxu0 0
        %1146 = vmatprep.subr.bf16.mxu0 0
        %1147 = vmatpush1.bf16.msra.mxu0 0
        %1148 = vmatprep.subr.bf16.mxu0 0
        %1149 = vmatpush1.bf16.msra.mxu0 0
        %1150 = vmatprep.subr.bf16.mxu0 0
        %1151 = vmatpush1.bf16.msra.mxu0 0
        %1152 = vmatprep.subr.bf16.mxu0 0
        %1153 = vmatpush1.bf16.msra.mxu0 0
        %1154 = vmatprep.subr.bf16.mxu0 0
        %1155 = vmatpush1.bf16.msra.mxu0 0
        %1156 = vmatprep.subr.bf16.mxu0 0
        %1157 = vmatpush1.bf16.msra.mxu0 0
        %1158 = vmatprep.subr.bf16.mxu0 0
        %1159 = vmatpush1.bf16.msra.mxu0 0
        %1160 = vmatprep.subr.bf16.mxu0 0
        %1161 = vmatpush1.bf16.msra.mxu0 0
        %1162 = vmatprep.subr.bf16.mxu0 0
        %1163 = vmatpush1.bf16.msra.mxu0 0
        %1164 = vmatprep.subr.bf16.mxu0 0
        %1165 = vmatpush1.bf16.msra.mxu0 0
        %1166 = vmatprep.subr.bf16.mxu0 0
        %1167 = vmatpush1.bf16.msra.mxu0 0
        %1168 = vmatprep.mubr.bf16.mxu0 0
        %1169 = vmatmul.mubr.bf16.gmra.mrb[0].mxu0 %v654
        %v1170 = vpop.f32.mrb[0].mxu0
        %v1171 = vadd.f32 %v1122, %v1170
        %v1172 = vpop.f32.mrb[0].mxu0
        %v1173 = vpop.f32.mrb[0].mxu0
        %v1174 = vadd.f32 %v1122, %v1173
        %v1175 = vpop.f32.mrb[0].mxu0
        %1176 = vdwg.mxu0
        %s1177 = scalar_lea.vmem %s4, 144
        %v1178 = vld [vmem:[%s1177] sm:$0xf]
        %v1179 = vld [vmem:[%s1177 + $0x4] sm:$0xf]
        %v1180 = vld [vmem:[%s1177 + $0x8] sm:$0xf]
        %v1181 = vld [vmem:[%s1177 + $0xc] sm:$0xf]
        %s1182 = scalar_lea.vmem %s5, 9
        %v1183 = vld [vmem:[%s1182] sm:$0x1]
        %v1185 = vlaneseq
        %v1186 = vshrl.u32 %v1185, 7
        %v1187 = vsub.s32 0, %v1186
        %v1188 = vrot.slane %v1183, %v1187
        %v1194 = vunpack.c.l.b16 %v1178
        %v1195 = vunpack.c.l.b16 %v1179
        %v1196 = vunpack.c.l.b16 %v1180
        %v1197 = vunpack.c.l.b16 %v1181
        %v1198 = vpack.c.b16 %v1195, %v1194
        %v1199 = vpack.c.b16 %v1197, %v1196
        %1202 = vmatprep.subr.bf16.mxu0 0
        %1203 = vmatpush1.bf16.msra.mxu0 %v1198
        %1204 = vmatprep.subr.bf16.mxu0 0
        %1205 = vmatpush1.bf16.msra.mxu0 %v1199
        %1206 = vmatprep.subr.bf16.mxu0 0
        %1207 = vmatpush1.bf16.msra.mxu0 0
        %1208 = vmatprep.subr.bf16.mxu0 0
        %1209 = vmatpush1.bf16.msra.mxu0 0
        %1210 = vmatprep.subr.bf16.mxu0 0
        %1211 = vmatpush1.bf16.msra.mxu0 0
        %1212 = vmatprep.subr.bf16.mxu0 0
        %1213 = vmatpush1.bf16.msra.mxu0 0
        %1214 = vmatprep.subr.bf16.mxu0 0
        %1215 = vmatpush1.bf16.msra.mxu0 0
        %1216 = vmatprep.subr.bf16.mxu0 0
        %1217 = vmatpush1.bf16.msra.mxu0 0
        %1218 = vmatprep.subr.bf16.mxu0 0
        %1219 = vmatpush1.bf16.msra.mxu0 0
        %1220 = vmatprep.subr.bf16.mxu0 0
        %1221 = vmatpush1.bf16.msra.mxu0 0
        %1222 = vmatprep.subr.bf16.mxu0 0
        %1223 = vmatpush1.bf16.msra.mxu0 0
        %1224 = vmatprep.subr.bf16.mxu0 0
        %1225 = vmatpush1.bf16.msra.mxu0 0
        %1226 = vmatprep.subr.bf16.mxu0 0
        %1227 = vmatpush1.bf16.msra.mxu0 0
        %1228 = vmatprep.subr.bf16.mxu0 0
        %1229 = vmatpush1.bf16.msra.mxu0 0
        %1230 = vmatprep.subr.bf16.mxu0 0
        %1231 = vmatpush1.bf16.msra.mxu0 0
        %1232 = vmatprep.subr.bf16.mxu0 0
        %1233 = vmatpush1.bf16.msra.mxu0 0
        %1234 = vmatprep.mubr.bf16.mxu0 0
        %1235 = vmatmul.mubr.bf16.gmra.mrb[0].mxu0 %v654
        %v1236 = vpop.f32.mrb[0].mxu0
        %v1237 = vadd.f32 %v1188, %v1236
        %v1238 = vpop.f32.mrb[0].mxu0
        %v1239 = vpop.f32.mrb[0].mxu0
        %v1240 = vadd.f32 %v1188, %v1239
        %v1241 = vpop.f32.mrb[0].mxu0
        %1242 = vdwg.mxu0
        %v1243 = vpack.c.bf16 %v1105, %v1105
        %v1244 = vpack.c.bf16 %v1108, %v1108
        %v1245 = vpack.c.bf16 %v1171, %v1171
        %v1246 = vpack.c.bf16 %v1174, %v1174
        %v1248 = vsel %vm833, %v1243, 0
        %v1251 = vsel %vm833, %v1245, 0
        %1253 = vmatprep.subr.bf16.mxu0 0
        %1254 = vmatpush1.bf16.xpose.msra.mxu0 %v1251
        %1255 = vmatprep.subr.bf16.mxu0 0
        %1256 = vmatpush1.bf16.xpose.msra.mxu0 0
        %1257 = vmatprep.subr.bf16.mxu0 0
        %1258 = vmatpush1.bf16.xpose.msra.mxu0 0
        %1259 = vmatprep.subr.bf16.mxu0 0
        %1260 = vmatpush1.bf16.xpose.msra.mxu0 0
        %1261 = vmatprep.subr.bf16.mxu0 0
        %1262 = vmatpush1.bf16.xpose.msra.mxu0 0
        %1263 = vmatprep.subr.bf16.mxu0 0
        %1264 = vmatpush1.bf16.xpose.msra.mxu0 0
        %1265 = vmatprep.subr.bf16.mxu0 0
        %1266 = vmatpush1.bf16.xpose.msra.mxu0 0
        %1267 = vmatprep.subr.bf16.mxu0 0
        %1268 = vmatpush1.bf16.xpose.msra.mxu0 0
        %1269 = vmatprep.subr.bf16.mxu0 0
        %1270 = vmatpush1.bf16.xpose.msra.mxu0 0
        %1271 = vmatprep.subr.bf16.mxu0 0
        %1272 = vmatpush1.bf16.xpose.msra.mxu0 0
        %1273 = vmatprep.subr.bf16.mxu0 0
        %1274 = vmatpush1.bf16.xpose.msra.mxu0 0
        %1275 = vmatprep.subr.bf16.mxu0 0
        %1276 = vmatpush1.bf16.xpose.msra.mxu0 0
        %1277 = vmatprep.subr.bf16.mxu0 0
        %1278 = vmatpush1.bf16.xpose.msra.mxu0 0
        %1279 = vmatprep.subr.bf16.mxu0 0
        %1280 = vmatpush1.bf16.xpose.msra.mxu0 0
        %1281 = vmatprep.subr.bf16.mxu0 0
        %1282 = vmatpush1.bf16.xpose.msra.mxu0 0
        %1283 = vmatprep.subr.bf16.mxu0 0
        %1284 = vmatpush1.bf16.xpose.msra.mxu0 0
        %1285 = vmatprep.mubr.bf16.mxu0 0
        %1286 = vmatmul.mubr.bf16.gmra.mrb[0].mxu0 %v1248
        %v1287 = vpop.f32.mrb[0].mxu0
        %v1288 = vadd.f32 %v627, %v1287
        %v1289 = vpop.f32.mrb[0].mxu0
        %v1290 = vpop.f32.mrb[0].mxu0
        %v1291 = vpop.f32.mrb[0].mxu0
        %1292 = vdwg.mxu0
        %v1294 = vsel %vm833, %v1244, 0
        %v1297 = vsel %vm833, %v1246, 0
        %1299 = vmatprep.subr.bf16.mxu0 0
        %1300 = vmatpush1.bf16.xpose.msra.mxu0 %v1297
        %1301 = vmatprep.subr.bf16.mxu0 0
        %1302 = vmatpush1.bf16.xpose.msra.mxu0 0
        %1303 = vmatprep.subr.bf16.mxu0 0
        %1304 = vmatpush1.bf16.xpose.msra.mxu0 0
        %1305 = vmatprep.subr.bf16.mxu0 0
        %1306 = vmatpush1.bf16.xpose.msra.mxu0 0
        %1307 = vmatprep.subr.bf16.mxu0 0
        %1308 = vmatpush1.bf16.xpose.msra.mxu0 0
        %1309 = vmatprep.subr.bf16.mxu0 0
        %1310 = vmatpush1.bf16.xpose.msra.mxu0 0
        %1311 = vmatprep.subr.bf16.mxu0 0
        %1312 = vmatpush1.bf16.xpose.msra.mxu0 0
        %1313 = vmatprep.subr.bf16.mxu0 0
        %1314 = vmatpush1.bf16.xpose.msra.mxu0 0
        %1315 = vmatprep.subr.bf16.mxu0 0
        %1316 = vmatpush1.bf16.xpose.msra.mxu0 0
        %1317 = vmatprep.subr.bf16.mxu0 0
        %1318 = vmatpush1.bf16.xpose.msra.mxu0 0
        %1319 = vmatprep.subr.bf16.mxu0 0
        %1320 = vmatpush1.bf16.xpose.msra.mxu0 0
        %1321 = vmatprep.subr.bf16.mxu0 0
        %1322 = vmatpush1.bf16.xpose.msra.mxu0 0
        %1323 = vmatprep.subr.bf16.mxu0 0
        %1324 = vmatpush1.bf16.xpose.msra.mxu0 0
        %1325 = vmatprep.subr.bf16.mxu0 0
        %1326 = vmatpush1.bf16.xpose.msra.mxu0 0
        %1327 = vmatprep.subr.bf16.mxu0 0
        %1328 = vmatpush1.bf16.xpose.msra.mxu0 0
        %1329 = vmatprep.subr.bf16.mxu0 0
        %1330 = vmatpush1.bf16.xpose.msra.mxu0 0
        %1331 = vmatprep.mubr.bf16.mxu0 0
        %1332 = vmatmul.mubr.bf16.gmra.mrb[0].mxu0 %v1294
        %v1333 = vpop.f32.mrb[0].mxu0
        %v1334 = vadd.f32 %v628, %v1333
        %v1335 = vpop.f32.mrb[0].mxu0
        %v1336 = vpop.f32.mrb[0].mxu0
        %v1337 = vpop.f32.mrb[0].mxu0
        %1338 = vdwg.mxu0
        %v1339 = vsel %vm833, %v1288, -inf
        %1340 = vmax.xlane.f32.xlu0 %v1339
        %v1341 = vpop.xlane.xlu0 %1340
        %v1342 = vsel %vm833, %v1334, -inf
        %1343 = vmax.xlane.f32.xlu0 %v1342
        %v1344 = vpop.xlane.xlu0 %1343
        %v1345 = vsub.f32 %v1288, %v1341
        %v1346 = vsub.f32 %v1334, %v1344
        %v1347 = vmul.f32 %v1345, 1.442695
        %v1348 = vpow.pop %v1347
        %v1349 = vmul.f32 %v1346, 1.442695
        %v1350 = vpow.pop %v1349
        %v1351 = vsel %vm833, %v1348, 0.0
        %1352 = vadd.xlane.f32.xlu0 %v1351
        %v1353 = vpop.xlane.xlu0 %1352
        %v1354 = vsel %vm833, %v1350, 0.0
        %1355 = vadd.xlane.f32.xlu0 %v1354
        %v1356 = vpop.xlane.xlu0 %1355
        %v1357 = vrcp.pop %v1353
        %v1358 = vrcp.pop %v1356
        %v1359 = vmul.f32 %v1348, %v1357
        %v1360 = vmul.f32 %v1350, %v1358
        %v1361 = vpack.c.bf16 %v1359, %v1359
        %v1362 = vpack.c.bf16 %v1360, %v1360
        %v1363 = vpack.c.bf16 %v1237, %v1237
        %v1364 = vpack.c.bf16 %v1240, %v1240
        %v1366 = vsel %vm833, %v1361, 0
        %v1369 = vsel %vm955, %v1363, 0
        %1371 = vmatprep.subr.bf16.mxu0 0
        %1372 = vmatpush1.bf16.msra.mxu0 %v1369
        %1373 = vmatprep.subr.bf16.mxu0 0
        %1374 = vmatpush1.bf16.msra.mxu0 0
        %1375 = vmatprep.subr.bf16.mxu0 0
        %1376 = vmatpush1.bf16.msra.mxu0 0
        %1377 = vmatprep.subr.bf16.mxu0 0
        %1378 = vmatpush1.bf16.msra.mxu0 0
        %1379 = vmatprep.subr.bf16.mxu0 0
        %1380 = vmatpush1.bf16.msra.mxu0 0
        %1381 = vmatprep.subr.bf16.mxu0 0
        %1382 = vmatpush1.bf16.msra.mxu0 0
        %1383 = vmatprep.subr.bf16.mxu0 0
        %1384 = vmatpush1.bf16.msra.mxu0 0
        %1385 = vmatprep.subr.bf16.mxu0 0
        %1386 = vmatpush1.bf16.msra.mxu0 0
        %1387 = vmatprep.subr.bf16.mxu0 0
        %1388 = vmatpush1.bf16.msra.mxu0 0
        %1389 = vmatprep.subr.bf16.mxu0 0
        %1390 = vmatpush1.bf16.msra.mxu0 0
        %1391 = vmatprep.subr.bf16.mxu0 0
        %1392 = vmatpush1.bf16.msra.mxu0 0
        %1393 = vmatprep.subr.bf16.mxu0 0
        %1394 = vmatpush1.bf16.msra.mxu0 0
        %1395 = vmatprep.subr.bf16.mxu0 0
        %1396 = vmatpush1.bf16.msra.mxu0 0
        %1397 = vmatprep.subr.bf16.mxu0 0
        %1398 = vmatpush1.bf16.msra.mxu0 0
        %1399 = vmatprep.subr.bf16.mxu0 0
        %1400 = vmatpush1.bf16.msra.mxu0 0
        %1401 = vmatprep.subr.bf16.mxu0 0
        %1402 = vmatpush1.bf16.msra.mxu0 0
        %1403 = vmatprep.mubr.bf16.mxu0 0
        %1404 = vmatmul.mubr.bf16.gmra.mrb[0].mxu0 %v1366
        %v1405 = vpop.f32.mrb[0].mxu0
        %v1406 = vadd.f32 0.0, %v1405
        %v1407 = vpop.f32.mrb[0].mxu0
        %v1408 = vpop.f32.mrb[0].mxu0
        %v1409 = vpop.f32.mrb[0].mxu0
        %1410 = vdwg.mxu0
        %v1412 = vsel %vm833, %v1362, 0
        %v1415 = vsel %vm955, %v1364, 0
        %1417 = vmatprep.subr.bf16.mxu0 0
        %1418 = vmatpush1.bf16.msra.mxu0 %v1415
        %1419 = vmatprep.subr.bf16.mxu0 0
        %1420 = vmatpush1.bf16.msra.mxu0 0
        %1421 = vmatprep.subr.bf16.mxu0 0
        %1422 = vmatpush1.bf16.msra.mxu0 0
        %1423 = vmatprep.subr.bf16.mxu0 0
        %1424 = vmatpush1.bf16.msra.mxu0 0
        %1425 = vmatprep.subr.bf16.mxu0 0
        %1426 = vmatpush1.bf16.msra.mxu0 0
        %1427 = vmatprep.subr.bf16.mxu0 0
        %1428 = vmatpush1.bf16.msra.mxu0 0
        %1429 = vmatprep.subr.bf16.mxu0 0
        %1430 = vmatpush1.bf16.msra.mxu0 0
        %1431 = vmatprep.subr.bf16.mxu0 0
        %1432 = vmatpush1.bf16.msra.mxu0 0
        %1433 = vmatprep.subr.bf16.mxu0 0
        %1434 = vmatpush1.bf16.msra.mxu0 0
        %1435 = vmatprep.subr.bf16.mxu0 0
        %1436 = vmatpush1.bf16.msra.mxu0 0
        %1437 = vmatprep.subr.bf16.mxu0 0
        %1438 = vmatpush1.bf16.msra.mxu0 0
        %1439 = vmatprep.subr.bf16.mxu0 0
        %1440 = vmatpush1.bf16.msra.mxu0 0
        %1441 = vmatprep.subr.bf16.mxu0 0
        %1442 = vmatpush1.bf16.msra.mxu0 0
        %1443 = vmatprep.subr.bf16.mxu0 0
        %1444 = vmatpush1.bf16.msra.mxu0 0
        %1445 = vmatprep.subr.bf16.mxu0 0
        %1446 = vmatpush1.bf16.msra.mxu0 0
        %1447 = vmatprep.subr.bf16.mxu0 0
        %1448 = vmatpush1.bf16.msra.mxu0 0
        %1449 = vmatprep.mubr.bf16.mxu0 0
        %1450 = vmatmul.mubr.bf16.gmra.mrb[0].mxu0 %v1412
        %v1451 = vpop.f32.mrb[0].mxu0
        %v1452 = vadd.f32 0.0, %v1451
        %v1453 = vpop.f32.mrb[0].mxu0
        %v1454 = vpop.f32.mrb[0].mxu0
        %v1455 = vpop.f32.mrb[0].mxu0
        %1456 = vdwg.mxu0
        %s1457 = scalar_lea.vmem %s4, 32
        %v1458 = vld [vmem:[%s1457] sm:$0xf]
        %v1459 = vld [vmem:[%s1457 + $0x4] sm:$0xf]
        %v1460 = vld [vmem:[%s1457 + $0x8] sm:$0xf]
        %v1461 = vld [vmem:[%s1457 + $0xc] sm:$0xf]
        %s1462 = scalar_lea.vmem %s5, 2
        %v1463 = vld [vmem:[%s1462] sm:$0x1]
        %v1465 = vlaneseq
        %v1466 = vshrl.u32 %v1465, 7
        %v1467 = vsub.s32 0, %v1466
        %v1468 = vrot.slane %v1463, %v1467
        %v1474 = vunpack.c.l.b16 %v1458
        %v1475 = vunpack.c.l.b16 %v1459
        %v1476 = vunpack.c.l.b16 %v1460
        %v1477 = vunpack.c.l.b16 %v1461
        %v1478 = vpack.c.b16 %v1475, %v1474
        %v1479 = vpack.c.b16 %v1477, %v1476
        %1482 = vmatprep.subr.bf16.mxu0 0
        %1483 = vmatpush1.bf16.msra.mxu0 %v1478
        %1484 = vmatprep.subr.bf16.mxu0 0
        %1485 = vmatpush1.bf16.msra.mxu0 %v1479
        %1486 = vmatprep.subr.bf16.mxu0 0
        %1487 = vmatpush1.bf16.msra.mxu0 0
        %1488 = vmatprep.subr.bf16.mxu0 0
        %1489 = vmatpush1.bf16.msra.mxu0 0
        %1490 = vmatprep.subr.bf16.mxu0 0
        %1491 = vmatpush1.bf16.msra.mxu0 0
        %1492 = vmatprep.subr.bf16.mxu0 0
        %1493 = vmatpush1.bf16.msra.mxu0 0
        %1494 = vmatprep.subr.bf16.mxu0 0
        %1495 = vmatpush1.bf16.msra.mxu0 0
        %1496 = vmatprep.subr.bf16.mxu0 0
        %1497 = vmatpush1.bf16.msra.mxu0 0
        %1498 = vmatprep.subr.bf16.mxu0 0
        %1499 = vmatpush1.bf16.msra.mxu0 0
        %1500 = vmatprep.subr.bf16.mxu0 0
        %1501 = vmatpush1.bf16.msra.mxu0 0
        %1502 = vmatprep.subr.bf16.mxu0 0
        %1503 = vmatpush1.bf16.msra.mxu0 0
        %1504 = vmatprep.subr.bf16.mxu0 0
        %1505 = vmatpush1.bf16.msra.mxu0 0
        %1506 = vmatprep.subr.bf16.mxu0 0
        %1507 = vmatpush1.bf16.msra.mxu0 0
        %1508 = vmatprep.subr.bf16.mxu0 0
        %1509 = vmatpush1.bf16.msra.mxu0 0
        %1510 = vmatprep.subr.bf16.mxu0 0
        %1511 = vmatpush1.bf16.msra.mxu0 0
        %1512 = vmatprep.subr.bf16.mxu0 0
        %1513 = vmatpush1.bf16.msra.mxu0 0
        %1514 = vmatprep.mubr.bf16.mxu0 0
        %1515 = vmatmul.mubr.bf16.gmra.mrb[0].mxu0 %v654
        %v1516 = vpop.f32.mrb[0].mxu0
        %v1517 = vadd.f32 %v1468, %v1516
        %v1518 = vpop.f32.mrb[0].mxu0
        %v1519 = vpop.f32.mrb[0].mxu0
        %v1520 = vadd.f32 %v1468, %v1519
        %v1521 = vpop.f32.mrb[0].mxu0
        %1522 = vdwg.mxu0
        %s1523 = scalar_lea.vmem %s4, 96
        %v1524 = vld [vmem:[%s1523] sm:$0xf]
        %v1525 = vld [vmem:[%s1523 + $0x4] sm:$0xf]
        %v1526 = vld [vmem:[%s1523 + $0x8] sm:$0xf]
        %v1527 = vld [vmem:[%s1523 + $0xc] sm:$0xf]
        %s1528 = scalar_lea.vmem %s5, 6
        %v1529 = vld [vmem:[%s1528] sm:$0x1]
        %v1531 = vlaneseq
        %v1532 = vshrl.u32 %v1531, 7
        %v1533 = vsub.s32 0, %v1532
        %v1534 = vrot.slane %v1529, %v1533
        %v1540 = vunpack.c.l.b16 %v1524
        %v1541 = vunpack.c.l.b16 %v1525
        %v1542 = vunpack.c.l.b16 %v1526
        %v1543 = vunpack.c.l.b16 %v1527
        %v1544 = vpack.c.b16 %v1541, %v1540
        %v1545 = vpack.c.b16 %v1543, %v1542
        %1548 = vmatprep.subr.bf16.mxu0 0
        %1549 = vmatpush1.bf16.msra.mxu0 %v1544
        %1550 = vmatprep.subr.bf16.mxu0 0
        %1551 = vmatpush1.bf16.msra.mxu0 %v1545
        %1552 = vmatprep.subr.bf16.mxu0 0
        %1553 = vmatpush1.bf16.msra.mxu0 0
        %1554 = vmatprep.subr.bf16.mxu0 0
        %1555 = vmatpush1.bf16.msra.mxu0 0
        %1556 = vmatprep.subr.bf16.mxu0 0
        %1557 = vmatpush1.bf16.msra.mxu0 0
        %1558 = vmatprep.subr.bf16.mxu0 0
        %1559 = vmatpush1.bf16.msra.mxu0 0
        %1560 = vmatprep.subr.bf16.mxu0 0
        %1561 = vmatpush1.bf16.msra.mxu0 0
        %1562 = vmatprep.subr.bf16.mxu0 0
        %1563 = vmatpush1.bf16.msra.mxu0 0
        %1564 = vmatprep.subr.bf16.mxu0 0
        %1565 = vmatpush1.bf16.msra.mxu0 0
        %1566 = vmatprep.subr.bf16.mxu0 0
        %1567 = vmatpush1.bf16.msra.mxu0 0
        %1568 = vmatprep.subr.bf16.mxu0 0
        %1569 = vmatpush1.bf16.msra.mxu0 0
        %1570 = vmatprep.subr.bf16.mxu0 0
        %1571 = vmatpush1.bf16.msra.mxu0 0
        %1572 = vmatprep.subr.bf16.mxu0 0
        %1573 = vmatpush1.bf16.msra.mxu0 0
        %1574 = vmatprep.subr.bf16.mxu0 0
        %1575 = vmatpush1.bf16.msra.mxu0 0
        %1576 = vmatprep.subr.bf16.mxu0 0
        %1577 = vmatpush1.bf16.msra.mxu0 0
        %1578 = vmatprep.subr.bf16.mxu0 0
        %1579 = vmatpush1.bf16.msra.mxu0 0
        %1580 = vmatprep.mubr.bf16.mxu0 0
        %1581 = vmatmul.mubr.bf16.gmra.mrb[0].mxu0 %v654
        %v1582 = vpop.f32.mrb[0].mxu0
        %v1583 = vadd.f32 %v1534, %v1582
        %v1584 = vpop.f32.mrb[0].mxu0
        %v1585 = vpop.f32.mrb[0].mxu0
        %v1586 = vadd.f32 %v1534, %v1585
        %v1587 = vpop.f32.mrb[0].mxu0
        %1588 = vdwg.mxu0
        %s1589 = scalar_lea.vmem %s4, 160
        %v1590 = vld [vmem:[%s1589] sm:$0xf]
        %v1591 = vld [vmem:[%s1589 + $0x4] sm:$0xf]
        %v1592 = vld [vmem:[%s1589 + $0x8] sm:$0xf]
        %v1593 = vld [vmem:[%s1589 + $0xc] sm:$0xf]
        %s1594 = scalar_lea.vmem %s5, 10
        %v1595 = vld [vmem:[%s1594] sm:$0x1]
        %v1597 = vlaneseq
        %v1598 = vshrl.u32 %v1597, 7
        %v1599 = vsub.s32 0, %v1598
        %v1600 = vrot.slane %v1595, %v1599
        %v1606 = vunpack.c.l.b16 %v1590
        %v1607 = vunpack.c.l.b16 %v1591
        %v1608 = vunpack.c.l.b16 %v1592
        %v1609 = vunpack.c.l.b16 %v1593
        %v1610 = vpack.c.b16 %v1607, %v1606
        %v1611 = vpack.c.b16 %v1609, %v1608
        %1614 = vmatprep.subr.bf16.mxu0 0
        %1615 = vmatpush1.bf16.msra.mxu0 %v1610
        %1616 = vmatprep.subr.bf16.mxu0 0
        %1617 = vmatpush1.bf16.msra.mxu0 %v1611
        %1618 = vmatprep.subr.bf16.mxu0 0
        %1619 = vmatpush1.bf16.msra.mxu0 0
        %1620 = vmatprep.subr.bf16.mxu0 0
        %1621 = vmatpush1.bf16.msra.mxu0 0
        %1622 = vmatprep.subr.bf16.mxu0 0
        %1623 = vmatpush1.bf16.msra.mxu0 0
        %1624 = vmatprep.subr.bf16.mxu0 0
        %1625 = vmatpush1.bf16.msra.mxu0 0
        %1626 = vmatprep.subr.bf16.mxu0 0
        %1627 = vmatpush1.bf16.msra.mxu0 0
        %1628 = vmatprep.subr.bf16.mxu0 0
        %1629 = vmatpush1.bf16.msra.mxu0 0
        %1630 = vmatprep.subr.bf16.mxu0 0
        %1631 = vmatpush1.bf16.msra.mxu0 0
        %1632 = vmatprep.subr.bf16.mxu0 0
        %1633 = vmatpush1.bf16.msra.mxu0 0
        %1634 = vmatprep.subr.bf16.mxu0 0
        %1635 = vmatpush1.bf16.msra.mxu0 0
        %1636 = vmatprep.subr.bf16.mxu0 0
        %1637 = vmatpush1.bf16.msra.mxu0 0
        %1638 = vmatprep.subr.bf16.mxu0 0
        %1639 = vmatpush1.bf16.msra.mxu0 0
        %1640 = vmatprep.subr.bf16.mxu0 0
        %1641 = vmatpush1.bf16.msra.mxu0 0
        %1642 = vmatprep.subr.bf16.mxu0 0
        %1643 = vmatpush1.bf16.msra.mxu0 0
        %1644 = vmatprep.subr.bf16.mxu0 0
        %1645 = vmatpush1.bf16.msra.mxu0 0
        %1646 = vmatprep.mubr.bf16.mxu0 0
        %1647 = vmatmul.mubr.bf16.gmra.mrb[0].mxu0 %v654
        %v1648 = vpop.f32.mrb[0].mxu0
        %v1649 = vadd.f32 %v1600, %v1648
        %v1650 = vpop.f32.mrb[0].mxu0
        %v1651 = vpop.f32.mrb[0].mxu0
        %v1652 = vadd.f32 %v1600, %v1651
        %v1653 = vpop.f32.mrb[0].mxu0
        %1654 = vdwg.mxu0
        %v1655 = vpack.c.bf16 %v1517, %v1517
        %v1656 = vpack.c.bf16 %v1520, %v1520
        %v1657 = vpack.c.bf16 %v1583, %v1583
        %v1658 = vpack.c.bf16 %v1586, %v1586
        %v1660 = vsel %vm833, %v1655, 0
        %v1663 = vsel %vm833, %v1657, 0
        %1665 = vmatprep.subr.bf16.mxu0 0
        %1666 = vmatpush1.bf16.xpose.msra.mxu0 %v1663
        %1667 = vmatprep.subr.bf16.mxu0 0
        %1668 = vmatpush1.bf16.xpose.msra.mxu0 0
        %1669 = vmatprep.subr.bf16.mxu0 0
        %1670 = vmatpush1.bf16.xpose.msra.mxu0 0
        %1671 = vmatprep.subr.bf16.mxu0 0
        %1672 = vmatpush1.bf16.xpose.msra.mxu0 0
        %1673 = vmatprep.subr.bf16.mxu0 0
        %1674 = vmatpush1.bf16.xpose.msra.mxu0 0
        %1675 = vmatprep.subr.bf16.mxu0 0
        %1676 = vmatpush1.bf16.xpose.msra.mxu0 0
        %1677 = vmatprep.subr.bf16.mxu0 0
        %1678 = vmatpush1.bf16.xpose.msra.mxu0 0
        %1679 = vmatprep.subr.bf16.mxu0 0
        %1680 = vmatpush1.bf16.xpose.msra.mxu0 0
        %1681 = vmatprep.subr.bf16.mxu0 0
        %1682 = vmatpush1.bf16.xpose.msra.mxu0 0
        %1683 = vmatprep.subr.bf16.mxu0 0
        %1684 = vmatpush1.bf16.xpose.msra.mxu0 0
        %1685 = vmatprep.subr.bf16.mxu0 0
        %1686 = vmatpush1.bf16.xpose.msra.mxu0 0
        %1687 = vmatprep.subr.bf16.mxu0 0
        %1688 = vmatpush1.bf16.xpose.msra.mxu0 0
        %1689 = vmatprep.subr.bf16.mxu0 0
        %1690 = vmatpush1.bf16.xpose.msra.mxu0 0
        %1691 = vmatprep.subr.bf16.mxu0 0
        %1692 = vmatpush1.bf16.xpose.msra.mxu0 0
        %1693 = vmatprep.subr.bf16.mxu0 0
        %1694 = vmatpush1.bf16.xpose.msra.mxu0 0
        %1695 = vmatprep.subr.bf16.mxu0 0
        %1696 = vmatpush1.bf16.xpose.msra.mxu0 0
        %1697 = vmatprep.mubr.bf16.mxu0 0
        %1698 = vmatmul.mubr.bf16.gmra.mrb[0].mxu0 %v1660
        %v1699 = vpop.f32.mrb[0].mxu0
        %v1700 = vadd.f32 %v627, %v1699
        %v1701 = vpop.f32.mrb[0].mxu0
        %v1702 = vpop.f32.mrb[0].mxu0
        %v1703 = vpop.f32.mrb[0].mxu0
        %1704 = vdwg.mxu0
        %v1706 = vsel %vm833, %v1656, 0
        %v1709 = vsel %vm833, %v1658, 0
        %1711 = vmatprep.subr.bf16.mxu0 0
        %1712 = vmatpush1.bf16.xpose.msra.mxu0 %v1709
        %1713 = vmatprep.subr.bf16.mxu0 0
        %1714 = vmatpush1.bf16.xpose.msra.mxu0 0
        %1715 = vmatprep.subr.bf16.mxu0 0
        %1716 = vmatpush1.bf16.xpose.msra.mxu0 0
        %1717 = vmatprep.subr.bf16.mxu0 0
        %1718 = vmatpush1.bf16.xpose.msra.mxu0 0
        %1719 = vmatprep.subr.bf16.mxu0 0
        %1720 = vmatpush1.bf16.xpose.msra.mxu0 0
        %1721 = vmatprep.subr.bf16.mxu0 0
        %1722 = vmatpush1.bf16.xpose.msra.mxu0 0
        %1723 = vmatprep.subr.bf16.mxu0 0
        %1724 = vmatpush1.bf16.xpose.msra.mxu0 0
        %1725 = vmatprep.subr.bf16.mxu0 0
        %1726 = vmatpush1.bf16.xpose.msra.mxu0 0
        %1727 = vmatprep.subr.bf16.mxu0 0
        %1728 = vmatpush1.bf16.xpose.msra.mxu0 0
        %1729 = vmatprep.subr.bf16.mxu0 0
        %1730 = vmatpush1.bf16.xpose.msra.mxu0 0
        %1731 = vmatprep.subr.bf16.mxu0 0
        %1732 = vmatpush1.bf16.xpose.msra.mxu0 0
        %1733 = vmatprep.subr.bf16.mxu0 0
        %1734 = vmatpush1.bf16.xpose.msra.mxu0 0
        %1735 = vmatprep.subr.bf16.mxu0 0
        %1736 = vmatpush1.bf16.xpose.msra.mxu0 0
        %1737 = vmatprep.subr.bf16.mxu0 0
        %1738 = vmatpush1.bf16.xpose.msra.mxu0 0
        %1739 = vmatprep.subr.bf16.mxu0 0
        %1740 = vmatpush1.bf16.xpose.msra.mxu0 0
        %1741 = vmatprep.subr.bf16.mxu0 0
        %1742 = vmatpush1.bf16.xpose.msra.mxu0 0
        %1743 = vmatprep.mubr.bf16.mxu0 0
        %1744 = vmatmul.mubr.bf16.gmra.mrb[0].mxu0 %v1706
        %v1745 = vpop.f32.mrb[0].mxu0
        %v1746 = vadd.f32 %v628, %v1745
        %v1747 = vpop.f32.mrb[0].mxu0
        %v1748 = vpop.f32.mrb[0].mxu0
        %v1749 = vpop.f32.mrb[0].mxu0
        %1750 = vdwg.mxu0
        %v1751 = vsel %vm833, %v1700, -inf
        %1752 = vmax.xlane.f32.xlu0 %v1751
        %v1753 = vpop.xlane.xlu0 %1752
        %v1754 = vsel %vm833, %v1746, -inf
        %1755 = vmax.xlane.f32.xlu0 %v1754
        %v1756 = vpop.xlane.xlu0 %1755
        %v1757 = vsub.f32 %v1700, %v1753
        %v1758 = vsub.f32 %v1746, %v1756
        %v1759 = vmul.f32 %v1757, 1.442695
        %v1760 = vpow.pop %v1759
        %v1761 = vmul.f32 %v1758, 1.442695
        %v1762 = vpow.pop %v1761
        %v1763 = vsel %vm833, %v1760, 0.0
        %1764 = vadd.xlane.f32.xlu0 %v1763
        %v1765 = vpop.xlane.xlu0 %1764
        %v1766 = vsel %vm833, %v1762, 0.0
        %1767 = vadd.xlane.f32.xlu0 %v1766
        %v1768 = vpop.xlane.xlu0 %1767
        %v1769 = vrcp.pop %v1765
        %v1770 = vrcp.pop %v1768
        %v1771 = vmul.f32 %v1760, %v1769
        %v1772 = vmul.f32 %v1762, %v1770
        %v1773 = vpack.c.bf16 %v1771, %v1771
        %v1774 = vpack.c.bf16 %v1772, %v1772
        %v1775 = vpack.c.bf16 %v1649, %v1649
        %v1776 = vpack.c.bf16 %v1652, %v1652
        %v1778 = vsel %vm833, %v1773, 0
        %v1781 = vsel %vm955, %v1775, 0
        %1783 = vmatprep.subr.bf16.mxu0 0
        %1784 = vmatpush1.bf16.msra.mxu0 %v1781
        %1785 = vmatprep.subr.bf16.mxu0 0
        %1786 = vmatpush1.bf16.msra.mxu0 0
        %1787 = vmatprep.subr.bf16.mxu0 0
        %1788 = vmatpush1.bf16.msra.mxu0 0
        %1789 = vmatprep.subr.bf16.mxu0 0
        %1790 = vmatpush1.bf16.msra.mxu0 0
        %1791 = vmatprep.subr.bf16.mxu0 0
        %1792 = vmatpush1.bf16.msra.mxu0 0
        %1793 = vmatprep.subr.bf16.mxu0 0
        %1794 = vmatpush1.bf16.msra.mxu0 0
        %1795 = vmatprep.subr.bf16.mxu0 0
        %1796 = vmatpush1.bf16.msra.mxu0 0
        %1797 = vmatprep.subr.bf16.mxu0 0
        %1798 = vmatpush1.bf16.msra.mxu0 0
        %1799 = vmatprep.subr.bf16.mxu0 0
        %1800 = vmatpush1.bf16.msra.mxu0 0
        %1801 = vmatprep.subr.bf16.mxu0 0
        %1802 = vmatpush1.bf16.msra.mxu0 0
        %1803 = vmatprep.subr.bf16.mxu0 0
        %1804 = vmatpush1.bf16.msra.mxu0 0
        %1805 = vmatprep.subr.bf16.mxu0 0
        %1806 = vmatpush1.bf16.msra.mxu0 0
        %1807 = vmatprep.subr.bf16.mxu0 0
        %1808 = vmatpush1.bf16.msra.mxu0 0
        %1809 = vmatprep.subr.bf16.mxu0 0
        %1810 = vmatpush1.bf16.msra.mxu0 0
        %1811 = vmatprep.subr.bf16.mxu0 0
        %1812 = vmatpush1.bf16.msra.mxu0 0
        %1813 = vmatprep.subr.bf16.mxu0 0
        %1814 = vmatpush1.bf16.msra.mxu0 0
        %1815 = vmatprep.mubr.bf16.mxu0 0
        %1816 = vmatmul.mubr.bf16.gmra.mrb[0].mxu0 %v1778
        %v1817 = vpop.f32.mrb[0].mxu0
        %v1818 = vadd.f32 0.0, %v1817
        %v1819 = vpop.f32.mrb[0].mxu0
        %v1820 = vpop.f32.mrb[0].mxu0
        %v1821 = vpop.f32.mrb[0].mxu0
        %1822 = vdwg.mxu0
        %v1824 = vsel %vm833, %v1774, 0
        %v1827 = vsel %vm955, %v1776, 0
        %1829 = vmatprep.subr.bf16.mxu0 0
        %1830 = vmatpush1.bf16.msra.mxu0 %v1827
        %1831 = vmatprep.subr.bf16.mxu0 0
        %1832 = vmatpush1.bf16.msra.mxu0 0
        %1833 = vmatprep.subr.bf16.mxu0 0
        %1834 = vmatpush1.bf16.msra.mxu0 0
        %1835 = vmatprep.subr.bf16.mxu0 0
        %1836 = vmatpush1.bf16.msra.mxu0 0
        %1837 = vmatprep.subr.bf16.mxu0 0
        %1838 = vmatpush1.bf16.msra.mxu0 0
        %1839 = vmatprep.subr.bf16.mxu0 0
        %1840 = vmatpush1.bf16.msra.mxu0 0
        %1841 = vmatprep.subr.bf16.mxu0 0
        %1842 = vmatpush1.bf16.msra.mxu0 0
        %1843 = vmatprep.subr.bf16.mxu0 0
        %1844 = vmatpush1.bf16.msra.mxu0 0
        %1845 = vmatprep.subr.bf16.mxu0 0
        %1846 = vmatpush1.bf16.msra.mxu0 0
        %1847 = vmatprep.subr.bf16.mxu0 0
        %1848 = vmatpush1.bf16.msra.mxu0 0
        %1849 = vmatprep.subr.bf16.mxu0 0
        %1850 = vmatpush1.bf16.msra.mxu0 0
        %1851 = vmatprep.subr.bf16.mxu0 0
        %1852 = vmatpush1.bf16.msra.mxu0 0
        %1853 = vmatprep.subr.bf16.mxu0 0
        %1854 = vmatpush1.bf16.msra.mxu0 0
        %1855 = vmatprep.subr.bf16.mxu0 0
        %1856 = vmatpush1.bf16.msra.mxu0 0
        %1857 = vmatprep.subr.bf16.mxu0 0
        %1858 = vmatpush1.bf16.msra.mxu0 0
        %1859 = vmatprep.subr.bf16.mxu0 0
        %1860 = vmatpush1.bf16.msra.mxu0 0
        %1861 = vmatprep.mubr.bf16.mxu0 0
        %1862 = vmatmul.mubr.bf16.gmra.mrb[0].mxu0 %v1824
        %v1863 = vpop.f32.mrb[0].mxu0
        %v1864 = vadd.f32 0.0, %v1863
        %v1865 = vpop.f32.mrb[0].mxu0
        %v1866 = vpop.f32.mrb[0].mxu0
        %v1867 = vpop.f32.mrb[0].mxu0
        %1868 = vdwg.mxu0
        %s1869 = scalar_lea.vmem %s4, 48
        %v1870 = vld [vmem:[%s1869] sm:$0xf]
        %v1871 = vld [vmem:[%s1869 + $0x4] sm:$0xf]
        %v1872 = vld [vmem:[%s1869 + $0x8] sm:$0xf]
        %v1873 = vld [vmem:[%s1869 + $0xc] sm:$0xf]
        %s1874 = scalar_lea.vmem %s5, 3
        %v1875 = vld [vmem:[%s1874] sm:$0x1]
        %v1877 = vlaneseq
        %v1878 = vshrl.u32 %v1877, 7
        %v1879 = vsub.s32 0, %v1878
        %v1880 = vrot.slane %v1875, %v1879
        %v1886 = vunpack.c.l.b16 %v1870
        %v1887 = vunpack.c.l.b16 %v1871
        %v1888 = vunpack.c.l.b16 %v1872
        %v1889 = vunpack.c.l.b16 %v1873
        %v1890 = vpack.c.b16 %v1887, %v1886
        %v1891 = vpack.c.b16 %v1889, %v1888
        %1894 = vmatprep.subr.bf16.mxu0 0
        %1895 = vmatpush1.bf16.msra.mxu0 %v1890
        %1896 = vmatprep.subr.bf16.mxu0 0
        %1897 = vmatpush1.bf16.msra.mxu0 %v1891
        %1898 = vmatprep.subr.bf16.mxu0 0
        %1899 = vmatpush1.bf16.msra.mxu0 0
        %1900 = vmatprep.subr.bf16.mxu0 0
        %1901 = vmatpush1.bf16.msra.mxu0 0
        %1902 = vmatprep.subr.bf16.mxu0 0
        %1903 = vmatpush1.bf16.msra.mxu0 0
        %1904 = vmatprep.subr.bf16.mxu0 0
        %1905 = vmatpush1.bf16.msra.mxu0 0
        %1906 = vmatprep.subr.bf16.mxu0 0
        %1907 = vmatpush1.bf16.msra.mxu0 0
        %1908 = vmatprep.subr.bf16.mxu0 0
        %1909 = vmatpush1.bf16.msra.mxu0 0
        %1910 = vmatprep.subr.bf16.mxu0 0
        %1911 = vmatpush1.bf16.msra.mxu0 0
        %1912 = vmatprep.subr.bf16.mxu0 0
        %1913 = vmatpush1.bf16.msra.mxu0 0
        %1914 = vmatprep.subr.bf16.mxu0 0
        %1915 = vmatpush1.bf16.msra.mxu0 0
        %1916 = vmatprep.subr.bf16.mxu0 0
        %1917 = vmatpush1.bf16.msra.mxu0 0
        %1918 = vmatprep.subr.bf16.mxu0 0
        %1919 = vmatpush1.bf16.msra.mxu0 0
        %1920 = vmatprep.subr.bf16.mxu0 0
        %1921 = vmatpush1.bf16.msra.mxu0 0
        %1922 = vmatprep.subr.bf16.mxu0 0
        %1923 = vmatpush1.bf16.msra.mxu0 0
        %1924 = vmatprep.subr.bf16.mxu0 0
        %1925 = vmatpush1.bf16.msra.mxu0 0
        %1926 = vmatprep.mubr.bf16.mxu0 0
        %1927 = vmatmul.mubr.bf16.gmra.mrb[0].mxu0 %v654
        %v1928 = vpop.f32.mrb[0].mxu0
        %v1929 = vadd.f32 %v1880, %v1928
        %v1930 = vpop.f32.mrb[0].mxu0
        %v1931 = vpop.f32.mrb[0].mxu0
        %v1932 = vadd.f32 %v1880, %v1931
        %v1933 = vpop.f32.mrb[0].mxu0
        %1934 = vdwg.mxu0
        %s1935 = scalar_lea.vmem %s4, 112
        %v1936 = vld [vmem:[%s1935] sm:$0xf]
        %v1937 = vld [vmem:[%s1935 + $0x4] sm:$0xf]
        %v1938 = vld [vmem:[%s1935 + $0x8] sm:$0xf]
        %v1939 = vld [vmem:[%s1935 + $0xc] sm:$0xf]
        %s1940 = scalar_lea.vmem %s5, 7
        %v1941 = vld [vmem:[%s1940] sm:$0x1]
        %v1943 = vlaneseq
        %v1944 = vshrl.u32 %v1943, 7
        %v1945 = vsub.s32 0, %v1944
        %v1946 = vrot.slane %v1941, %v1945
        %v1952 = vunpack.c.l.b16 %v1936
        %v1953 = vunpack.c.l.b16 %v1937
        %v1954 = vunpack.c.l.b16 %v1938
        %v1955 = vunpack.c.l.b16 %v1939
        %v1956 = vpack.c.b16 %v1953, %v1952
        %v1957 = vpack.c.b16 %v1955, %v1954
        %1960 = vmatprep.subr.bf16.mxu0 0
        %1961 = vmatpush1.bf16.msra.mxu0 %v1956
        %1962 = vmatprep.subr.bf16.mxu0 0
        %1963 = vmatpush1.bf16.msra.mxu0 %v1957
        %1964 = vmatprep.subr.bf16.mxu0 0
        %1965 = vmatpush1.bf16.msra.mxu0 0
        %1966 = vmatprep.subr.bf16.mxu0 0
        %1967 = vmatpush1.bf16.msra.mxu0 0
        %1968 = vmatprep.subr.bf16.mxu0 0
        %1969 = vmatpush1.bf16.msra.mxu0 0
        %1970 = vmatprep.subr.bf16.mxu0 0
        %1971 = vmatpush1.bf16.msra.mxu0 0
        %1972 = vmatprep.subr.bf16.mxu0 0
        %1973 = vmatpush1.bf16.msra.mxu0 0
        %1974 = vmatprep.subr.bf16.mxu0 0
        %1975 = vmatpush1.bf16.msra.mxu0 0
        %1976 = vmatprep.subr.bf16.mxu0 0
        %1977 = vmatpush1.bf16.msra.mxu0 0
        %1978 = vmatprep.subr.bf16.mxu0 0
        %1979 = vmatpush1.bf16.msra.mxu0 0
        %1980 = vmatprep.subr.bf16.mxu0 0
        %1981 = vmatpush1.bf16.msra.mxu0 0
        %1982 = vmatprep.subr.bf16.mxu0 0
        %1983 = vmatpush1.bf16.msra.mxu0 0
        %1984 = vmatprep.subr.bf16.mxu0 0
        %1985 = vmatpush1.bf16.msra.mxu0 0
        %1986 = vmatprep.subr.bf16.mxu0 0
        %1987 = vmatpush1.bf16.msra.mxu0 0
        %1988 = vmatprep.subr.bf16.mxu0 0
        %1989 = vmatpush1.bf16.msra.mxu0 0
        %1990 = vmatprep.subr.bf16.mxu0 0
        %1991 = vmatpush1.bf16.msra.mxu0 0
        %1992 = vmatprep.mubr.bf16.mxu0 0
        %1993 = vmatmul.mubr.bf16.gmra.mrb[0].mxu0 %v654
        %v1994 = vpop.f32.mrb[0].mxu0
        %v1995 = vadd.f32 %v1946, %v1994
        %v1996 = vpop.f32.mrb[0].mxu0
        %v1997 = vpop.f32.mrb[0].mxu0
        %v1998 = vadd.f32 %v1946, %v1997
        %v1999 = vpop.f32.mrb[0].mxu0
        %2000 = vdwg.mxu0
        %s2001 = scalar_lea.vmem %s4, 176
        %v2002 = vld [vmem:[%s2001] sm:$0xf]
        %v2003 = vld [vmem:[%s2001 + $0x4] sm:$0xf]
        %v2004 = vld [vmem:[%s2001 + $0x8] sm:$0xf]
        %v2005 = vld [vmem:[%s2001 + $0xc] sm:$0xf]
        %s2006 = scalar_lea.vmem %s5, 11
        %v2007 = vld [vmem:[%s2006] sm:$0x1]
        %v2009 = vlaneseq
        %v2010 = vshrl.u32 %v2009, 7
        %v2011 = vsub.s32 0, %v2010
        %v2012 = vrot.slane %v2007, %v2011
        %v2018 = vunpack.c.l.b16 %v2002
        %v2019 = vunpack.c.l.b16 %v2003
        %v2020 = vunpack.c.l.b16 %v2004
        %v2021 = vunpack.c.l.b16 %v2005
        %v2022 = vpack.c.b16 %v2019, %v2018
        %v2023 = vpack.c.b16 %v2021, %v2020
        %2026 = vmatprep.subr.bf16.mxu0 0
        %2027 = vmatpush1.bf16.msra.mxu0 %v2022
        %2028 = vmatprep.subr.bf16.mxu0 0
        %2029 = vmatpush1.bf16.msra.mxu0 %v2023
        %2030 = vmatprep.subr.bf16.mxu0 0
        %2031 = vmatpush1.bf16.msra.mxu0 0
        %2032 = vmatprep.subr.bf16.mxu0 0
        %2033 = vmatpush1.bf16.msra.mxu0 0
        %2034 = vmatprep.subr.bf16.mxu0 0
        %2035 = vmatpush1.bf16.msra.mxu0 0
        %2036 = vmatprep.subr.bf16.mxu0 0
        %2037 = vmatpush1.bf16.msra.mxu0 0
        %2038 = vmatprep.subr.bf16.mxu0 0
        %2039 = vmatpush1.bf16.msra.mxu0 0
        %2040 = vmatprep.subr.bf16.mxu0 0
        %2041 = vmatpush1.bf16.msra.mxu0 0
        %2042 = vmatprep.subr.bf16.mxu0 0
        %2043 = vmatpush1.bf16.msra.mxu0 0
        %2044 = vmatprep.subr.bf16.mxu0 0
        %2045 = vmatpush1.bf16.msra.mxu0 0
        %2046 = vmatprep.subr.bf16.mxu0 0
        %2047 = vmatpush1.bf16.msra.mxu0 0
        %2048 = vmatprep.subr.bf16.mxu0 0
        %2049 = vmatpush1.bf16.msra.mxu0 0
        %2050 = vmatprep.subr.bf16.mxu0 0
        %2051 = vmatpush1.bf16.msra.mxu0 0
        %2052 = vmatprep.subr.bf16.mxu0 0
        %2053 = vmatpush1.bf16.msra.mxu0 0
        %2054 = vmatprep.subr.bf16.mxu0 0
        %2055 = vmatpush1.bf16.msra.mxu0 0
        %2056 = vmatprep.subr.bf16.mxu0 0
        %2057 = vmatpush1.bf16.msra.mxu0 0
        %2058 = vmatprep.mubr.bf16.mxu0 0
        %2059 = vmatmul.mubr.bf16.gmra.mrb[0].mxu0 %v654
        %v2060 = vpop.f32.mrb[0].mxu0
        %v2061 = vadd.f32 %v2012, %v2060
        %v2062 = vpop.f32.mrb[0].mxu0
        %v2063 = vpop.f32.mrb[0].mxu0
        %v2064 = vadd.f32 %v2012, %v2063
        %v2065 = vpop.f32.mrb[0].mxu0
        %2066 = vdwg.mxu0
        %v2067 = vpack.c.bf16 %v1929, %v1929
        %v2068 = vpack.c.bf16 %v1932, %v1932
        %v2069 = vpack.c.bf16 %v1995, %v1995
        %v2070 = vpack.c.bf16 %v1998, %v1998
        %v2072 = vsel %vm833, %v2067, 0
        %v2075 = vsel %vm833, %v2069, 0
        %2077 = vmatprep.subr.bf16.mxu0 0
        %2078 = vmatpush1.bf16.xpose.msra.mxu0 %v2075
        %2079 = vmatprep.subr.bf16.mxu0 0
        %2080 = vmatpush1.bf16.xpose.msra.mxu0 0
        %2081 = vmatprep.subr.bf16.mxu0 0
        %2082 = vmatpush1.bf16.xpose.msra.mxu0 0
        %2083 = vmatprep.subr.bf16.mxu0 0
        %2084 = vmatpush1.bf16.xpose.msra.mxu0 0
        %2085 = vmatprep.subr.bf16.mxu0 0
        %2086 = vmatpush1.bf16.xpose.msra.mxu0 0
        %2087 = vmatprep.subr.bf16.mxu0 0
        %2088 = vmatpush1.bf16.xpose.msra.mxu0 0
        %2089 = vmatprep.subr.bf16.mxu0 0
        %2090 = vmatpush1.bf16.xpose.msra.mxu0 0
        %2091 = vmatprep.subr.bf16.mxu0 0
        %2092 = vmatpush1.bf16.xpose.msra.mxu0 0
        %2093 = vmatprep.subr.bf16.mxu0 0
        %2094 = vmatpush1.bf16.xpose.msra.mxu0 0
        %2095 = vmatprep.subr.bf16.mxu0 0
        %2096 = vmatpush1.bf16.xpose.msra.mxu0 0
        %2097 = vmatprep.subr.bf16.mxu0 0
        %2098 = vmatpush1.bf16.xpose.msra.mxu0 0
        %2099 = vmatprep.subr.bf16.mxu0 0
        %2100 = vmatpush1.bf16.xpose.msra.mxu0 0
        %2101 = vmatprep.subr.bf16.mxu0 0
        %2102 = vmatpush1.bf16.xpose.msra.mxu0 0
        %2103 = vmatprep.subr.bf16.mxu0 0
        %2104 = vmatpush1.bf16.xpose.msra.mxu0 0
        %2105 = vmatprep.subr.bf16.mxu0 0
        %2106 = vmatpush1.bf16.xpose.msra.mxu0 0
        %2107 = vmatprep.subr.bf16.mxu0 0
        %2108 = vmatpush1.bf16.xpose.msra.mxu0 0
        %2109 = vmatprep.mubr.bf16.mxu0 0
        %2110 = vmatmul.mubr.bf16.gmra.mrb[0].mxu0 %v2072
        %v2111 = vpop.f32.mrb[0].mxu0
        %v2112 = vadd.f32 %v627, %v2111
        %v2113 = vpop.f32.mrb[0].mxu0
        %v2114 = vpop.f32.mrb[0].mxu0
        %v2115 = vpop.f32.mrb[0].mxu0
        %2116 = vdwg.mxu0
        %v2118 = vsel %vm833, %v2068, 0
        %v2121 = vsel %vm833, %v2070, 0
        %2123 = vmatprep.subr.bf16.mxu0 0
        %2124 = vmatpush1.bf16.xpose.msra.mxu0 %v2121
        %2125 = vmatprep.subr.bf16.mxu0 0
        %2126 = vmatpush1.bf16.xpose.msra.mxu0 0
        %2127 = vmatprep.subr.bf16.mxu0 0
        %2128 = vmatpush1.bf16.xpose.msra.mxu0 0
        %2129 = vmatprep.subr.bf16.mxu0 0
        %2130 = vmatpush1.bf16.xpose.msra.mxu0 0
        %2131 = vmatprep.subr.bf16.mxu0 0
        %2132 = vmatpush1.bf16.xpose.msra.mxu0 0
        %2133 = vmatprep.subr.bf16.mxu0 0
        %2134 = vmatpush1.bf16.xpose.msra.mxu0 0
        %2135 = vmatprep.subr.bf16.mxu0 0
        %2136 = vmatpush1.bf16.xpose.msra.mxu0 0
        %2137 = vmatprep.subr.bf16.mxu0 0
        %2138 = vmatpush1.bf16.xpose.msra.mxu0 0
        %2139 = vmatprep.subr.bf16.mxu0 0
        %2140 = vmatpush1.bf16.xpose.msra.mxu0 0
        %2141 = vmatprep.subr.bf16.mxu0 0
        %2142 = vmatpush1.bf16.xpose.msra.mxu0 0
        %2143 = vmatprep.subr.bf16.mxu0 0
        %2144 = vmatpush1.bf16.xpose.msra.mxu0 0
        %2145 = vmatprep.subr.bf16.mxu0 0
        %2146 = vmatpush1.bf16.xpose.msra.mxu0 0
        %2147 = vmatprep.subr.bf16.mxu0 0
        %2148 = vmatpush1.bf16.xpose.msra.mxu0 0
        %2149 = vmatprep.subr.bf16.mxu0 0
        %2150 = vmatpush1.bf16.xpose.msra.mxu0 0
        %2151 = vmatprep.subr.bf16.mxu0 0
        %2152 = vmatpush1.bf16.xpose.msra.mxu0 0
        %2153 = vmatprep.subr.bf16.mxu0 0
        %2154 = vmatpush1.bf16.xpose.msra.mxu0 0
        %2155 = vmatprep.mubr.bf16.mxu0 0
        %2156 = vmatmul.mubr.bf16.gmra.mrb[0].mxu0 %v2118
        %v2157 = vpop.f32.mrb[0].mxu0
        %v2158 = vadd.f32 %v628, %v2157
        %v2159 = vpop.f32.mrb[0].mxu0
        %v2160 = vpop.f32.mrb[0].mxu0
        %v2161 = vpop.f32.mrb[0].mxu0
        %2162 = vdwg.mxu0
        %v2163 = vsel %vm833, %v2112, -inf
        %2164 = vmax.xlane.f32.xlu0 %v2163
        %v2165 = vpop.xlane.xlu0 %2164
        %v2166 = vsel %vm833, %v2158, -inf
        %2167 = vmax.xlane.f32.xlu0 %v2166
        %v2168 = vpop.xlane.xlu0 %2167
        %v2169 = vsub.f32 %v2112, %v2165
        %v2170 = vsub.f32 %v2158, %v2168
        %v2171 = vmul.f32 %v2169, 1.442695
        %v2172 = vpow.pop %v2171
        %v2173 = vmul.f32 %v2170, 1.442695
        %v2174 = vpow.pop %v2173
        %v2175 = vsel %vm833, %v2172, 0.0
        %2176 = vadd.xlane.f32.xlu0 %v2175
        %v2177 = vpop.xlane.xlu0 %2176
        %v2178 = vsel %vm833, %v2174, 0.0
        %2179 = vadd.xlane.f32.xlu0 %v2178
        %v2180 = vpop.xlane.xlu0 %2179
        %v2181 = vrcp.pop %v2177
        %v2182 = vrcp.pop %v2180
        %v2183 = vmul.f32 %v2172, %v2181
        %v2184 = vmul.f32 %v2174, %v2182
        %v2185 = vpack.c.bf16 %v2183, %v2183
        %v2186 = vpack.c.bf16 %v2184, %v2184
        %v2187 = vpack.c.bf16 %v2061, %v2061
        %v2188 = vpack.c.bf16 %v2064, %v2064
        %v2190 = vsel %vm833, %v2185, 0
        %v2193 = vsel %vm955, %v2187, 0
        %2195 = vmatprep.subr.bf16.mxu0 0
        %2196 = vmatpush1.bf16.msra.mxu0 %v2193
        %2197 = vmatprep.subr.bf16.mxu0 0
        %2198 = vmatpush1.bf16.msra.mxu0 0
        %2199 = vmatprep.subr.bf16.mxu0 0
        %2200 = vmatpush1.bf16.msra.mxu0 0
        %2201 = vmatprep.subr.bf16.mxu0 0
        %2202 = vmatpush1.bf16.msra.mxu0 0
        %2203 = vmatprep.subr.bf16.mxu0 0
        %2204 = vmatpush1.bf16.msra.mxu0 0
        %2205 = vmatprep.subr.bf16.mxu0 0
        %2206 = vmatpush1.bf16.msra.mxu0 0
        %2207 = vmatprep.subr.bf16.mxu0 0
        %2208 = vmatpush1.bf16.msra.mxu0 0
        %2209 = vmatprep.subr.bf16.mxu0 0
        %2210 = vmatpush1.bf16.msra.mxu0 0
        %2211 = vmatprep.subr.bf16.mxu0 0
        %2212 = vmatpush1.bf16.msra.mxu0 0
        %2213 = vmatprep.subr.bf16.mxu0 0
        %2214 = vmatpush1.bf16.msra.mxu0 0
        %2215 = vmatprep.subr.bf16.mxu0 0
        %2216 = vmatpush1.bf16.msra.mxu0 0
        %2217 = vmatprep.subr.bf16.mxu0 0
        %2218 = vmatpush1.bf16.msra.mxu0 0
        %2219 = vmatprep.subr.bf16.mxu0 0
        %2220 = vmatpush1.bf16.msra.mxu0 0
        %2221 = vmatprep.subr.bf16.mxu0 0
        %2222 = vmatpush1.bf16.msra.mxu0 0
        %2223 = vmatprep.subr.bf16.mxu0 0
        %2224 = vmatpush1.bf16.msra.mxu0 0
        %2225 = vmatprep.subr.bf16.mxu0 0
        %2226 = vmatpush1.bf16.msra.mxu0 0
        %2227 = vmatprep.mubr.bf16.mxu0 0
        %2228 = vmatmul.mubr.bf16.gmra.mrb[0].mxu0 %v2190
        %v2229 = vpop.f32.mrb[0].mxu0
        %v2230 = vadd.f32 0.0, %v2229
        %v2231 = vpop.f32.mrb[0].mxu0
        %v2232 = vpop.f32.mrb[0].mxu0
        %v2233 = vpop.f32.mrb[0].mxu0
        %2234 = vdwg.mxu0
        %v2236 = vsel %vm833, %v2186, 0
        %v2239 = vsel %vm955, %v2188, 0
        %2241 = vmatprep.subr.bf16.mxu0 0
        %2242 = vmatpush1.bf16.msra.mxu0 %v2239
        %2243 = vmatprep.subr.bf16.mxu0 0
        %2244 = vmatpush1.bf16.msra.mxu0 0
        %2245 = vmatprep.subr.bf16.mxu0 0
        %2246 = vmatpush1.bf16.msra.mxu0 0
        %2247 = vmatprep.subr.bf16.mxu0 0
        %2248 = vmatpush1.bf16.msra.mxu0 0
        %2249 = vmatprep.subr.bf16.mxu0 0
        %2250 = vmatpush1.bf16.msra.mxu0 0
        %2251 = vmatprep.subr.bf16.mxu0 0
        %2252 = vmatpush1.bf16.msra.mxu0 0
        %2253 = vmatprep.subr.bf16.mxu0 0
        %2254 = vmatpush1.bf16.msra.mxu0 0
        %2255 = vmatprep.subr.bf16.mxu0 0
        %2256 = vmatpush1.bf16.msra.mxu0 0
        %2257 = vmatprep.subr.bf16.mxu0 0
        %2258 = vmatpush1.bf16.msra.mxu0 0
        %2259 = vmatprep.subr.bf16.mxu0 0
        %2260 = vmatpush1.bf16.msra.mxu0 0
        %2261 = vmatprep.subr.bf16.mxu0 0
        %2262 = vmatpush1.bf16.msra.mxu0 0
        %2263 = vmatprep.subr.bf16.mxu0 0
        %2264 = vmatpush1.bf16.msra.mxu0 0
        %2265 = vmatprep.subr.bf16.mxu0 0
        %2266 = vmatpush1.bf16.msra.mxu0 0
        %2267 = vmatprep.subr.bf16.mxu0 0
        %2268 = vmatpush1.bf16.msra.mxu0 0
        %2269 = vmatprep.subr.bf16.mxu0 0
        %2270 = vmatpush1.bf16.msra.mxu0 0
        %2271 = vmatprep.subr.bf16.mxu0 0
        %2272 = vmatpush1.bf16.msra.mxu0 0
        %2273 = vmatprep.mubr.bf16.mxu0 0
        %2274 = vmatmul.mubr.bf16.gmra.mrb[0].mxu0 %v2236
        %v2275 = vpop.f32.mrb[0].mxu0
        %v2276 = vadd.f32 0.0, %v2275
        %v2277 = vpop.f32.mrb[0].mxu0
        %v2278 = vpop.f32.mrb[0].mxu0
        %v2279 = vpop.f32.mrb[0].mxu0
        %2280 = vdwg.mxu0
        %2283 = vrot.lane.b32.xlu0 %v1406, 8
        %v2284 = vpop.permute.xlu0 %2283
        %2285 = vrot.lane.b32.xlu0 %v1452, 8
        %v2286 = vpop.permute.xlu0 %2285
        %2291 = vrot.lane.b32.xlu0 %v1818, 16
        %v2292 = vpop.permute.xlu0 %2291
        %2293 = vrot.lane.b32.xlu0 %v1864, 16
        %v2294 = vpop.permute.xlu0 %2293
        %2299 = vrot.lane.b32.xlu0 %v2230, 24
        %v2300 = vpop.permute.xlu0 %2299
        %2301 = vrot.lane.b32.xlu0 %v2276, 24
        %v2302 = vpop.permute.xlu0 %2301
        %v2305 = vsel %vm833, %v994, %v2284
        %v2306 = vsel %vm833, %v1040, %v2286
        %v2307 = vsel %vm561, %v2305, %v2292
        %v2308 = vsel %vm561, %v2306, %v2294
        %vm2309 = vcmask 195584
        %v2310 = vsel %vm2309, %v2307, %v2300
        %v2311 = vsel %vm2309, %v2308, %v2302
        %v2312 = vpack.c.bf16 %v2311, %v2310
        %v2313 = vld [vmem:[%s6] sm:$0xf]
        %v2314 = vld [vmem:[%s6 + $0x4] sm:$0xf]
        %v2315 = vld [vmem:[%s6 + $0x8] sm:$0xf]
        %v2316 = vld [vmem:[%s6 + $0xc] sm:$0xf]
        %v2317 = vld [vmem:[%s7] sm:$0x1]
        %v2319 = vlaneseq
        %v2320 = vshrl.u32 %v2319, 7
        %v2321 = vsub.s32 0, %v2320
        %v2322 = vrot.slane %v2317, %v2321
        %v2328 = vunpack.c.l.b16 %v2313
        %v2329 = vunpack.c.l.b16 %v2314
        %v2330 = vunpack.c.l.b16 %v2315
        %v2331 = vunpack.c.l.b16 %v2316
        %v2332 = vpack.c.b16 %v2329, %v2328
        %v2333 = vpack.c.b16 %v2331, %v2330
        %v2337 = vsel %vm652, %v2312, 0
        %2339 = vmatprep.subr.bf16.mxu0 0
        %2340 = vmatpush1.bf16.msra.mxu0 %v2332
        %2341 = vmatprep.subr.bf16.mxu0 0
        %2342 = vmatpush1.bf16.msra.mxu0 %v2333
        %2343 = vmatprep.subr.bf16.mxu0 0
        %2344 = vmatpush1.bf16.msra.mxu0 0
        %2345 = vmatprep.subr.bf16.mxu0 0
        %2346 = vmatpush1.bf16.msra.mxu0 0
        %2347 = vmatprep.subr.bf16.mxu0 0
        %2348 = vmatpush1.bf16.msra.mxu0 0
        %2349 = vmatprep.subr.bf16.mxu0 0
        %2350 = vmatpush1.bf16.msra.mxu0 0
        %2351 = vmatprep.subr.bf16.mxu0 0
        %2352 = vmatpush1.bf16.msra.mxu0 0
        %2353 = vmatprep.subr.bf16.mxu0 0
        %2354 = vmatpush1.bf16.msra.mxu0 0
        %2355 = vmatprep.subr.bf16.mxu0 0
        %2356 = vmatpush1.bf16.msra.mxu0 0
        %2357 = vmatprep.subr.bf16.mxu0 0
        %2358 = vmatpush1.bf16.msra.mxu0 0
        %2359 = vmatprep.subr.bf16.mxu0 0
        %2360 = vmatpush1.bf16.msra.mxu0 0
        %2361 = vmatprep.subr.bf16.mxu0 0
        %2362 = vmatpush1.bf16.msra.mxu0 0
        %2363 = vmatprep.subr.bf16.mxu0 0
        %2364 = vmatpush1.bf16.msra.mxu0 0
        %2365 = vmatprep.subr.bf16.mxu0 0
        %2366 = vmatpush1.bf16.msra.mxu0 0
        %2367 = vmatprep.subr.bf16.mxu0 0
        %2368 = vmatpush1.bf16.msra.mxu0 0
        %2369 = vmatprep.subr.bf16.mxu0 0
        %2370 = vmatpush1.bf16.msra.mxu0 0
        %2371 = vmatprep.mubr.bf16.mxu0 0
        %2372 = vmatmul.mubr.bf16.gmra.mrb[0].mxu0 %v2337
        %v2373 = vpop.f32.mrb[0].mxu0
        %v2374 = vadd.f32 %v2322, %v2373
        %v2375 = vpop.f32.mrb[0].mxu0
        %v2376 = vpop.f32.mrb[0].mxu0
        %v2377 = vadd.f32 %v2322, %v2376
        %v2378 = vpop.f32.mrb[0].mxu0
        %2379 = vdwg.mxu0
        %v2380 = vadd.f32 %v600, %v2374
        %v2381 = vadd.f32 %v603, %v2377
        %v2382 = vld [vmem:[%s8] sm:$0x1]
        %v2383 = vld [vmem:[%s9] sm:$0x1]
        %v2384 = vsel %vm652, %v2380, 0.0
        %2385 = vadd.xlane.f32.xlu0 %v2384
        %v2386 = vpop.xlane.xlu0 %2385
        %v2387 = vsel %vm652, %v2381, 0.0
        %2388 = vadd.xlane.f32.xlu0 %v2387
        %v2389 = vpop.xlane.xlu0 %2388
        %v2390 = vrcp.pop 32.0
        %v2391 = vmul.f32 %v2386, %v2390
        %v2392 = vmul.f32 %v2389, %v2390
        %v2393 = vsub.f32 %v2380, %v2391
        %v2394 = vsub.f32 %v2381, %v2392
        %v2395 = vmul.f32 %v2393, %v2393
        %v2396 = vmul.f32 %v2394, %v2394
        %v2397 = vsel %vm652, %v2395, 0.0
        %2398 = vadd.xlane.f32.xlu0 %v2397
        %v2399 = vpop.xlane.xlu0 %2398
        %v2400 = vsel %vm652, %v2396, 0.0
        %2401 = vadd.xlane.f32.xlu0 %v2400
        %v2402 = vpop.xlane.xlu0 %2401
        %v2403 = vmul.f32 %v2399, %v2390
        %v2404 = vmul.f32 %v2402, %v2390
        %v2405 = vadd.f32 %v2403, 1e-05
        %v2406 = vadd.f32 %v2404, 1e-05
        %v2407 = vrsqrt.pop %v2405
        %v2408 = vrsqrt.pop %v2406
        %v2409 = vmul.f32 %v2393, %v2407
        %v2410 = vmul.f32 %v2394, %v2408
        %v2412 = vlaneseq
        %v2413 = vshrl.u32 %v2412, 7
        %v2414 = vsub.s32 0, %v2413
        %v2415 = vrot.slane %v2382, %v2414
        %v2417 = vmul.f32 %v2409, %v2415
        %v2418 = vmul.f32 %v2410, %v2415
        %v2420 = vlaneseq
        %v2421 = vshrl.u32 %v2420, 7
        %v2422 = vsub.s32 0, %v2421
        %v2423 = vrot.slane %v2383, %v2422
        %v2425 = vadd.f32 %v2417, %v2423
        %v2426 = vadd.f32 %v2418, %v2423
        %v2427 = vpack.c.bf16 %v2426, %v2425
        %v2428 = vld [vmem:[%s10] sm:$0xf]
        %v2429 = vld [vmem:[%s10 + $0x4] sm:$0xf]
        %v2430 = vld [vmem:[%s10 + $0x8] sm:$0xf]
        %v2431 = vld [vmem:[%s10 + $0xc] sm:$0xf]
        %v2432 = vld [vmem:[%s11] sm:$0x1]
        %v2434 = vlaneseq
        %v2435 = vshrl.u32 %v2434, 7
        %v2436 = vsub.s32 0, %v2435
        %v2437 = vrot.slane %v2432, %v2436
        %v2443 = vunpack.c.l.b16 %v2428
        %v2444 = vunpack.c.l.b16 %v2429
        %v2445 = vunpack.c.l.b16 %v2430
        %v2446 = vunpack.c.l.b16 %v2431
        %v2447 = vpack.c.b16 %v2444, %v2443
        %v2448 = vpack.c.b16 %v2446, %v2445
        %v2452 = vsel %vm652, %v2427, 0
        %2454 = vmatprep.subr.bf16.mxu0 0
        %2455 = vmatpush1.bf16.msra.mxu0 %v2447
        %2456 = vmatprep.subr.bf16.mxu0 0
        %2457 = vmatpush1.bf16.msra.mxu0 %v2448
        %2458 = vmatprep.subr.bf16.mxu0 0
        %2459 = vmatpush1.bf16.msra.mxu0 0
        %2460 = vmatprep.subr.bf16.mxu0 0
        %2461 = vmatpush1.bf16.msra.mxu0 0
        %2462 = vmatprep.subr.bf16.mxu0 0
        %2463 = vmatpush1.bf16.msra.mxu0 0
        %2464 = vmatprep.subr.bf16.mxu0 0
        %2465 = vmatpush1.bf16.msra.mxu0 0
        %2466 = vmatprep.subr.bf16.mxu0 0
        %2467 = vmatpush1.bf16.msra.mxu0 0
        %2468 = vmatprep.subr.bf16.mxu0 0
        %2469 = vmatpush1.bf16.msra.mxu0 0
        %2470 = vmatprep.subr.bf16.mxu0 0
        %2471 = vmatpush1.bf16.msra.mxu0 0
        %2472 = vmatprep.subr.bf16.mxu0 0
        %2473 = vmatpush1.bf16.msra.mxu0 0
        %2474 = vmatprep.subr.bf16.mxu0 0
        %2475 = vmatpush1.bf16.msra.mxu0 0
        %2476 = vmatprep.subr.bf16.mxu0 0
        %2477 = vmatpush1.bf16.msra.mxu0 0
        %2478 = vmatprep.subr.bf16.mxu0 0
        %2479 = vmatpush1.bf16.msra.mxu0 0
        %2480 = vmatprep.subr.bf16.mxu0 0
        %2481 = vmatpush1.bf16.msra.mxu0 0
        %2482 = vmatprep.subr.bf16.mxu0 0
        %2483 = vmatpush1.bf16.msra.mxu0 0
        %2484 = vmatprep.subr.bf16.mxu0 0
        %2485 = vmatpush1.bf16.msra.mxu0 0
        %2486 = vmatprep.mubr.bf16.mxu0 0
        %2487 = vmatmul.mubr.bf16.gmra.mrb[0].mxu0 %v2452
        %v2488 = vpop.f32.mrb[0].mxu0
        %v2489 = vadd.f32 %v2437, %v2488
        %v2490 = vpop.f32.mrb[0].mxu0
        %v2491 = vpop.f32.mrb[0].mxu0
        %v2492 = vadd.f32 %v2437, %v2491
        %v2493 = vpop.f32.mrb[0].mxu0
        %2494 = vdwg.mxu0
        %v2495 = vmax.f32 %v2489, 0.0
        %v2496 = vmax.f32 %v2492, 0.0
        %v2497 = vpack.c.bf16 %v2496, %v2495
        %v2498 = vld [vmem:[%s12] sm:$0xf]
        %v2499 = vld [vmem:[%s12 + $0x4] sm:$0xf]
        %v2500 = vld [vmem:[%s12 + $0x8] sm:$0xf]
        %v2501 = vld [vmem:[%s12 + $0xc] sm:$0xf]
        %v2502 = vld [vmem:[%s12 + $0x10] sm:$0xf]
        %v2503 = vld [vmem:[%s12 + $0x14] sm:$0xf]
        %v2504 = vld [vmem:[%s12 + $0x18] sm:$0xf]
        %v2505 = vld [vmem:[%s12 + $0x1c] sm:$0xf]
        %v2506 = vld [vmem:[%s13] sm:$0x1]
        %v2508 = vlaneseq
        %v2509 = vshrl.u32 %v2508, 7
        %v2510 = vsub.s32 0, %v2509
        %v2511 = vrot.slane %v2506, %v2510
        %v2521 = vunpack.c.l.b16 %v2498
        %v2522 = vunpack.c.l.b16 %v2499
        %v2523 = vunpack.c.l.b16 %v2500
        %v2524 = vunpack.c.l.b16 %v2501
        %v2525 = vunpack.c.l.b16 %v2502
        %v2526 = vunpack.c.l.b16 %v2503
        %v2527 = vunpack.c.l.b16 %v2504
        %v2528 = vunpack.c.l.b16 %v2505
        %v2529 = vpack.c.b16 %v2522, %v2521
        %v2530 = vpack.c.b16 %v2524, %v2523
        %v2531 = vpack.c.b16 %v2526, %v2525
        %v2532 = vpack.c.b16 %v2528, %v2527
        %vm2537 = vcmask 523264
        %v2539 = vsel %vm2537, %v2497, 0
        %2541 = vmatprep.subr.bf16.mxu0 0
        %2542 = vmatpush1.bf16.msra.mxu0 %v2529
        %2543 = vmatprep.subr.bf16.mxu0 0
        %2544 = vmatpush1.bf16.msra.mxu0 %v2530
        %2545 = vmatprep.subr.bf16.mxu0 0
        %2546 = vmatpush1.bf16.msra.mxu0 %v2531
        %2547 = vmatprep.subr.bf16.mxu0 0
        %2548 = vmatpush1.bf16.msra.mxu0 %v2532
        %2549 = vmatprep.subr.bf16.mxu0 0
        %2550 = vmatpush1.bf16.msra.mxu0 0
        %2551 = vmatprep.subr.bf16.mxu0 0
        %2552 = vmatpush1.bf16.msra.mxu0 0
        %2553 = vmatprep.subr.bf16.mxu0 0
        %2554 = vmatpush1.bf16.msra.mxu0 0
        %2555 = vmatprep.subr.bf16.mxu0 0
        %2556 = vmatpush1.bf16.msra.mxu0 0
        %2557 = vmatprep.subr.bf16.mxu0 0
        %2558 = vmatpush1.bf16.msra.mxu0 0
        %2559 = vmatprep.subr.bf16.mxu0 0
        %2560 = vmatpush1.bf16.msra.mxu0 0
        %2561 = vmatprep.subr.bf16.mxu0 0
        %2562 = vmatpush1.bf16.msra.mxu0 0
        %2563 = vmatprep.subr.bf16.mxu0 0
        %2564 = vmatpush1.bf16.msra.mxu0 0
        %2565 = vmatprep.subr.bf16.mxu0 0
        %2566 = vmatpush1.bf16.msra.mxu0 0
        %2567 = vmatprep.subr.bf16.mxu0 0
        %2568 = vmatpush1.bf16.msra.mxu0 0
        %2569 = vmatprep.subr.bf16.mxu0 0
        %2570 = vmatpush1.bf16.msra.mxu0 0
        %2571 = vmatprep.subr.bf16.mxu0 0
        %2572 = vmatpush1.bf16.msra.mxu0 0
        %2573 = vmatprep.mubr.bf16.mxu0 0
        %2574 = vmatmul.mubr.bf16.gmra.mrb[0].mxu0 %v2539
        %v2575 = vpop.f32.mrb[0].mxu0
        %v2576 = vadd.f32 %v2511, %v2575
        %v2577 = vpop.f32.mrb[0].mxu0
        %v2578 = vpop.f32.mrb[0].mxu0
        %v2579 = vadd.f32 %v2511, %v2578
        %v2580 = vpop.f32.mrb[0].mxu0
        %2581 = vdwg.mxu0
        %v2582 = vadd.f32 %v2425, %v2576
        %v2583 = vadd.f32 %v2426, %v2579
        %v2584 = vld [vmem:[%s14] sm:$0x1]
        %v2585 = vld [vmem:[%s15] sm:$0x1]
        %v2586 = vsel %vm652, %v2582, 0.0
        %2587 = vadd.xlane.f32.xlu0 %v2586
        %v2588 = vpop.xlane.xlu0 %2587
        %v2589 = vsel %vm652, %v2583, 0.0
        %2590 = vadd.xlane.f32.xlu0 %v2589
        %v2591 = vpop.xlane.xlu0 %2590
        %v2592 = vmul.f32 %v2588, %v2390
        %v2593 = vmul.f32 %v2591, %v2390
        %v2594 = vsub.f32 %v2582, %v2592
        %v2595 = vsub.f32 %v2583, %v2593
        %v2596 = vmul.f32 %v2594, %v2594
        %v2597 = vmul.f32 %v2595, %v2595
        %v2598 = vsel %vm652, %v2596, 0.0
        %2599 = vadd.xlane.f32.xlu0 %v2598
        %v2600 = vpop.xlane.xlu0 %2599
        %v2601 = vsel %vm652, %v2597, 0.0
        %2602 = vadd.xlane.f32.xlu0 %v2601
        %v2603 = vpop.xlane.xlu0 %2602
        %v2604 = vmul.f32 %v2600, %v2390
        %v2605 = vmul.f32 %v2603, %v2390
        %v2606 = vadd.f32 %v2604, 1e-05
        %v2607 = vadd.f32 %v2605, 1e-05
        %v2608 = vrsqrt.pop %v2606
        %v2609 = vrsqrt.pop %v2607
        %v2610 = vmul.f32 %v2594, %v2608
        %v2611 = vmul.f32 %v2595, %v2609
        %v2613 = vlaneseq
        %v2614 = vshrl.u32 %v2613, 7
        %v2615 = vsub.s32 0, %v2614
        %v2616 = vrot.slane %v2584, %v2615
        %v2618 = vmul.f32 %v2610, %v2616
        %v2619 = vmul.f32 %v2611, %v2616
        %v2621 = vlaneseq
        %v2622 = vshrl.u32 %v2621, 7
        %v2623 = vsub.s32 0, %v2622
        %v2624 = vrot.slane %v2585, %v2623
        %v2626 = vadd.f32 %v2618, %v2624
        %v2627 = vadd.f32 %v2619, %v2624
        %2628 = vst.msk [vmem:[%s529] sm:$0xff] %vm652, %v2626
        %2629 = vst.msk [vmem:[%s529 + $0x8] sm:$0xff] %vm652, %v2627
        %s2630 = sand.u32 %s384, 1
        %s2631 = scalar_lea.sflag [#allocation3], %s2630
        %s2632 = sand.u32 %s384, 1
        %s2633 = smul.addr %s2632, 16
        %s2634 = scalar_lea.vmem [#allocation2], %s2633
        // Predicated region
        $region85: #{tpu_custom_call.1} parent=83 // pred_check
          %p2635 = pneg %p394
        $region86: #{tpu_custom_call.1} parent=83 // pred_check_branch
          %2637 = sbr.rel (%p2635) target = $region88
        $region87: #{tpu_custom_call.1} parent=83 // pred_region
          %s2638 = smul.u32 2, %s30
          %s2640 = ssub.s32 256, 256
          %2641 = vsyncadd %s2631, %s2640
          %s2642 = smul.addr %s2638, 128
          %s2643 = scalar_lea.hbm %s16, %s2642
          %s2644 = sshll.u32 %s2634, 4
          %s2645 = int_to_ptr.vmem [resolvable:$true] %s2644
          %2650 = dma.vmem_to_hbm [thread:$0]  %s2645, 256, %s2643, %s2631, 128, 128, 8
        $region88: #{tpu_custom_call.1} parent=83 // pred_fallthru
          _
      $region84: #{tpu_custom_call.1} parent=5 // pred_fallthru
        _
      %p2651 = scmp.le.s32.totalorder 2, %s25
      // Predicated region
      $region89: #{tpu_custom_call.1} parent=5 // pred_check
        %p2652 = pneg %p2651
      $region90: #{tpu_custom_call.1} parent=5 // pred_check_branch
        %2654 = sbr.rel (%p2652) target = $region92
      $region91: #{tpu_custom_call.1} parent=5 // pred_region
        %s2655 = ssub.s32 %s25, 2
        // Predicated region
        $region93: #{tpu_custom_call.1} parent=91 // pred_check
          %p2656 = pneg %p400
        $region94: #{tpu_custom_call.1} parent=91 // pred_check_branch
          %2658 = sbr.rel (%p2656) target = $region96
        $region95: #{tpu_custom_call.1} parent=91 // pred_region
          %s2659 = sand.u32 %s385, 1
          %s2660 = scalar_lea.sflag [#allocation3], %s2659
          %s2661 = sand.u32 %s385, 1
          %s2662 = smul.addr %s2661, 16
          %s2663 = scalar_lea.vmem [#allocation2], %s2662
          %2664 = dma.done %s2660, 256
        $region96: #{tpu_custom_call.1} parent=91 // pred_fallthru
          _
      $region92: #{tpu_custom_call.1} parent=5 // pred_fallthru
        _
    $region6: #{tpu_custom_call.1} parent=1 // loop_footer
      %s29 = sadd.s32 1, %s25
    $region7: #{tpu_custom_call.1} parent=1 // loop_footer_branch
      %24 = sbr.rel target = $region3
    $region8: #{tpu_custom_call.1} parent=1 // loop_exit
      _
    %2665 = vsyncpa [#allocation3], 1
    %s2666 = scalar_lea.sflag [#allocation3], 1
    %2667 = vsyncpa %s2666, 1

</llo_original>
